<compile_context>
chip_gen: v6e
topology: v6e:2x2x1
jax: 0.10.0
libtpu: 0.0.40
codegen_flags: <defaults>
</compile_context>

<pallas_src>
import functools

import jax
import jax.numpy as jnp
from jax import lax
from jax.experimental import pallas as pl
from jax.experimental.pallas import tpu as pltpu

LANES = 128
_VMEM_LIMIT = 32 * 1024 * 1024  # conservative scoped-VMEM request, safe on v5e/v6e/v7x


def _round_up(x, m):
    return ((x + m - 1) // m) * m


def _choose_m_tiling(m, target=1024):
    """Pick (tile_m, m_pad) for the row (sublane) dimension.

    Preference order:
      1) small M: a single full-M block (always legal), split into 2-4 unpadded tiles
         when a clean 16-aligned divisor exists (keeps both v7x TensorCores busy),
      2) large M: the largest 16-aligned divisor tile in [target/2, target] (no padding
         -> no extra XLA pad pass over the bf16 patch operands),
      3) fallback: pad M up to a multiple of `target`.
    16-row alignment keeps bf16 blocks on native (16,128) packed-sublane boundaries.
    """
    if m <= 2 * target:
        if m % 16 == 0 and m > 16:
            for ntiles in (2, 3, 4):
                if m % ntiles == 0 and (m // ntiles) % 16 == 0:
                    return m // ntiles, m
        return m, m                       # block equal to the full dim is always legal
    if m % 16 == 0:
        t = target - (target % 16)
        while t >= target // 2:
            if m % t == 0:
                return t, m
            t -= 16
    return target, _round_up(m, target)


# -----------------------------------------------------------------------------
# Fused conv-as-matmul + bias + ReLU + 2x2 max-pool kernel.
# The 4 inputs are the im2col patches of the 4 members of each 2x2 pool window
# (pool-window slots (0,0),(0,1),(1,0),(1,1)), each of shape (M_pool, K) bf16.
#   out = relu( max_i(p_i @ W) + b )   ==   maxpool2x2( relu(conv(x) + b) )
# Weights/bias are VMEM-resident across the M grid; accumulate/max/bias/relu are f32;
# the store is a lane-dense (tile_m, 128) bf16 block.
# -----------------------------------------------------------------------------
def _conv_pool_kernel(p00_ref, p01_ref, p10_ref, p11_ref, w_ref, b_ref, o_ref):
    w = w_ref[...]                                                   # bf16, reused 4x
    acc = jnp.dot(p00_ref[...], w, preferred_element_type=jnp.float32)
    acc = jnp.maximum(acc, jnp.dot(p01_ref[...], w, preferred_element_type=jnp.float32))
    acc = jnp.maximum(acc, jnp.dot(p10_ref[...], w, preferred_element_type=jnp.float32))
    acc = jnp.maximum(acc, jnp.dot(p11_ref[...], w, preferred_element_type=jnp.float32))
    o_ref[...] = jnp.maximum(acc + b_ref[...], 0.0).astype(o_ref.dtype)


def conv_pool_fused(patches4, w, b, *, out_dtype=jnp.bfloat16, tile_target=1024):
    """patches4: 4 arrays (M, K) bf16 (one per pool-window slot).
    w: (K, 128) bf16, b: (1, 128) f32.  Returns (M, 128) out_dtype."""
    m, k = patches4[0].shape
    n = w.shape[1]
    assert n % LANES == 0 and b.shape == (1, n)
    tile_m, m_pad = _choose_m_tiling(m, tile_target)
    if m_pad != m:
        patches4 = [jnp.pad(p, ((0, m_pad - m), (0, 0))) for p in patches4]

    in_specs = [pl.BlockSpec((tile_m, k), lambda i: (i, 0)) for _ in range(4)]
    in_specs += [pl.BlockSpec((k, n), lambda i: (0, 0)),     # weight: VMEM-resident
                 pl.BlockSpec((1, n), lambda i: (0, 0))]     # bias:   VMEM-resident

    flops = 4 * 2 * m_pad * k * n
    bytes_accessed = (sum(p.size * p.dtype.itemsize for p in patches4)
                      + w.size * w.dtype.itemsize + b.size * 4
                      + m_pad * n * jnp.dtype(out_dtype).itemsize)

    out = pl.pallas_call(
        _conv_pool_kernel,
        out_shape=jax.ShapeDtypeStruct((m_pad, n), out_dtype),
        grid=(m_pad // tile_m,),
        in_specs=in_specs,
        out_specs=pl.BlockSpec((tile_m, n), lambda i: (i, 0)),
        compiler_params=pltpu.CompilerParams(
            dimension_semantics=("parallel",),               # megacore / both v7x TCs
            vmem_limit_bytes=_VMEM_LIMIT),
        cost_estimate=pl.CostEstimate(flops=flops, transcendentals=0,
                                      bytes_accessed=bytes_accessed),
    )(*patches4, w, b)
    return out[:m] if m_pad != m else out


# -----------------------------------------------------------------------------
# Fused (x @ W + b -> ReLU) x L kernel for the fc1 -> fc2 -> fc3 stack.
# All three weight/bias blocks stay resident in VMEM across the M grid; N is a
# multiple of 128 so every store is lane-dense.
# -----------------------------------------------------------------------------
def _mlp_kernel(*refs, num_layers, relu_flags):
    x_ref, o_ref = refs[0], refs[-1]
    h = x_ref[...]
    for l in range(num_layers):
        w_ref = refs[1 + 2 * l]
        b_ref = refs[2 + 2 * l]
        lhs = h if h.dtype == jnp.bfloat16 else h.astype(jnp.bfloat16)
        acc = jnp.dot(lhs, w_ref[...], preferred_element_type=jnp.float32)
        acc = acc + b_ref[...]                               # bias in f32
        if relu_flags[l]:
            acc = jnp.maximum(acc, 0.0)                      # ReLU in f32
        h = acc
    o_ref[...] = h.astype(o_ref.dtype)


def fused_mlp(x, layers, *, tile_target=1024):
    """x: (M, K) bf16 or f32.  layers: sequence of (w_bf16 (K_i, N_i), b_f32 (1, N_i),
    relu) with every N_i a multiple of 128.  Returns (M, N_last) f32."""
    m, k = x.shape
    n_out = layers[-1][0].shape[1]
    tile_m, m_pad = _choose_m_tiling(m, tile_target)
    if m_pad != m:
        x = jnp.pad(x, ((0, m_pad - m), (0, 0)))

    in_specs = [pl.BlockSpec((tile_m, k), lambda i: (i, 0))]
    args = [x]
    flops = 0
    bytes_accessed = x.size * x.dtype.itemsize + m_pad * n_out * 4
    for w, b, _ in layers:
        kw, nw = w.shape
        assert nw % LANES == 0 and b.shape == (1, nw)
        in_specs.append(pl.BlockSpec((kw, nw), lambda i: (0, 0)))   # weight: resident
        in_specs.append(pl.BlockSpec((1, nw), lambda i: (0, 0)))    # bias:   resident
        args += [w, b]
        flops += 2 * m_pad * kw * nw
        bytes_accessed += w.size * w.dtype.itemsize + b.size * b.dtype.itemsize

    kernel = functools.partial(_mlp_kernel, num_layers=len(layers),
                               relu_flags=tuple(r for _, _, r in layers))
    out = pl.pallas_call(
        kernel,
        out_shape=jax.ShapeDtypeStruct((m_pad, n_out), jnp.float32),
        grid=(m_pad // tile_m,),
        in_specs=in_specs,
        out_specs=pl.BlockSpec((tile_m, n_out), lambda i: (i, 0)),
        compiler_params=pltpu.CompilerParams(
            dimension_semantics=("parallel",),
            vmem_limit_bytes=_VMEM_LIMIT),
        cost_estimate=pl.CostEstimate(flops=flops, transcendentals=0,
                                      bytes_accessed=bytes_accessed),
    )(*args)
    return out[:m] if m_pad != m else out


# -----------------------------------------------------------------------------
# Parameters: PyTorch layout + PyTorch-style uniform(-1/sqrt(fan_in)) init, then a
# one-time packing into kernel-friendly layouts (transposed, 128-lane padded, bf16).
# -----------------------------------------------------------------------------
def _init_params(key):
    def uniform(k, shape, fan_in):
        bound = 1.0 / float(fan_in) ** 0.5
        return jax.random.uniform(k, shape, jnp.float32, -bound, bound)

    ks = jax.random.split(key, 10)
    return {
        "conv1_w": uniform(ks[0], (6, 3, 5, 5), 3 * 25),
        "conv1_b": uniform(ks[1], (6,), 3 * 25),
        "conv2_w": uniform(ks[2], (16, 6, 5, 5), 6 * 25),
        "conv2_b": uniform(ks[3], (16,), 6 * 25),
        "fc1_w": uniform(ks[4], (120, 400), 400),
        "fc1_b": uniform(ks[5], (120,), 400),
        "fc2_w": uniform(ks[6], (84, 120), 120),
        "fc2_b": uniform(ks[7], (84,), 120),
        "fc3_w": uniform(ks[8], (3, 84), 84),
        "fc3_b": uniform(ks[9], (3,), 84),
    }


def _prepare_params(p):
    def pad_cols_bf16(w_kn):
        k, n = w_kn.shape
        return jnp.pad(w_kn, ((0, 0), (0, LANES - n))).astype(jnp.bfloat16)

    def pad_bias(bias):
        return jnp.pad(bias, (0, LANES - bias.shape[0])).reshape(1, LANES).astype(jnp.float32)

    prep = {}
    # Conv weights: PyTorch (Cout, Cin, kh, kw) -> (Cin*kh*kw, Cout_pad=128).  The K
    # ordering (Cin-major, then kh, kw) matches lax.conv_general_dilated_patches.
    prep["conv1_w"] = pad_cols_bf16(p["conv1_w"].reshape(6, 75).T)        # (75, 128)
    prep["conv1_b"] = pad_bias(p["conv1_b"])
    prep["conv2_w"] = pad_cols_bf16(p["conv2_w"].reshape(16, 150).T)      # (150, 128)
    prep["conv2_b"] = pad_bias(p["conv2_b"])
    # fc1: permute its 400 input features once from PyTorch's (C,H,W) flatten order to
    # the (H,W,C) order produced by the NHWC pipeline -> same math, no per-forward work.
    fc1_hwc = p["fc1_w"].reshape(120, 16, 5, 5).transpose(0, 2, 3, 1).reshape(120, 400)
    prep["fc1_w"] = pad_cols_bf16(fc1_hwc.T)                              # (400, 128)
    prep["fc1_b"] = pad_bias(p["fc1_b"])
    # fc2 / fc3: pad K and N to 128 so the chained dots stay 128-wide; padded rows/cols
    # are zero, so padded activations contribute exactly nothing.
    prep["fc2_w"] = jnp.pad(p["fc2_w"].T, ((0, 8), (0, 44))).astype(jnp.bfloat16)    # (128,128)
    prep["fc2_b"] = pad_bias(p["fc2_b"])
    prep["fc3_w"] = jnp.pad(p["fc3_w"].T, ((0, 44), (0, 125))).astype(jnp.bfloat16)  # (128,128)
    prep["fc3_b"] = pad_bias(p["fc3_b"])
    return prep


# -----------------------------------------------------------------------------
# Forward pass (mirrors Net.forward).
# -----------------------------------------------------------------------------
def _pool_patches(x_nhwc, dr, dc, ksize):
    """Patch rows for pool-window slot (dr, dc): conv outputs at spatial positions
    (2*ph+dr, 2*pw+dc) are exactly the ksize x ksize patches of the (dr, dc)-shifted
    input taken at stride 2.  Feature order is (Cin major, kh, kw)."""
    return lax.conv_general_dilated_patches(
        x_nhwc[:, dr:, dc:, :], (ksize, ksize), (2, 2), "VALID",
        dimension_numbers=("NHWC", "HWIO", "NHWC"))


def net_forward(prep, x):
    """x: (B, 3, 32, 32) float32 NCHW (PyTorch layout).  Returns (B, 3) float32."""
    b = x.shape[0]
    x = jnp.transpose(x, (0, 2, 3, 1)).astype(jnp.bfloat16)   # one NCHW->NHWC + bf16 cast

    # conv1 + ReLU + pool1, fused into one Pallas kernel (pool on the f32 accumulator).
    # TODO(synk): at training/serving batch sizes, build the 5x5 patches inside the
    # kernel (shifted reads of a VMEM-resident NHWC tile) instead of materializing the
    # 25x-expanded patch operands in HBM via conv_general_dilated_patches.
    p1 = [_pool_patches(x, dr, dc, 5).reshape(b * 14 * 14, 75)
          for dr in (0, 1) for dc in (0, 1)]                  # 4 x (B*196, 75) bf16
    h = conv_pool_fused(p1, prep["conv1_w"], prep["conv1_b"])  # (B*196, 128) bf16
    h = h[:, :6].reshape(b, 14, 14, 6)                         # drop zero pad channels

    # conv2 + ReLU + pool2, fused.
    p2 = [_pool_patches(h, dr, dc, 5).reshape(b * 5 * 5, 150)
          for dr in (0, 1) for dc in (0, 1)]                  # 4 x (B*25, 150) bf16
    h = conv_pool_fused(p2, prep["conv2_w"], prep["conv2_b"])  # (B*25, 128) bf16
    feats = h[:, :16].reshape(b, 5 * 5 * 16)                   # HWC flatten (fc1 pre-permuted)

    # fc1 -> ReLU -> fc2 -> ReLU -> fc3, fused into one pallas_call (weights resident).
    out = fused_mlp(feats, [(prep["fc1_w"], prep["fc1_b"], True),
                            (prep["fc2_w"], prep["fc2_b"], True),
                            (prep["fc3_w"], prep["fc3_b"], False)])  # (B, 128) f32
    return out[:, :3]


# -----------------------------------------------------------------------------
# Pure-JAX f32 reference (mirrors the PyTorch module exactly; NCHW, CHW flatten).
# -----------------------------------------------------------------------------
def net_forward_ref(params, x):
    hi = lax.Precision.HIGHEST

    def conv(h, w, bias):
        y = lax.conv_general_dilated(h, w, (1, 1), "VALID",
                                     dimension_numbers=("NCHW", "OIHW", "NCHW"),
                                     precision=hi)
        return y + bias.reshape(1, -1, 1, 1)

    def pool(h):
        return lax.reduce_window(h, -jnp.inf, lax.max, (1, 1, 2, 2), (1, 1, 2, 2), "VALID")

    h = pool(jax.nn.relu(conv(x, params["conv1_w"], params["conv1_b"])))
    h = pool(jax.nn.relu(conv(h, params["conv2_w"], params["conv2_b"])))
    h = h.reshape(x.shape[0], -1)                              # (C,H,W) flatten == torch
    h = jax.nn.relu(jnp.dot(h, params["fc1_w"].T, precision=hi) + params["fc1_b"])
    h = jax.nn.relu(jnp.dot(h, params["fc2_w"].T, precision=hi) + params["fc2_b"])
    return jnp.dot(h, params["fc3_w"].T, precision=hi) + params["fc3_b"]


if __name__ == "__main__":
    key = jax.random.PRNGKey(0)
    pkey, xkey = jax.random.split(key)
    params = _init_params(pkey)
    prep = _prepare_params(params)
    # Input spatial size must be 32x32 so the flatten gives 16*5*5 = 400 features.
    x = jax.random.normal(xkey, (2, 3, 32, 32), jnp.float32)

    fwd = jax.jit(net_forward)
    out = jax.block_until_ready(fwd(prep, x))
    assert out.shape == (2, 3) and out.dtype == jnp.float32
    assert bool(jnp.all(jnp.isfinite(out)))

    # Tolerance-checked f32 reference: guards the bf16-MXU deviation and the im2col
    # (Cin, kh, kw) feature-ordering assumption.
    ref = jax.block_until_ready(jax.jit(net_forward_ref)(params, x))
    max_err = float(jnp.max(jnp.abs(out - ref)))
    assert max_err < 5e-2, f"mismatch vs f32 reference: max|diff|={max_err}"

    print("KERNEL_OK")
</pallas_src>

<mosaic_0001>
module attributes {stable_mosaic.version = 11 : i64} {
  func.func @_conv_pool_kernel(%arg0: i32, %arg1: memref<392x75xbf16, #tpu.memory_space<vmem>>, %arg2: memref<392x75xbf16, #tpu.memory_space<vmem>>, %arg3: memref<392x75xbf16, #tpu.memory_space<vmem>>, %arg4: memref<392x75xbf16, #tpu.memory_space<vmem>>, %arg5: memref<75x128xbf16, #tpu.memory_space<vmem>>, %arg6: memref<1x128xf32, #tpu.memory_space<vmem>>, %arg7: memref<392x128xbf16, #tpu.memory_space<vmem>>) attributes {dimension_semantics = [#tpu.dimension_semantics<parallel>], iteration_bounds = array<i64: 1>, scalar_prefetch = 0 : i64, scratch_operands = 0 : i64, tpu.core_type = #tpu.core_type<tc>, window_params = [{transform_indices = @transform_0, window_bounds = array<i64: 392, 75>}, {transform_indices = @transform_1, window_bounds = array<i64: 392, 75>}, {transform_indices = @transform_2, window_bounds = array<i64: 392, 75>}, {transform_indices = @transform_3, window_bounds = array<i64: 392, 75>}, {pipeline_mode = #tpu.pipeline_mode<synchronous>, transform_indices = @transform_4, window_bounds = array<i64: 75, 128>}, {pipeline_mode = #tpu.pipeline_mode<synchronous>, transform_indices = @transform_5, window_bounds = array<i64: 1, 128>}, {transform_indices = @transform_6, window_bounds = array<i64: 392, 128>}]} {
    %c0 = arith.constant 0 : index
    %c0_0 = arith.constant 0 : index
    %0 = vector.load %arg5[%c0, %c0_0] : memref<75x128xbf16, #tpu.memory_space<vmem>>, vector<75x128xbf16>
    %c0_1 = arith.constant 0 : index
    %c0_2 = arith.constant 0 : index
    %1 = vector.load %arg1[%c0_1, %c0_2] : memref<392x75xbf16, #tpu.memory_space<vmem>>, vector<392x75xbf16>
    %cst = arith.constant dense<0.000000e+00> : vector<392x128xf32>
    %2 = tpu.matmul %1, %0, %cst {dimension_numbers = #tpu.dot_dimension_numbers<[1], [0], [0], [1], [0, 0, 1, 1], [], []>} : vector<392x75xbf16>, vector<75x128xbf16>, vector<392x128xf32> -> vector<392x128xf32>
    %c0_3 = arith.constant 0 : index
    %c0_4 = arith.constant 0 : index
    %3 = vector.load %arg2[%c0_3, %c0_4] : memref<392x75xbf16, #tpu.memory_space<vmem>>, vector<392x75xbf16>
    %cst_5 = arith.constant dense<0.000000e+00> : vector<392x128xf32>
    %4 = tpu.matmul %3, %0, %cst_5 {dimension_numbers = #tpu.dot_dimension_numbers<[1], [0], [0], [1], [0, 0, 1, 1], [], []>} : vector<392x75xbf16>, vector<75x128xbf16>, vector<392x128xf32> -> vector<392x128xf32>
    %5 = arith.maximumf %2, %4 : vector<392x128xf32>
    %c0_6 = arith.constant 0 : index
    %c0_7 = arith.constant 0 : index
    %6 = vector.load %arg3[%c0_6, %c0_7] : memref<392x75xbf16, #tpu.memory_space<vmem>>, vector<392x75xbf16>
    %cst_8 = arith.constant dense<0.000000e+00> : vector<392x128xf32>
    %7 = tpu.matmul %6, %0, %cst_8 {dimension_numbers = #tpu.dot_dimension_numbers<[1], [0], [0], [1], [0, 0, 1, 1], [], []>} : vector<392x75xbf16>, vector<75x128xbf16>, vector<392x128xf32> -> vector<392x128xf32>
    %8 = arith.maximumf %5, %7 : vector<392x128xf32>
    %c0_9 = arith.constant 0 : index
    %c0_10 = arith.constant 0 : index
    %9 = vector.load %arg4[%c0_9, %c0_10] : memref<392x75xbf16, #tpu.memory_space<vmem>>, vector<392x75xbf16>
    %cst_11 = arith.constant dense<0.000000e+00> : vector<392x128xf32>
    %10 = tpu.matmul %9, %0, %cst_11 {dimension_numbers = #tpu.dot_dimension_numbers<[1], [0], [0], [1], [0, 0, 1, 1], [], []>} : vector<392x75xbf16>, vector<75x128xbf16>, vector<392x128xf32> -> vector<392x128xf32>
    %11 = arith.maximumf %8, %10 : vector<392x128xf32>
    %c0_12 = arith.constant 0 : index
    %c0_13 = arith.constant 0 : index
    %12 = vector.load %arg6[%c0_12, %c0_13] : memref<1x128xf32, #tpu.memory_space<vmem>>, vector<1x128xf32>
    %13 = vector.broadcast %12 : vector<1x128xf32> to vector<392x128xf32>
    %14 = arith.addf %11, %13 : vector<392x128xf32>
    %cst_14 = arith.constant 0.000000e+00 : f32
    %15 = vector.broadcast %cst_14 : f32 to vector<392x128xf32>
    %16 = arith.maximumf %14, %15 : vector<392x128xf32>
    %17 = arith.truncf %16 : vector<392x128xf32> to vector<392x128xbf16>
    %c0_15 = arith.constant 0 : index
    %c0_16 = arith.constant 0 : index
    %18 = vector.load %arg7[%c0_15, %c0_16] : memref<392x128xbf16, #tpu.memory_space<vmem>>, vector<392x128xbf16>
    tpu.vector_store %arg7[%c0_15, %c0_16], %17 {strides = array<i32>} : memref<392x128xbf16, #tpu.memory_space<vmem>>, vector<392x128xbf16>,
    return
  }
  func.func @transform_0(%arg0: i32) -> (i32, i32) {
    %c0_i32 = arith.constant 0 : i32
    %c0_i32_0 = arith.constant 0 : i32
    return %arg0, %c0_i32 : i32, i32
  }
  func.func @transform_1(%arg0: i32) -> (i32, i32) {
    %c0_i32 = arith.constant 0 : i32
    %c0_i32_0 = arith.constant 0 : i32
    return %arg0, %c0_i32 : i32, i32
  }
  func.func @transform_2(%arg0: i32) -> (i32, i32) {
    %c0_i32 = arith.constant 0 : i32
    %c0_i32_0 = arith.constant 0 : i32
    return %arg0, %c0_i32 : i32, i32
  }
  func.func @transform_3(%arg0: i32) -> (i32, i32) {
    %c0_i32 = arith.constant 0 : i32
    %c0_i32_0 = arith.constant 0 : i32
    return %arg0, %c0_i32 : i32, i32
  }
  func.func @transform_4(%arg0: i32) -> (i32, i32) {
    %c0_i32 = arith.constant 0 : i32
    %c0_i32_0 = arith.constant 0 : i32
    %c0_i32_1 = arith.constant 0 : i32
    return %c0_i32, %c0_i32_0 : i32, i32
  }
  func.func @transform_5(%arg0: i32) -> (i32, i32) {
    %c0_i32 = arith.constant 0 : i32
    %c0_i32_0 = arith.constant 0 : i32
    %c0_i32_1 = arith.constant 0 : i32
    return %c0_i32, %c0_i32_0 : i32, i32
  }
  func.func @transform_6(%arg0: i32) -> (i32, i32) {
    %c0_i32 = arith.constant 0 : i32
    %c0_i32_0 = arith.constant 0 : i32
    return %arg0, %c0_i32 : i32, i32
  }
}

module attributes {stable_mosaic.version = 11 : i64} {
  func.func @_conv_pool_kernel(%arg0: i32, %arg1: memref<50x150xbf16, #tpu.memory_space<vmem>>, %arg2: memref<50x150xbf16, #tpu.memory_space<vmem>>, %arg3: memref<50x150xbf16, #tpu.memory_space<vmem>>, %arg4: memref<50x150xbf16, #tpu.memory_space<vmem>>, %arg5: memref<150x128xbf16, #tpu.memory_space<vmem>>, %arg6: memref<1x128xf32, #tpu.memory_space<vmem>>, %arg7: memref<50x128xbf16, #tpu.memory_space<vmem>>) attributes {dimension_semantics = [#tpu.dimension_semantics<parallel>], iteration_bounds = array<i64: 1>, scalar_prefetch = 0 : i64, scratch_operands = 0 : i64, tpu.core_type = #tpu.core_type<tc>, window_params = [{transform_indices = @transform_0, window_bounds = array<i64: 50, 150>}, {transform_indices = @transform_1, window_bounds = array<i64: 50, 150>}, {transform_indices = @transform_2, window_bounds = array<i64: 50, 150>}, {transform_indices = @transform_3, window_bounds = array<i64: 50, 150>}, {pipeline_mode = #tpu.pipeline_mode<synchronous>, transform_indices = @transform_4, window_bounds = array<i64: 150, 128>}, {pipeline_mode = #tpu.pipeline_mode<synchronous>, transform_indices = @transform_5, window_bounds = array<i64: 1, 128>}, {transform_indices = @transform_6, window_bounds = array<i64: 50, 128>}]} {
    %c0 = arith.constant 0 : index
    %c0_0 = arith.constant 0 : index
    %0 = vector.load %arg5[%c0, %c0_0] : memref<150x128xbf16, #tpu.memory_space<vmem>>, vector<150x128xbf16>
    %c0_1 = arith.constant 0 : index
    %c0_2 = arith.constant 0 : index
    %1 = vector.load %arg1[%c0_1, %c0_2] : memref<50x150xbf16, #tpu.memory_space<vmem>>, vector<50x150xbf16>
    %cst = arith.constant dense<0.000000e+00> : vector<50x128xf32>
    %2 = tpu.matmul %1, %0, %cst {dimension_numbers = #tpu.dot_dimension_numbers<[1], [0], [0], [1], [0, 0, 1, 1], [], []>} : vector<50x150xbf16>, vector<150x128xbf16>, vector<50x128xf32> -> vector<50x128xf32>
    %c0_3 = arith.constant 0 : index
    %c0_4 = arith.constant 0 : index
    %3 = vector.load %arg2[%c0_3, %c0_4] : memref<50x150xbf16, #tpu.memory_space<vmem>>, vector<50x150xbf16>
    %cst_5 = arith.constant dense<0.000000e+00> : vector<50x128xf32>
    %4 = tpu.matmul %3, %0, %cst_5 {dimension_numbers = #tpu.dot_dimension_numbers<[1], [0], [0], [1], [0, 0, 1, 1], [], []>} : vector<50x150xbf16>, vector<150x128xbf16>, vector<50x128xf32> -> vector<50x128xf32>
    %5 = arith.maximumf %2, %4 : vector<50x128xf32>
    %c0_6 = arith.constant 0 : index
    %c0_7 = arith.constant 0 : index
    %6 = vector.load %arg3[%c0_6, %c0_7] : memref<50x150xbf16, #tpu.memory_space<vmem>>, vector<50x150xbf16>
    %cst_8 = arith.constant dense<0.000000e+00> : vector<50x128xf32>
    %7 = tpu.matmul %6, %0, %cst_8 {dimension_numbers = #tpu.dot_dimension_numbers<[1], [0], [0], [1], [0, 0, 1, 1], [], []>} : vector<50x150xbf16>, vector<150x128xbf16>, vector<50x128xf32> -> vector<50x128xf32>
    %8 = arith.maximumf %5, %7 : vector<50x128xf32>
    %c0_9 = arith.constant 0 : index
    %c0_10 = arith.constant 0 : index
    %9 = vector.load %arg4[%c0_9, %c0_10] : memref<50x150xbf16, #tpu.memory_space<vmem>>, vector<50x150xbf16>
    %cst_11 = arith.constant dense<0.000000e+00> : vector<50x128xf32>
    %10 = tpu.matmul %9, %0, %cst_11 {dimension_numbers = #tpu.dot_dimension_numbers<[1], [0], [0], [1], [0, 0, 1, 1], [], []>} : vector<50x150xbf16>, vector<150x128xbf16>, vector<50x128xf32> -> vector<50x128xf32>
    %11 = arith.maximumf %8, %10 : vector<50x128xf32>
    %c0_12 = arith.constant 0 : index
    %c0_13 = arith.constant 0 : index
    %12 = vector.load %arg6[%c0_12, %c0_13] : memref<1x128xf32, #tpu.memory_space<vmem>>, vector<1x128xf32>
    %13 = vector.broadcast %12 : vector<1x128xf32> to vector<50x128xf32>
    %14 = arith.addf %11, %13 : vector<50x128xf32>
    %cst_14 = arith.constant 0.000000e+00 : f32
    %15 = vector.broadcast %cst_14 : f32 to vector<50x128xf32>
    %16 = arith.maximumf %14, %15 : vector<50x128xf32>
    %17 = arith.truncf %16 : vector<50x128xf32> to vector<50x128xbf16>
    %c0_15 = arith.constant 0 : index
    %c0_16 = arith.constant 0 : index
    %18 = vector.load %arg7[%c0_15, %c0_16] : memref<50x128xbf16, #tpu.memory_space<vmem>>, vector<50x128xbf16>
    tpu.vector_store %arg7[%c0_15, %c0_16], %17 {strides = array<i32>} : memref<50x128xbf16, #tpu.memory_space<vmem>>, vector<50x128xbf16>,
    return
  }
  func.func @transform_0(%arg0: i32) -> (i32, i32) {
    %c0_i32 = arith.constant 0 : i32
    %c0_i32_0 = arith.constant 0 : i32
    return %arg0, %c0_i32 : i32, i32
  }
  func.func @transform_1(%arg0: i32) -> (i32, i32) {
    %c0_i32 = arith.constant 0 : i32
    %c0_i32_0 = arith.constant 0 : i32
    return %arg0, %c0_i32 : i32, i32
  }
  func.func @transform_2(%arg0: i32) -> (i32, i32) {
    %c0_i32 = arith.constant 0 : i32
    %c0_i32_0 = arith.constant 0 : i32
    return %arg0, %c0_i32 : i32, i32
  }
  func.func @transform_3(%arg0: i32) -> (i32, i32) {
    %c0_i32 = arith.constant 0 : i32
    %c0_i32_0 = arith.constant 0 : i32
    return %arg0, %c0_i32 : i32, i32
  }
  func.func @transform_4(%arg0: i32) -> (i32, i32) {
    %c0_i32 = arith.constant 0 : i32
    %c0_i32_0 = arith.constant 0 : i32
    %c0_i32_1 = arith.constant 0 : i32
    return %c0_i32, %c0_i32_0 : i32, i32
  }
  func.func @transform_5(%arg0: i32) -> (i32, i32) {
    %c0_i32 = arith.constant 0 : i32
    %c0_i32_0 = arith.constant 0 : i32
    %c0_i32_1 = arith.constant 0 : i32
    return %c0_i32, %c0_i32_0 : i32, i32
  }
  func.func @transform_6(%arg0: i32) -> (i32, i32) {
    %c0_i32 = arith.constant 0 : i32
    %c0_i32_0 = arith.constant 0 : i32
    return %arg0, %c0_i32 : i32, i32
  }
}

module attributes {stable_mosaic.version = 11 : i64} {
  func.func @_mlp_kernel(%arg0: i32, %arg1: memref<2x400xbf16, #tpu.memory_space<vmem>>, %arg2: memref<400x128xbf16, #tpu.memory_space<vmem>>, %arg3: memref<1x128xf32, #tpu.memory_space<vmem>>, %arg4: memref<128x128xbf16, #tpu.memory_space<vmem>>, %arg5: memref<1x128xf32, #tpu.memory_space<vmem>>, %arg6: memref<128x128xbf16, #tpu.memory_space<vmem>>, %arg7: memref<1x128xf32, #tpu.memory_space<vmem>>, %arg8: memref<2x128xf32, #tpu.memory_space<vmem>>) attributes {dimension_semantics = [#tpu.dimension_semantics<parallel>], iteration_bounds = array<i64: 1>, scalar_prefetch = 0 : i64, scratch_operands = 0 : i64, tpu.core_type = #tpu.core_type<tc>, window_params = [{transform_indices = @transform_0, window_bounds = array<i64: 2, 400>}, {pipeline_mode = #tpu.pipeline_mode<synchronous>, transform_indices = @transform_1, window_bounds = array<i64: 400, 128>}, {pipeline_mode = #tpu.pipeline_mode<synchronous>, transform_indices = @transform_2, window_bounds = array<i64: 1, 128>}, {pipeline_mode = #tpu.pipeline_mode<synchronous>, transform_indices = @transform_3, window_bounds = array<i64: 128, 128>}, {pipeline_mode = #tpu.pipeline_mode<synchronous>, transform_indices = @transform_4, window_bounds = array<i64: 1, 128>}, {pipeline_mode = #tpu.pipeline_mode<synchronous>, transform_indices = @transform_5, window_bounds = array<i64: 128, 128>}, {pipeline_mode = #tpu.pipeline_mode<synchronous>, transform_indices = @transform_6, window_bounds = array<i64: 1, 128>}, {transform_indices = @transform_7, window_bounds = array<i64: 2, 128>}]} {
    %c0 = arith.constant 0 : index
    %c0_0 = arith.constant 0 : index
    %0 = vector.load %arg1[%c0, %c0_0] : memref<2x400xbf16, #tpu.memory_space<vmem>>, vector<2x400xbf16>
    %c0_1 = arith.constant 0 : index
    %c0_2 = arith.constant 0 : index
    %1 = vector.load %arg2[%c0_1, %c0_2] : memref<400x128xbf16, #tpu.memory_space<vmem>>, vector<400x128xbf16>
    %cst = arith.constant dense<0.000000e+00> : vector<2x128xf32>
    %2 = tpu.matmul %0, %1, %cst {dimension_numbers = #tpu.dot_dimension_numbers<[1], [0], [0], [1], [0, 0, 1, 1], [], []>} : vector<2x400xbf16>, vector<400x128xbf16>, vector<2x128xf32> -> vector<2x128xf32>
    %c0_3 = arith.constant 0 : index
    %c0_4 = arith.constant 0 : index
    %3 = vector.load %arg3[%c0_3, %c0_4] : memref<1x128xf32, #tpu.memory_space<vmem>>, vector<1x128xf32>
    %4 = vector.broadcast %3 : vector<1x128xf32> to vector<2x128xf32>
    %5 = arith.addf %2, %4 : vector<2x128xf32>
    %cst_5 = arith.constant 0.000000e+00 : f32
    %6 = vector.broadcast %cst_5 : f32 to vector<2x128xf32>
    %7 = arith.maximumf %5, %6 : vector<2x128xf32>
    %8 = arith.truncf %7 : vector<2x128xf32> to vector<2x128xbf16>
    %c0_6 = arith.constant 0 : index
    %c0_7 = arith.constant 0 : index
    %9 = vector.load %arg4[%c0_6, %c0_7] : memref<128x128xbf16, #tpu.memory_space<vmem>>, vector<128x128xbf16>
    %cst_8 = arith.constant dense<0.000000e+00> : vector<2x128xf32>
    %10 = tpu.matmul %8, %9, %cst_8 {dimension_numbers = #tpu.dot_dimension_numbers<[1], [0], [0], [1], [0, 0, 1, 1], [], []>} : vector<2x128xbf16>, vector<128x128xbf16>, vector<2x128xf32> -> vector<2x128xf32>
    %c0_9 = arith.constant 0 : index
    %c0_10 = arith.constant 0 : index
    %11 = vector.load %arg5[%c0_9, %c0_10] : memref<1x128xf32, #tpu.memory_space<vmem>>, vector<1x128xf32>
    %12 = vector.broadcast %11 : vector<1x128xf32> to vector<2x128xf32>
    %13 = arith.addf %10, %12 : vector<2x128xf32>
    %cst_11 = arith.constant 0.000000e+00 : f32
    %14 = vector.broadcast %cst_11 : f32 to vector<2x128xf32>
    %15 = arith.maximumf %13, %14 : vector<2x128xf32>
    %16 = arith.truncf %15 : vector<2x128xf32> to vector<2x128xbf16>
    %c0_12 = arith.constant 0 : index
    %c0_13 = arith.constant 0 : index
    %17 = vector.load %arg6[%c0_12, %c0_13] : memref<128x128xbf16, #tpu.memory_space<vmem>>, vector<128x128xbf16>
    %cst_14 = arith.constant dense<0.000000e+00> : vector<2x128xf32>
    %18 = tpu.matmul %16, %17, %cst_14 {dimension_numbers = #tpu.dot_dimension_numbers<[1], [0], [0], [1], [0, 0, 1, 1], [], []>} : vector<2x128xbf16>, vector<128x128xbf16>, vector<2x128xf32> -> vector<2x128xf32>
    %c0_15 = arith.constant 0 : index
    %c0_16 = arith.constant 0 : index
    %19 = vector.load %arg7[%c0_15, %c0_16] : memref<1x128xf32, #tpu.memory_space<vmem>>, vector<1x128xf32>
    %20 = vector.broadcast %19 : vector<1x128xf32> to vector<2x128xf32>
    %21 = arith.addf %18, %20 : vector<2x128xf32>
    %c0_17 = arith.constant 0 : index
    %c0_18 = arith.constant 0 : index
    %22 = vector.load %arg8[%c0_17, %c0_18] : memref<2x128xf32, #tpu.memory_space<vmem>>, vector<2x128xf32>
    tpu.vector_store %arg8[%c0_17, %c0_18], %21 {strides = array<i32>} : memref<2x128xf32, #tpu.memory_space<vmem>>, vector<2x128xf32>,
    return
  }
  func.func @transform_0(%arg0: i32) -> (i32, i32) {
    %c0_i32 = arith.constant 0 : i32
    %c0_i32_0 = arith.constant 0 : i32
    return %arg0, %c0_i32 : i32, i32
  }
  func.func @transform_1(%arg0: i32) -> (i32, i32) {
    %c0_i32 = arith.constant 0 : i32
    %c0_i32_0 = arith.constant 0 : i32
    %c0_i32_1 = arith.constant 0 : i32
    return %c0_i32, %c0_i32_0 : i32, i32
  }
  func.func @transform_2(%arg0: i32) -> (i32, i32) {
    %c0_i32 = arith.constant 0 : i32
    %c0_i32_0 = arith.constant 0 : i32
    %c0_i32_1 = arith.constant 0 : i32
    return %c0_i32, %c0_i32_0 : i32, i32
  }
  func.func @transform_3(%arg0: i32) -> (i32, i32) {
    %c0_i32 = arith.constant 0 : i32
    %c0_i32_0 = arith.constant 0 : i32
    %c0_i32_1 = arith.constant 0 : i32
    return %c0_i32, %c0_i32_0 : i32, i32
  }
  func.func @transform_4(%arg0: i32) -> (i32, i32) {
    %c0_i32 = arith.constant 0 : i32
    %c0_i32_0 = arith.constant 0 : i32
    %c0_i32_1 = arith.constant 0 : i32
    return %c0_i32, %c0_i32_0 : i32, i32
  }
  func.func @transform_5(%arg0: i32) -> (i32, i32) {
    %c0_i32 = arith.constant 0 : i32
    %c0_i32_0 = arith.constant 0 : i32
    %c0_i32_1 = arith.constant 0 : i32
    return %c0_i32, %c0_i32_0 : i32, i32
  }
  func.func @transform_6(%arg0: i32) -> (i32, i32) {
    %c0_i32 = arith.constant 0 : i32
    %c0_i32_0 = arith.constant 0 : i32
    %c0_i32_1 = arith.constant 0 : i32
    return %c0_i32, %c0_i32_0 : i32, i32
  }
  func.func @transform_7(%arg0: i32) -> (i32, i32) {
    %c0_i32 = arith.constant 0 : i32
    %c0_i32_0 = arith.constant 0 : i32
    return %arg0, %c0_i32 : i32, i32
  }
}

</mosaic_0001>

<llo_original>
// kernel: net_forward.3
$region0: #{net_forward.3}
  #allocation0 [shape = 'u32[]', space=smem, size = 0x4, offset = 0x4, fixed_abs, tag = 'smem constant byte address 0x4 - core index']
  #allocation1 [shape = 'u32[144,128]{1,0:T(1,128)}', space=vmem, size = 0x12000, scoped, tag = 'internal scratch']
  %s0 = inlined_call_operand.vmem [shape: bf16[392,75], index: 0, kind: input, shape index: {}]
  %s1 = inlined_call_operand.vmem [shape: bf16[392,75], index: 1, kind: input, shape index: {}]
  %s2 = inlined_call_operand.vmem [shape: bf16[392,75], index: 2, kind: input, shape index: {}]
  %s3 = inlined_call_operand.vmem [shape: bf16[392,75], index: 3, kind: input, shape index: {}]
  %s4 = inlined_call_operand.vmem [shape: bf16[75,128], index: 4, kind: input, shape index: {}]
  %s5 = inlined_call_operand.vmem [shape: f32[1,128], index: 5, kind: input, shape index: {}]
  %s6 = inlined_call_operand.vmem [shape: bf16[392,128], index: 6, kind: output, shape index: {}]
  %s7 = sld [smem:[#allocation0]]
  $region34: #{net_forward.3} parent=0
    _
  %s9 = ssub.s32 1, %s7
  %s10 = scalar_select 0, %s9, %s7
  // Predicated region
  $region2: #{net_forward.3} parent=0 // pred_check
    _
  $region3: #{net_forward.3} parent=0 // pred_check_branch
    %12 = sbr.rel (0) target = $region5
  $region4: #{net_forward.3} parent=0 // pred_region
    _
  $region5: #{net_forward.3} parent=0 // pred_fallthru
    _
  // Predicated region
  $region6: #{net_forward.3} parent=0 // pred_check
    _
  $region7: #{net_forward.3} parent=0 // pred_check_branch
    %14 = sbr.rel (0) target = $region9
  $region8: #{net_forward.3} parent=0 // pred_region
    _
  $region9: #{net_forward.3} parent=0 // pred_fallthru
    _
  // Predicated region
  $region10: #{net_forward.3} parent=0 // pred_check
    _
  $region11: #{net_forward.3} parent=0 // pred_check_branch
    %16 = sbr.rel (0) target = $region13
  $region12: #{net_forward.3} parent=0 // pred_region
    _
  $region13: #{net_forward.3} parent=0 // pred_fallthru
    _
  // Predicated region
  $region14: #{net_forward.3} parent=0 // pred_check
    _
  $region15: #{net_forward.3} parent=0 // pred_check_branch
    %18 = sbr.rel (0) target = $region17
  $region16: #{net_forward.3} parent=0 // pred_region
    _
  $region17: #{net_forward.3} parent=0 // pred_fallthru
    _
  // Predicated region
  $region18: #{net_forward.3} parent=0 // pred_check
    _
  $region19: #{net_forward.3} parent=0 // pred_check_branch
    %20 = sbr.rel (0) target = $region21
  $region20: #{net_forward.3} parent=0 // pred_region
    _
  $region21: #{net_forward.3} parent=0 // pred_fallthru
    _
  // Predicated region
  $region22: #{net_forward.3} parent=0 // pred_check
    _
  $region23: #{net_forward.3} parent=0 // pred_check_branch
    %22 = sbr.rel (0) target = $region25
  $region24: #{net_forward.3} parent=0 // pred_region
    _
  $region25: #{net_forward.3} parent=0 // pred_fallthru
    _
  %v24 = vld [vmem:[%s4] sm:$0xf]
  %v25 = vld [vmem:[%s4 + $0x4] sm:$0xf]
  %v26 = vld [vmem:[%s4 + $0x8] sm:$0xf]
  %v27 = vld [vmem:[%s4 + $0xc] sm:$0xf]
  %v28 = vld [vmem:[%s4 + $0x10] sm:$0xf]
  %v29 = vld [vmem:[%s4 + $0x14] sm:$0xf]
  %v30 = vld [vmem:[%s4 + $0x18] sm:$0xf]
  %v31 = vld [vmem:[%s4 + $0x1c] sm:$0xf]
  %v32 = vld [vmem:[%s4 + $0x20] sm:$0xf]
  %v33 = vld [vmem:[%s4 + $0x24] sm:$0x3]
  %v34 = vld [vmem:[%s0] sm:$0xf]
  %v35 = vld [vmem:[%s0 + $0x4] sm:$0xf]
  %v36 = vld [vmem:[%s0 + $0x8] sm:$0xf]
  %v37 = vld [vmem:[%s0 + $0xc] sm:$0xf]
  %v38 = vld [vmem:[%s0 + $0x10] sm:$0xf]
  %v39 = vld [vmem:[%s0 + $0x14] sm:$0xf]
  %v40 = vld [vmem:[%s0 + $0x18] sm:$0xf]
  %v41 = vld [vmem:[%s0 + $0x1c] sm:$0xf]
  %v42 = vld [vmem:[%s0 + $0x20] sm:$0xf]
  %v43 = vld [vmem:[%s0 + $0x24] sm:$0xf]
  %v44 = vld [vmem:[%s0 + $0x28] sm:$0xf]
  %v45 = vld [vmem:[%s0 + $0x2c] sm:$0xf]
  %v46 = vld [vmem:[%s0 + $0x30] sm:$0xf]
  %v47 = vld [vmem:[%s0 + $0x34] sm:$0xf]
  %v48 = vld [vmem:[%s0 + $0x38] sm:$0xf]
  %v49 = vld [vmem:[%s0 + $0x3c] sm:$0xf]
  %v50 = vld [vmem:[%s0 + $0x40] sm:$0xf]
  %v51 = vld [vmem:[%s0 + $0x44] sm:$0xf]
  %v52 = vld [vmem:[%s0 + $0x48] sm:$0xf]
  %v53 = vld [vmem:[%s0 + $0x4c] sm:$0xf]
  %v54 = vld [vmem:[%s0 + $0x50] sm:$0xf]
  %v55 = vld [vmem:[%s0 + $0x54] sm:$0xf]
  %v56 = vld [vmem:[%s0 + $0x58] sm:$0xf]
  %v57 = vld [vmem:[%s0 + $0x5c] sm:$0xf]
  %v58 = vld [vmem:[%s0 + $0x60] sm:$0xf]
  %v59 = vld [vmem:[%s0 + $0x64] sm:$0xf]
  %v60 = vld [vmem:[%s0 + $0x68] sm:$0xf]
  %v61 = vld [vmem:[%s0 + $0x6c] sm:$0xf]
  %v62 = vld [vmem:[%s0 + $0x70] sm:$0xf]
  %v63 = vld [vmem:[%s0 + $0x74] sm:$0xf]
  %v64 = vld [vmem:[%s0 + $0x78] sm:$0xf]
  %v65 = vld [vmem:[%s0 + $0x7c] sm:$0xf]
  %v66 = vld [vmem:[%s0 + $0x80] sm:$0xf]
  %v67 = vld [vmem:[%s0 + $0x84] sm:$0xf]
  %v68 = vld [vmem:[%s0 + $0x88] sm:$0xf]
  %v69 = vld [vmem:[%s0 + $0x8c] sm:$0xf]
  %v70 = vld [vmem:[%s0 + $0x90] sm:$0xf]
  %v71 = vld [vmem:[%s0 + $0x94] sm:$0xf]
  %v72 = vld [vmem:[%s0 + $0x98] sm:$0xf]
  %v73 = vld [vmem:[%s0 + $0x9c] sm:$0xf]
  %v74 = vld [vmem:[%s0 + $0xa0] sm:$0xf]
  %v75 = vld [vmem:[%s0 + $0xa4] sm:$0xf]
  %v76 = vld [vmem:[%s0 + $0xa8] sm:$0xf]
  %v77 = vld [vmem:[%s0 + $0xac] sm:$0xf]
  %v78 = vld [vmem:[%s0 + $0xb0] sm:$0xf]
  %v79 = vld [vmem:[%s0 + $0xb4] sm:$0xf]
  %v80 = vld [vmem:[%s0 + $0xb8] sm:$0xf]
  %v81 = vld [vmem:[%s0 + $0xbc] sm:$0xf]
  %v82 = vld [vmem:[%s0 + $0xc0] sm:$0xf]
  %v132 = vunpack.c.l.b16 %v34
  %v133 = vunpack.c.l.b16 %v35
  %v134 = vunpack.c.l.b16 %v36
  %v135 = vunpack.c.l.b16 %v37
  %v136 = vunpack.c.l.b16 %v38
  %v137 = vunpack.c.l.b16 %v39
  %v138 = vunpack.c.l.b16 %v40
  %v139 = vunpack.c.l.b16 %v41
  %v140 = vunpack.c.l.b16 %v42
  %v141 = vunpack.c.l.b16 %v43
  %v142 = vunpack.c.l.b16 %v44
  %v143 = vunpack.c.l.b16 %v45
  %v144 = vunpack.c.l.b16 %v46
  %v145 = vunpack.c.l.b16 %v47
  %v146 = vunpack.c.l.b16 %v48
  %v147 = vunpack.c.l.b16 %v49
  %v148 = vunpack.c.l.b16 %v50
  %v149 = vunpack.c.l.b16 %v51
  %v150 = vunpack.c.l.b16 %v52
  %v151 = vunpack.c.l.b16 %v53
  %v152 = vunpack.c.l.b16 %v54
  %v153 = vunpack.c.l.b16 %v55
  %v154 = vunpack.c.l.b16 %v56
  %v155 = vunpack.c.l.b16 %v57
  %v156 = vunpack.c.l.b16 %v58
  %v157 = vunpack.c.l.b16 %v59
  %v158 = vunpack.c.l.b16 %v60
  %v159 = vunpack.c.l.b16 %v61
  %v160 = vunpack.c.l.b16 %v62
  %v161 = vunpack.c.l.b16 %v63
  %v162 = vunpack.c.l.b16 %v64
  %v163 = vunpack.c.l.b16 %v65
  %v164 = vunpack.c.l.b16 %v66
  %v165 = vunpack.c.l.b16 %v67
  %v166 = vunpack.c.l.b16 %v68
  %v167 = vunpack.c.l.b16 %v69
  %v168 = vunpack.c.l.b16 %v70
  %v169 = vunpack.c.l.b16 %v71
  %v170 = vunpack.c.l.b16 %v72
  %v171 = vunpack.c.l.b16 %v73
  %v172 = vunpack.c.l.b16 %v74
  %v173 = vunpack.c.l.b16 %v75
  %v174 = vunpack.c.l.b16 %v76
  %v175 = vunpack.c.l.b16 %v77
  %v176 = vunpack.c.l.b16 %v78
  %v177 = vunpack.c.l.b16 %v79
  %v178 = vunpack.c.l.b16 %v80
  %v179 = vunpack.c.l.b16 %v81
  %v180 = vunpack.c.l.b16 %v82
  %v181 = vpack.c.b16 %v133, %v132
  %v182 = vpack.c.b16 %v135, %v134
  %v183 = vpack.c.b16 %v137, %v136
  %v184 = vpack.c.b16 %v139, %v138
  %v185 = vpack.c.b16 %v141, %v140
  %v186 = vpack.c.b16 %v143, %v142
  %v187 = vpack.c.b16 %v145, %v144
  %v188 = vpack.c.b16 %v147, %v146
  %v189 = vpack.c.b16 %v149, %v148
  %v190 = vpack.c.b16 %v151, %v150
  %v191 = vpack.c.b16 %v153, %v152
  %v192 = vpack.c.b16 %v155, %v154
  %v193 = vpack.c.b16 %v157, %v156
  %v194 = vpack.c.b16 %v159, %v158
  %v195 = vpack.c.b16 %v161, %v160
  %v196 = vpack.c.b16 %v163, %v162
  %v197 = vpack.c.b16 %v165, %v164
  %v198 = vpack.c.b16 %v167, %v166
  %v199 = vpack.c.b16 %v169, %v168
  %v200 = vpack.c.b16 %v171, %v170
  %v201 = vpack.c.b16 %v173, %v172
  %v202 = vpack.c.b16 %v175, %v174
  %v203 = vpack.c.b16 %v177, %v176
  %v204 = vpack.c.b16 %v179, %v178
  %v205 = vpack.c.b16 %v180, %v180
  %v216 = vunpack.c.l.b16 %v24
  %v217 = vunpack.c.l.b16 %v25
  %v218 = vunpack.c.l.b16 %v26
  %v219 = vunpack.c.l.b16 %v27
  %v220 = vunpack.c.l.b16 %v28
  %v221 = vunpack.c.l.b16 %v29
  %v222 = vunpack.c.l.b16 %v30
  %v223 = vunpack.c.l.b16 %v31
  %v224 = vunpack.c.l.b16 %v32
  %v225 = vunpack.c.l.b16 %v33
  %v226 = vpack.c.b16 %v217, %v216
  %v227 = vpack.c.b16 %v219, %v218
  %v228 = vpack.c.b16 %v221, %v220
  %v229 = vpack.c.b16 %v223, %v222
  %v230 = vpack.c.b16 %v225, %v224
  %vm235 = vcmask 613376
  %v237 = vsel %vm235, %v181, 0
  %v240 = vsel %vm235, %v182, 0
  %v243 = vsel %vm235, %v183, 0
  %v246 = vsel %vm235, %v184, 0
  %v249 = vsel %vm235, %v185, 0
  %v252 = vsel %vm235, %v186, 0
  %v255 = vsel %vm235, %v187, 0
  %v258 = vsel %vm235, %v188, 0
  %v261 = vsel %vm235, %v189, 0
  %v264 = vsel %vm235, %v190, 0
  %v267 = vsel %vm235, %v191, 0
  %v270 = vsel %vm235, %v192, 0
  %v273 = vsel %vm235, %v193, 0
  %v276 = vsel %vm235, %v194, 0
  %v279 = vsel %vm235, %v195, 0
  %v282 = vsel %vm235, %v196, 0
  %v285 = vsel %vm235, %v197, 0
  %v288 = vsel %vm235, %v198, 0
  %v291 = vsel %vm235, %v199, 0
  %v294 = vsel %vm235, %v200, 0
  %v297 = vsel %vm235, %v201, 0
  %v300 = vsel %vm235, %v202, 0
  %v303 = vsel %vm235, %v203, 0
  %v306 = vsel %vm235, %v204, 0
  %v309 = vsel %vm235, %v205, 0
  %vm311 = vcmask 1044480
  %vm312 = vcmask 1045504
  %v313 = vsel %vm311, 4294967295, 65535
  %v314 = vsel %vm312, %v313, 0
  %v316 = vand.u32 %v230, %v314
  %318 = vmatprep.subr.bf16.mxu0 0
  %319 = vmatpush1.bf16.msra.mxu0 0
  %320 = vmatprep.subr.bf16.mxu0 0
  %321 = vmatpush1.bf16.msra.mxu0 0
  %322 = vmatprep.subr.bf16.mxu0 0
  %323 = vmatpush1.bf16.msra.mxu0 0
  %324 = vmatprep.subr.bf16.mxu0 0
  %325 = vmatpush1.bf16.msra.mxu0 %v316
  %326 = vmatprep.subr.bf16.mxu0 0
  %327 = vmatpush1.bf16.msra.mxu0 %v229
  %328 = vmatprep.subr.bf16.mxu0 0
  %329 = vmatpush1.bf16.msra.mxu0 %v228
  %330 = vmatprep.subr.bf16.mxu0 0
  %331 = vmatpush1.bf16.msra.mxu0 %v227
  %332 = vmatprep.subr.bf16.mxu0 0
  %333 = vmatpush1.bf16.msra.mxu0 %v226
  %334 = vmatprep.subr.bf16.mxu0 0
  %335 = vmatpush2.bf16.msra.mxu0 0
  %336 = vmatprep.subr.bf16.mxu0 0
  %337 = vmatpush2.bf16.msra.mxu0 0
  %338 = vmatprep.subr.bf16.mxu0 0
  %339 = vmatpush2.bf16.msra.mxu0 0
  %340 = vmatprep.subr.bf16.mxu0 0
  %341 = vmatpush2.bf16.msra.mxu0 0
  %342 = vmatprep.subr.bf16.mxu0 0
  %343 = vmatpush2.bf16.msra.mxu0 0
  %344 = vmatprep.subr.bf16.mxu0 0
  %345 = vmatpush2.bf16.msra.mxu0 0
  %346 = vmatprep.subr.bf16.mxu0 0
  %347 = vmatpush2.bf16.msra.mxu0 0
  %348 = vmatprep.subr.bf16.mxu0 0
  %349 = vmatpush2.bf16.msra.mxu0 0
  %350 = vmatprep.mubr.bf16.mxu0 0
  %351 = vmatmul.mubr.bf16.gmra.mxu0 %v237
  %v352 = vpop.f32.mrf.mxu0
  %v353 = vadd.f32 0.0, %v352
  %v354 = vpop.f32.mrf.mxu0
  %v355 = vpop.f32.mrf.mxu0
  %v356 = vadd.f32 0.0, %v355
  %v357 = vpop.f32.mrf.mxu0
  %358 = vmatprep.mubr.bf16.mxu0 0
  %359 = vmatmul.mubr.bf16.gmra.mxu0 %v240
  %v360 = vpop.f32.mrf.mxu0
  %v361 = vadd.f32 0.0, %v360
  %v362 = vpop.f32.mrf.mxu0
  %v363 = vpop.f32.mrf.mxu0
  %v364 = vadd.f32 0.0, %v363
  %v365 = vpop.f32.mrf.mxu0
  %366 = vmatprep.mubr.bf16.mxu0 0
  %367 = vmatmul.mubr.bf16.gmra.mxu0 %v243
  %v368 = vpop.f32.mrf.mxu0
  %v369 = vadd.f32 0.0, %v368
  %v370 = vpop.f32.mrf.mxu0
  %v371 = vpop.f32.mrf.mxu0
  %v372 = vadd.f32 0.0, %v371
  %v373 = vpop.f32.mrf.mxu0
  %374 = vmatprep.mubr.bf16.mxu0 0
  %375 = vmatmul.mubr.bf16.gmra.mxu0 %v246
  %v376 = vpop.f32.mrf.mxu0
  %v377 = vadd.f32 0.0, %v376
  %v378 = vpop.f32.mrf.mxu0
  %v379 = vpop.f32.mrf.mxu0
  %v380 = vadd.f32 0.0, %v379
  %v381 = vpop.f32.mrf.mxu0
  %382 = vmatprep.mubr.bf16.mxu0 0
  %383 = vmatmul.mubr.bf16.gmra.mxu0 %v249
  %v384 = vpop.f32.mrf.mxu0
  %v385 = vadd.f32 0.0, %v384
  %v386 = vpop.f32.mrf.mxu0
  %v387 = vpop.f32.mrf.mxu0
  %v388 = vadd.f32 0.0, %v387
  %v389 = vpop.f32.mrf.mxu0
  %390 = vmatprep.mubr.bf16.mxu0 0
  %391 = vmatmul.mubr.bf16.gmra.mxu0 %v252
  %v392 = vpop.f32.mrf.mxu0
  %v393 = vadd.f32 0.0, %v392
  %v394 = vpop.f32.mrf.mxu0
  %v395 = vpop.f32.mrf.mxu0
  %v396 = vadd.f32 0.0, %v395
  %v397 = vpop.f32.mrf.mxu0
  %398 = vmatprep.mubr.bf16.mxu0 0
  %399 = vmatmul.mubr.bf16.gmra.mxu0 %v255
  %v400 = vpop.f32.mrf.mxu0
  %v401 = vadd.f32 0.0, %v400
  %v402 = vpop.f32.mrf.mxu0
  %v403 = vpop.f32.mrf.mxu0
  %v404 = vadd.f32 0.0, %v403
  %v405 = vpop.f32.mrf.mxu0
  %406 = vmatprep.mubr.bf16.mxu0 0
  %407 = vmatmul.mubr.bf16.gmra.mxu0 %v258
  %v408 = vpop.f32.mrf.mxu0
  %v409 = vadd.f32 0.0, %v408
  %v410 = vpop.f32.mrf.mxu0
  %v411 = vpop.f32.mrf.mxu0
  %v412 = vadd.f32 0.0, %v411
  %v413 = vpop.f32.mrf.mxu0
  %414 = vmatprep.mubr.bf16.mxu0 0
  %415 = vmatmul.mubr.bf16.gmra.mxu0 %v261
  %v416 = vpop.f32.mrf.mxu0
  %v417 = vadd.f32 0.0, %v416
  %v418 = vpop.f32.mrf.mxu0
  %v419 = vpop.f32.mrf.mxu0
  %v420 = vadd.f32 0.0, %v419
  %v421 = vpop.f32.mrf.mxu0
  %422 = vmatprep.mubr.bf16.mxu0 0
  %423 = vmatmul.mubr.bf16.gmra.mxu0 %v264
  %v424 = vpop.f32.mrf.mxu0
  %v425 = vadd.f32 0.0, %v424
  %v426 = vpop.f32.mrf.mxu0
  %v427 = vpop.f32.mrf.mxu0
  %v428 = vadd.f32 0.0, %v427
  %v429 = vpop.f32.mrf.mxu0
  %430 = vmatprep.mubr.bf16.mxu0 0
  %431 = vmatmul.mubr.bf16.gmra.mxu0 %v267
  %v432 = vpop.f32.mrf.mxu0
  %v433 = vadd.f32 0.0, %v432
  %v434 = vpop.f32.mrf.mxu0
  %v435 = vpop.f32.mrf.mxu0
  %v436 = vadd.f32 0.0, %v435
  %v437 = vpop.f32.mrf.mxu0
  %438 = vmatprep.mubr.bf16.mxu0 0
  %439 = vmatmul.mubr.bf16.gmra.mxu0 %v270
  %v440 = vpop.f32.mrf.mxu0
  %v441 = vadd.f32 0.0, %v440
  %v442 = vpop.f32.mrf.mxu0
  %v443 = vpop.f32.mrf.mxu0
  %v444 = vadd.f32 0.0, %v443
  %v445 = vpop.f32.mrf.mxu0
  %446 = vmatprep.mubr.bf16.mxu0 0
  %447 = vmatmul.mubr.bf16.gmra.mxu0 %v273
  %v448 = vpop.f32.mrf.mxu0
  %v449 = vadd.f32 0.0, %v448
  %v450 = vpop.f32.mrf.mxu0
  %v451 = vpop.f32.mrf.mxu0
  %v452 = vadd.f32 0.0, %v451
  %v453 = vpop.f32.mrf.mxu0
  %454 = vmatprep.mubr.bf16.mxu0 0
  %455 = vmatmul.mubr.bf16.gmra.mxu0 %v276
  %v456 = vpop.f32.mrf.mxu0
  %v457 = vadd.f32 0.0, %v456
  %v458 = vpop.f32.mrf.mxu0
  %v459 = vpop.f32.mrf.mxu0
  %v460 = vadd.f32 0.0, %v459
  %v461 = vpop.f32.mrf.mxu0
  %462 = vmatprep.mubr.bf16.mxu0 0
  %463 = vmatmul.mubr.bf16.gmra.mxu0 %v279
  %v464 = vpop.f32.mrf.mxu0
  %v465 = vadd.f32 0.0, %v464
  %v466 = vpop.f32.mrf.mxu0
  %v467 = vpop.f32.mrf.mxu0
  %v468 = vadd.f32 0.0, %v467
  %v469 = vpop.f32.mrf.mxu0
  %470 = vmatprep.mubr.bf16.mxu0 0
  %471 = vmatmul.mubr.bf16.gmra.mxu0 %v282
  %v472 = vpop.f32.mrf.mxu0
  %v473 = vadd.f32 0.0, %v472
  %v474 = vpop.f32.mrf.mxu0
  %v475 = vpop.f32.mrf.mxu0
  %v476 = vadd.f32 0.0, %v475
  %v477 = vpop.f32.mrf.mxu0
  %478 = vmatprep.mubr.bf16.mxu0 0
  %479 = vmatmul.mubr.bf16.gmra.mxu0 %v285
  %v480 = vpop.f32.mrf.mxu0
  %v481 = vadd.f32 0.0, %v480
  %v482 = vpop.f32.mrf.mxu0
  %v483 = vpop.f32.mrf.mxu0
  %v484 = vadd.f32 0.0, %v483
  %v485 = vpop.f32.mrf.mxu0
  %486 = vmatprep.mubr.bf16.mxu0 0
  %487 = vmatmul.mubr.bf16.gmra.mxu0 %v288
  %v488 = vpop.f32.mrf.mxu0
  %v489 = vadd.f32 0.0, %v488
  %v490 = vpop.f32.mrf.mxu0
  %v491 = vpop.f32.mrf.mxu0
  %v492 = vadd.f32 0.0, %v491
  %v493 = vpop.f32.mrf.mxu0
  %494 = vmatprep.mubr.bf16.mxu0 0
  %495 = vmatmul.mubr.bf16.gmra.mxu0 %v291
  %v496 = vpop.f32.mrf.mxu0
  %v497 = vadd.f32 0.0, %v496
  %v498 = vpop.f32.mrf.mxu0
  %v499 = vpop.f32.mrf.mxu0
  %v500 = vadd.f32 0.0, %v499
  %v501 = vpop.f32.mrf.mxu0
  %502 = vmatprep.mubr.bf16.mxu0 0
  %503 = vmatmul.mubr.bf16.gmra.mxu0 %v294
  %v504 = vpop.f32.mrf.mxu0
  %v505 = vadd.f32 0.0, %v504
  %v506 = vpop.f32.mrf.mxu0
  %v507 = vpop.f32.mrf.mxu0
  %v508 = vadd.f32 0.0, %v507
  %v509 = vpop.f32.mrf.mxu0
  %510 = vmatprep.mubr.bf16.mxu0 0
  %511 = vmatmul.mubr.bf16.gmra.mxu0 %v297
  %v512 = vpop.f32.mrf.mxu0
  %v513 = vadd.f32 0.0, %v512
  %v514 = vpop.f32.mrf.mxu0
  %v515 = vpop.f32.mrf.mxu0
  %v516 = vadd.f32 0.0, %v515
  %v517 = vpop.f32.mrf.mxu0
  %518 = vmatprep.mubr.bf16.mxu0 0
  %519 = vmatmul.mubr.bf16.gmra.mxu0 %v300
  %v520 = vpop.f32.mrf.mxu0
  %v521 = vadd.f32 0.0, %v520
  %v522 = vpop.f32.mrf.mxu0
  %v523 = vpop.f32.mrf.mxu0
  %v524 = vadd.f32 0.0, %v523
  %v525 = vpop.f32.mrf.mxu0
  %526 = vmatprep.mubr.bf16.mxu0 0
  %527 = vmatmul.mubr.bf16.gmra.mxu0 %v303
  %v528 = vpop.f32.mrf.mxu0
  %v529 = vadd.f32 0.0, %v528
  %v530 = vpop.f32.mrf.mxu0
  %v531 = vpop.f32.mrf.mxu0
  %v532 = vadd.f32 0.0, %v531
  %v533 = vpop.f32.mrf.mxu0
  %534 = vmatprep.mubr.bf16.mxu0 0
  %535 = vmatmul.mubr.bf16.gmra.mxu0 %v306
  %v536 = vpop.f32.mrf.mxu0
  %v537 = vadd.f32 0.0, %v536
  %v538 = vpop.f32.mrf.mxu0
  %v539 = vpop.f32.mrf.mxu0
  %v540 = vadd.f32 0.0, %v539
  %v541 = vpop.f32.mrf.mxu0
  %542 = vmatprep.mubr.bf16.mxu0 0
  %543 = vmatmul.mubr.bf16.gmra.mxu0 %v309
  %v544 = vpop.f32.mrf.mxu0
  %v545 = vadd.f32 0.0, %v544
  %v546 = vpop.f32.mrf.mxu0
  %v547 = vpop.f32.mrf.mxu0
  %v548 = vpop.f32.mrf.mxu0
  %549 = vdwg.mxu0
  %v550 = vld [vmem:[%s1] sm:$0xf]
  %v551 = vld [vmem:[%s1 + $0x4] sm:$0xf]
  %v552 = vld [vmem:[%s1 + $0x8] sm:$0xf]
  %v553 = vld [vmem:[%s1 + $0xc] sm:$0xf]
  %v554 = vld [vmem:[%s1 + $0x10] sm:$0xf]
  %v555 = vld [vmem:[%s1 + $0x14] sm:$0xf]
  %v556 = vld [vmem:[%s1 + $0x18] sm:$0xf]
  %v557 = vld [vmem:[%s1 + $0x1c] sm:$0xf]
  %v558 = vld [vmem:[%s1 + $0x20] sm:$0xf]
  %v559 = vld [vmem:[%s1 + $0x24] sm:$0xf]
  %v560 = vld [vmem:[%s1 + $0x28] sm:$0xf]
  %v561 = vld [vmem:[%s1 + $0x2c] sm:$0xf]
  %v562 = vld [vmem:[%s1 + $0x30] sm:$0xf]
  %v563 = vld [vmem:[%s1 + $0x34] sm:$0xf]
  %v564 = vld [vmem:[%s1 + $0x38] sm:$0xf]
  %v565 = vld [vmem:[%s1 + $0x3c] sm:$0xf]
  %v566 = vld [vmem:[%s1 + $0x40] sm:$0xf]
  %v567 = vld [vmem:[%s1 + $0x44] sm:$0xf]
  %v568 = vld [vmem:[%s1 + $0x48] sm:$0xf]
  %v569 = vld [vmem:[%s1 + $0x4c] sm:$0xf]
  %v570 = vld [vmem:[%s1 + $0x50] sm:$0xf]
  %v571 = vld [vmem:[%s1 + $0x54] sm:$0xf]
  %v572 = vld [vmem:[%s1 + $0x58] sm:$0xf]
  %v573 = vld [vmem:[%s1 + $0x5c] sm:$0xf]
  %v574 = vld [vmem:[%s1 + $0x60] sm:$0xf]
  %v575 = vld [vmem:[%s1 + $0x64] sm:$0xf]
  %v576 = vld [vmem:[%s1 + $0x68] sm:$0xf]
  %v577 = vld [vmem:[%s1 + $0x6c] sm:$0xf]
  %v578 = vld [vmem:[%s1 + $0x70] sm:$0xf]
  %v579 = vld [vmem:[%s1 + $0x74] sm:$0xf]
  %v580 = vld [vmem:[%s1 + $0x78] sm:$0xf]
  %v581 = vld [vmem:[%s1 + $0x7c] sm:$0xf]
  %v582 = vld [vmem:[%s1 + $0x80] sm:$0xf]
  %v583 = vld [vmem:[%s1 + $0x84] sm:$0xf]
  %v584 = vld [vmem:[%s1 + $0x88] sm:$0xf]
  %v585 = vld [vmem:[%s1 + $0x8c] sm:$0xf]
  %v586 = vld [vmem:[%s1 + $0x90] sm:$0xf]
  %v587 = vld [vmem:[%s1 + $0x94] sm:$0xf]
  %v588 = vld [vmem:[%s1 + $0x98] sm:$0xf]
  %v589 = vld [vmem:[%s1 + $0x9c] sm:$0xf]
  %v590 = vld [vmem:[%s1 + $0xa0] sm:$0xf]
  %v591 = vld [vmem:[%s1 + $0xa4] sm:$0xf]
  %v592 = vld [vmem:[%s1 + $0xa8] sm:$0xf]
  %v593 = vld [vmem:[%s1 + $0xac] sm:$0xf]
  %v594 = vld [vmem:[%s1 + $0xb0] sm:$0xf]
  %v595 = vld [vmem:[%s1 + $0xb4] sm:$0xf]
  %v596 = vld [vmem:[%s1 + $0xb8] sm:$0xf]
  %v597 = vld [vmem:[%s1 + $0xbc] sm:$0xf]
  %v598 = vld [vmem:[%s1 + $0xc0] sm:$0xf]
  %v648 = vunpack.c.l.b16 %v550
  %v649 = vunpack.c.l.b16 %v551
  %v650 = vunpack.c.l.b16 %v552
  %v651 = vunpack.c.l.b16 %v553
  %v652 = vunpack.c.l.b16 %v554
  %v653 = vunpack.c.l.b16 %v555
  %v654 = vunpack.c.l.b16 %v556
  %v655 = vunpack.c.l.b16 %v557
  %v656 = vunpack.c.l.b16 %v558
  %v657 = vunpack.c.l.b16 %v559
  %v658 = vunpack.c.l.b16 %v560
  %v659 = vunpack.c.l.b16 %v561
  %v660 = vunpack.c.l.b16 %v562
  %v661 = vunpack.c.l.b16 %v563
  %v662 = vunpack.c.l.b16 %v564
  %v663 = vunpack.c.l.b16 %v565
  %v664 = vunpack.c.l.b16 %v566
  %v665 = vunpack.c.l.b16 %v567
  %v666 = vunpack.c.l.b16 %v568
  %v667 = vunpack.c.l.b16 %v569
  %v668 = vunpack.c.l.b16 %v570
  %v669 = vunpack.c.l.b16 %v571
  %v670 = vunpack.c.l.b16 %v572
  %v671 = vunpack.c.l.b16 %v573
  %v672 = vunpack.c.l.b16 %v574
  %v673 = vunpack.c.l.b16 %v575
  %v674 = vunpack.c.l.b16 %v576
  %v675 = vunpack.c.l.b16 %v577
  %v676 = vunpack.c.l.b16 %v578
  %v677 = vunpack.c.l.b16 %v579
  %v678 = vunpack.c.l.b16 %v580
  %v679 = vunpack.c.l.b16 %v581
  %v680 = vunpack.c.l.b16 %v582
  %v681 = vunpack.c.l.b16 %v583
  %v682 = vunpack.c.l.b16 %v584
  %v683 = vunpack.c.l.b16 %v585
  %v684 = vunpack.c.l.b16 %v586
  %v685 = vunpack.c.l.b16 %v587
  %v686 = vunpack.c.l.b16 %v588
  %v687 = vunpack.c.l.b16 %v589
  %v688 = vunpack.c.l.b16 %v590
  %v689 = vunpack.c.l.b16 %v591
  %v690 = vunpack.c.l.b16 %v592
  %v691 = vunpack.c.l.b16 %v593
  %v692 = vunpack.c.l.b16 %v594
  %v693 = vunpack.c.l.b16 %v595
  %v694 = vunpack.c.l.b16 %v596
  %v695 = vunpack.c.l.b16 %v597
  %v696 = vunpack.c.l.b16 %v598
  %v697 = vpack.c.b16 %v649, %v648
  %v698 = vpack.c.b16 %v651, %v650
  %v699 = vpack.c.b16 %v653, %v652
  %v700 = vpack.c.b16 %v655, %v654
  %v701 = vpack.c.b16 %v657, %v656
  %v702 = vpack.c.b16 %v659, %v658
  %v703 = vpack.c.b16 %v661, %v660
  %v704 = vpack.c.b16 %v663, %v662
  %v705 = vpack.c.b16 %v665, %v664
  %v706 = vpack.c.b16 %v667, %v666
  %v707 = vpack.c.b16 %v669, %v668
  %v708 = vpack.c.b16 %v671, %v670
  %v709 = vpack.c.b16 %v673, %v672
  %v710 = vpack.c.b16 %v675, %v674
  %v711 = vpack.c.b16 %v677, %v676
  %v712 = vpack.c.b16 %v679, %v678
  %v713 = vpack.c.b16 %v681, %v680
  %v714 = vpack.c.b16 %v683, %v682
  %v715 = vpack.c.b16 %v685, %v684
  %v716 = vpack.c.b16 %v687, %v686
  %v717 = vpack.c.b16 %v689, %v688
  %v718 = vpack.c.b16 %v691, %v690
  %v719 = vpack.c.b16 %v693, %v692
  %v720 = vpack.c.b16 %v695, %v694
  %v721 = vpack.c.b16 %v696, %v696
  %v723 = vsel %vm235, %v697, 0
  %v726 = vsel %vm235, %v698, 0
  %v729 = vsel %vm235, %v699, 0
  %v732 = vsel %vm235, %v700, 0
  %v735 = vsel %vm235, %v701, 0
  %v738 = vsel %vm235, %v702, 0
  %v741 = vsel %vm235, %v703, 0
  %v744 = vsel %vm235, %v704, 0
  %v747 = vsel %vm235, %v705, 0
  %v750 = vsel %vm235, %v706, 0
  %v753 = vsel %vm235, %v707, 0
  %v756 = vsel %vm235, %v708, 0
  %v759 = vsel %vm235, %v709, 0
  %v762 = vsel %vm235, %v710, 0
  %v765 = vsel %vm235, %v711, 0
  %v768 = vsel %vm235, %v712, 0
  %v771 = vsel %vm235, %v713, 0
  %v774 = vsel %vm235, %v714, 0
  %v777 = vsel %vm235, %v715, 0
  %v780 = vsel %vm235, %v716, 0
  %v783 = vsel %vm235, %v717, 0
  %v786 = vsel %vm235, %v718, 0
  %v789 = vsel %vm235, %v719, 0
  %v792 = vsel %vm235, %v720, 0
  %v795 = vsel %vm235, %v721, 0
  %797 = vmatprep.subr.bf16.mxu0 0
  %798 = vmatpush1.bf16.msra.mxu0 0
  %799 = vmatprep.subr.bf16.mxu0 0
  %800 = vmatpush1.bf16.msra.mxu0 0
  %801 = vmatprep.subr.bf16.mxu0 0
  %802 = vmatpush1.bf16.msra.mxu0 0
  %803 = vmatprep.subr.bf16.mxu0 0
  %804 = vmatpush1.bf16.msra.mxu0 %v316
  %805 = vmatprep.subr.bf16.mxu0 0
  %806 = vmatpush1.bf16.msra.mxu0 %v229
  %807 = vmatprep.subr.bf16.mxu0 0
  %808 = vmatpush1.bf16.msra.mxu0 %v228
  %809 = vmatprep.subr.bf16.mxu0 0
  %810 = vmatpush1.bf16.msra.mxu0 %v227
  %811 = vmatprep.subr.bf16.mxu0 0
  %812 = vmatpush1.bf16.msra.mxu0 %v226
  %813 = vmatprep.subr.bf16.mxu0 0
  %814 = vmatpush2.bf16.msra.mxu0 0
  %815 = vmatprep.subr.bf16.mxu0 0
  %816 = vmatpush2.bf16.msra.mxu0 0
  %817 = vmatprep.subr.bf16.mxu0 0
  %818 = vmatpush2.bf16.msra.mxu0 0
  %819 = vmatprep.subr.bf16.mxu0 0
  %820 = vmatpush2.bf16.msra.mxu0 0
  %821 = vmatprep.subr.bf16.mxu0 0
  %822 = vmatpush2.bf16.msra.mxu0 0
  %823 = vmatprep.subr.bf16.mxu0 0
  %824 = vmatpush2.bf16.msra.mxu0 0
  %825 = vmatprep.subr.bf16.mxu0 0
  %826 = vmatpush2.bf16.msra.mxu0 0
  %827 = vmatprep.subr.bf16.mxu0 0
  %828 = vmatpush2.bf16.msra.mxu0 0
  %829 = vmatprep.mubr.bf16.mxu0 0
  %830 = vmatmul.mubr.bf16.gmra.mxu0 %v723
  %v831 = vpop.f32.mrf.mxu0
  %v832 = vadd.f32 0.0, %v831
  %v833 = vpop.f32.mrf.mxu0
  %v834 = vpop.f32.mrf.mxu0
  %v835 = vadd.f32 0.0, %v834
  %v836 = vpop.f32.mrf.mxu0
  %837 = vmatprep.mubr.bf16.mxu0 0
  %838 = vmatmul.mubr.bf16.gmra.mxu0 %v726
  %v839 = vpop.f32.mrf.mxu0
  %v840 = vadd.f32 0.0, %v839
  %v841 = vpop.f32.mrf.mxu0
  %v842 = vpop.f32.mrf.mxu0
  %v843 = vadd.f32 0.0, %v842
  %v844 = vpop.f32.mrf.mxu0
  %845 = vmatprep.mubr.bf16.mxu0 0
  %846 = vmatmul.mubr.bf16.gmra.mxu0 %v729
  %v847 = vpop.f32.mrf.mxu0
  %v848 = vadd.f32 0.0, %v847
  %v849 = vpop.f32.mrf.mxu0
  %v850 = vpop.f32.mrf.mxu0
  %v851 = vadd.f32 0.0, %v850
  %v852 = vpop.f32.mrf.mxu0
  %853 = vmatprep.mubr.bf16.mxu0 0
  %854 = vmatmul.mubr.bf16.gmra.mxu0 %v732
  %v855 = vpop.f32.mrf.mxu0
  %v856 = vadd.f32 0.0, %v855
  %v857 = vpop.f32.mrf.mxu0
  %v858 = vpop.f32.mrf.mxu0
  %v859 = vadd.f32 0.0, %v858
  %v860 = vpop.f32.mrf.mxu0
  %861 = vmatprep.mubr.bf16.mxu0 0
  %862 = vmatmul.mubr.bf16.gmra.mxu0 %v735
  %v863 = vpop.f32.mrf.mxu0
  %v864 = vadd.f32 0.0, %v863
  %v865 = vpop.f32.mrf.mxu0
  %v866 = vpop.f32.mrf.mxu0
  %v867 = vadd.f32 0.0, %v866
  %v868 = vpop.f32.mrf.mxu0
  %869 = vmatprep.mubr.bf16.mxu0 0
  %870 = vmatmul.mubr.bf16.gmra.mxu0 %v738
  %v871 = vpop.f32.mrf.mxu0
  %v872 = vadd.f32 0.0, %v871
  %v873 = vpop.f32.mrf.mxu0
  %v874 = vpop.f32.mrf.mxu0
  %v875 = vadd.f32 0.0, %v874
  %v876 = vpop.f32.mrf.mxu0
  %877 = vmatprep.mubr.bf16.mxu0 0
  %878 = vmatmul.mubr.bf16.gmra.mxu0 %v741
  %v879 = vpop.f32.mrf.mxu0
  %v880 = vadd.f32 0.0, %v879
  %v881 = vpop.f32.mrf.mxu0
  %v882 = vpop.f32.mrf.mxu0
  %v883 = vadd.f32 0.0, %v882
  %v884 = vpop.f32.mrf.mxu0
  %885 = vmatprep.mubr.bf16.mxu0 0
  %886 = vmatmul.mubr.bf16.gmra.mxu0 %v744
  %v887 = vpop.f32.mrf.mxu0
  %v888 = vadd.f32 0.0, %v887
  %v889 = vpop.f32.mrf.mxu0
  %v890 = vpop.f32.mrf.mxu0
  %v891 = vadd.f32 0.0, %v890
  %v892 = vpop.f32.mrf.mxu0
  %893 = vmatprep.mubr.bf16.mxu0 0
  %894 = vmatmul.mubr.bf16.gmra.mxu0 %v747
  %v895 = vpop.f32.mrf.mxu0
  %v896 = vadd.f32 0.0, %v895
  %v897 = vpop.f32.mrf.mxu0
  %v898 = vpop.f32.mrf.mxu0
  %v899 = vadd.f32 0.0, %v898
  %v900 = vpop.f32.mrf.mxu0
  %901 = vmatprep.mubr.bf16.mxu0 0
  %902 = vmatmul.mubr.bf16.gmra.mxu0 %v750
  %v903 = vpop.f32.mrf.mxu0
  %v904 = vadd.f32 0.0, %v903
  %v905 = vpop.f32.mrf.mxu0
  %v906 = vpop.f32.mrf.mxu0
  %v907 = vadd.f32 0.0, %v906
  %v908 = vpop.f32.mrf.mxu0
  %909 = vmatprep.mubr.bf16.mxu0 0
  %910 = vmatmul.mubr.bf16.gmra.mxu0 %v753
  %v911 = vpop.f32.mrf.mxu0
  %v912 = vadd.f32 0.0, %v911
  %v913 = vpop.f32.mrf.mxu0
  %v914 = vpop.f32.mrf.mxu0
  %v915 = vadd.f32 0.0, %v914
  %v916 = vpop.f32.mrf.mxu0
  %917 = vmatprep.mubr.bf16.mxu0 0
  %918 = vmatmul.mubr.bf16.gmra.mxu0 %v756
  %v919 = vpop.f32.mrf.mxu0
  %v920 = vadd.f32 0.0, %v919
  %v921 = vpop.f32.mrf.mxu0
  %v922 = vpop.f32.mrf.mxu0
  %v923 = vadd.f32 0.0, %v922
  %v924 = vpop.f32.mrf.mxu0
  %925 = vmatprep.mubr.bf16.mxu0 0
  %926 = vmatmul.mubr.bf16.gmra.mxu0 %v759
  %v927 = vpop.f32.mrf.mxu0
  %v928 = vadd.f32 0.0, %v927
  %v929 = vpop.f32.mrf.mxu0
  %v930 = vpop.f32.mrf.mxu0
  %v931 = vadd.f32 0.0, %v930
  %v932 = vpop.f32.mrf.mxu0
  %933 = vmatprep.mubr.bf16.mxu0 0
  %934 = vmatmul.mubr.bf16.gmra.mxu0 %v762
  %v935 = vpop.f32.mrf.mxu0
  %v936 = vadd.f32 0.0, %v935
  %v937 = vpop.f32.mrf.mxu0
  %v938 = vpop.f32.mrf.mxu0
  %v939 = vadd.f32 0.0, %v938
  %v940 = vpop.f32.mrf.mxu0
  %941 = vmatprep.mubr.bf16.mxu0 0
  %942 = vmatmul.mubr.bf16.gmra.mxu0 %v765
  %v943 = vpop.f32.mrf.mxu0
  %v944 = vadd.f32 0.0, %v943
  %v945 = vpop.f32.mrf.mxu0
  %v946 = vpop.f32.mrf.mxu0
  %v947 = vadd.f32 0.0, %v946
  %v948 = vpop.f32.mrf.mxu0
  %949 = vmatprep.mubr.bf16.mxu0 0
  %950 = vmatmul.mubr.bf16.gmra.mxu0 %v768
  %v951 = vpop.f32.mrf.mxu0
  %v952 = vadd.f32 0.0, %v951
  %v953 = vpop.f32.mrf.mxu0
  %v954 = vpop.f32.mrf.mxu0
  %v955 = vadd.f32 0.0, %v954
  %v956 = vpop.f32.mrf.mxu0
  %957 = vmatprep.mubr.bf16.mxu0 0
  %958 = vmatmul.mubr.bf16.gmra.mxu0 %v771
  %v959 = vpop.f32.mrf.mxu0
  %v960 = vadd.f32 0.0, %v959
  %v961 = vpop.f32.mrf.mxu0
  %v962 = vpop.f32.mrf.mxu0
  %v963 = vadd.f32 0.0, %v962
  %v964 = vpop.f32.mrf.mxu0
  %965 = vmatprep.mubr.bf16.mxu0 0
  %966 = vmatmul.mubr.bf16.gmra.mxu0 %v774
  %v967 = vpop.f32.mrf.mxu0
  %v968 = vadd.f32 0.0, %v967
  %v969 = vpop.f32.mrf.mxu0
  %v970 = vpop.f32.mrf.mxu0
  %v971 = vadd.f32 0.0, %v970
  %v972 = vpop.f32.mrf.mxu0
  %973 = vmatprep.mubr.bf16.mxu0 0
  %974 = vmatmul.mubr.bf16.gmra.mxu0 %v777
  %v975 = vpop.f32.mrf.mxu0
  %v976 = vadd.f32 0.0, %v975
  %v977 = vpop.f32.mrf.mxu0
  %v978 = vpop.f32.mrf.mxu0
  %v979 = vadd.f32 0.0, %v978
  %v980 = vpop.f32.mrf.mxu0
  %981 = vmatprep.mubr.bf16.mxu0 0
  %982 = vmatmul.mubr.bf16.gmra.mxu0 %v780
  %v983 = vpop.f32.mrf.mxu0
  %v984 = vadd.f32 0.0, %v983
  %v985 = vpop.f32.mrf.mxu0
  %v986 = vpop.f32.mrf.mxu0
  %v987 = vadd.f32 0.0, %v986
  %v988 = vpop.f32.mrf.mxu0
  %989 = vmatprep.mubr.bf16.mxu0 0
  %990 = vmatmul.mubr.bf16.gmra.mxu0 %v783
  %v991 = vpop.f32.mrf.mxu0
  %v992 = vadd.f32 0.0, %v991
  %v993 = vpop.f32.mrf.mxu0
  %v994 = vpop.f32.mrf.mxu0
  %v995 = vadd.f32 0.0, %v994
  %v996 = vpop.f32.mrf.mxu0
  %997 = vmatprep.mubr.bf16.mxu0 0
  %998 = vmatmul.mubr.bf16.gmra.mxu0 %v786
  %v999 = vpop.f32.mrf.mxu0
  %v1000 = vadd.f32 0.0, %v999
  %v1001 = vpop.f32.mrf.mxu0
  %v1002 = vpop.f32.mrf.mxu0
  %v1003 = vadd.f32 0.0, %v1002
  %v1004 = vpop.f32.mrf.mxu0
  %1005 = vmatprep.mubr.bf16.mxu0 0
  %1006 = vmatmul.mubr.bf16.gmra.mxu0 %v789
  %v1007 = vpop.f32.mrf.mxu0
  %v1008 = vadd.f32 0.0, %v1007
  %v1009 = vpop.f32.mrf.mxu0
  %v1010 = vpop.f32.mrf.mxu0
  %v1011 = vadd.f32 0.0, %v1010
  %v1012 = vpop.f32.mrf.mxu0
  %1013 = vmatprep.mubr.bf16.mxu0 0
  %1014 = vmatmul.mubr.bf16.gmra.mxu0 %v792
  %v1015 = vpop.f32.mrf.mxu0
  %v1016 = vadd.f32 0.0, %v1015
  %v1017 = vpop.f32.mrf.mxu0
  %v1018 = vpop.f32.mrf.mxu0
  %v1019 = vadd.f32 0.0, %v1018
  %v1020 = vpop.f32.mrf.mxu0
  %1021 = vmatprep.mubr.bf16.mxu0 0
  %1022 = vmatmul.mubr.bf16.gmra.mxu0 %v795
  %v1023 = vpop.f32.mrf.mxu0
  %v1024 = vadd.f32 0.0, %v1023
  %v1025 = vpop.f32.mrf.mxu0
  %v1026 = vpop.f32.mrf.mxu0
  %v1027 = vpop.f32.mrf.mxu0
  %1028 = vdwg.mxu0
  %v1029 = vmax.f32 %v353, %v832
  %v1030 = vmax.f32 %v356, %v835
  %v1031 = vmax.f32 %v361, %v840
  %v1032 = vmax.f32 %v364, %v843
  %v1033 = vmax.f32 %v369, %v848
  %v1034 = vmax.f32 %v372, %v851
  %v1035 = vmax.f32 %v377, %v856
  %v1036 = vmax.f32 %v380, %v859
  %v1037 = vmax.f32 %v385, %v864
  %v1038 = vmax.f32 %v388, %v867
  %v1039 = vmax.f32 %v393, %v872
  %v1040 = vmax.f32 %v396, %v875
  %v1041 = vmax.f32 %v401, %v880
  %v1042 = vmax.f32 %v404, %v883
  %v1043 = vmax.f32 %v409, %v888
  %v1044 = vmax.f32 %v412, %v891
  %v1045 = vmax.f32 %v417, %v896
  %v1046 = vmax.f32 %v420, %v899
  %v1047 = vmax.f32 %v425, %v904
  %v1048 = vmax.f32 %v428, %v907
  %v1049 = vmax.f32 %v433, %v912
  %v1050 = vmax.f32 %v436, %v915
  %v1051 = vmax.f32 %v441, %v920
  %v1052 = vmax.f32 %v444, %v923
  %v1053 = vmax.f32 %v449, %v928
  %v1054 = vmax.f32 %v452, %v931
  %v1055 = vmax.f32 %v457, %v936
  %v1056 = vmax.f32 %v460, %v939
  %v1057 = vmax.f32 %v465, %v944
  %v1058 = vmax.f32 %v468, %v947
  %v1059 = vmax.f32 %v473, %v952
  %v1060 = vmax.f32 %v476, %v955
  %v1061 = vmax.f32 %v481, %v960
  %v1062 = vmax.f32 %v484, %v963
  %v1063 = vmax.f32 %v489, %v968
  %v1064 = vmax.f32 %v492, %v971
  %v1065 = vmax.f32 %v497, %v976
  %v1066 = vmax.f32 %v500, %v979
  %v1067 = vmax.f32 %v505, %v984
  %v1068 = vmax.f32 %v508, %v987
  %v1069 = vmax.f32 %v513, %v992
  %v1070 = vmax.f32 %v516, %v995
  %v1071 = vmax.f32 %v521, %v1000
  %v1072 = vmax.f32 %v524, %v1003
  %v1073 = vmax.f32 %v529, %v1008
  %v1074 = vmax.f32 %v532, %v1011
  %v1075 = vmax.f32 %v537, %v1016
  %v1076 = vmax.f32 %v540, %v1019
  %v1077 = vmax.f32 %v545, %v1024
  %v1078 = vld [vmem:[%s2] sm:$0xf]
  %v1079 = vld [vmem:[%s2 + $0x4] sm:$0xf]
  %v1080 = vld [vmem:[%s2 + $0x8] sm:$0xf]
  %v1081 = vld [vmem:[%s2 + $0xc] sm:$0xf]
  %v1082 = vld [vmem:[%s2 + $0x10] sm:$0xf]
  %v1083 = vld [vmem:[%s2 + $0x14] sm:$0xf]
  %v1084 = vld [vmem:[%s2 + $0x18] sm:$0xf]
  %v1085 = vld [vmem:[%s2 + $0x1c] sm:$0xf]
  %v1086 = vld [vmem:[%s2 + $0x20] sm:$0xf]
  %v1087 = vld [vmem:[%s2 + $0x24] sm:$0xf]
  %v1088 = vld [vmem:[%s2 + $0x28] sm:$0xf]
  %v1089 = vld [vmem:[%s2 + $0x2c] sm:$0xf]
  %v1090 = vld [vmem:[%s2 + $0x30] sm:$0xf]
  %v1091 = vld [vmem:[%s2 + $0x34] sm:$0xf]
  %v1092 = vld [vmem:[%s2 + $0x38] sm:$0xf]
  %v1093 = vld [vmem:[%s2 + $0x3c] sm:$0xf]
  %v1094 = vld [vmem:[%s2 + $0x40] sm:$0xf]
  %v1095 = vld [vmem:[%s2 + $0x44] sm:$0xf]
  %v1096 = vld [vmem:[%s2 + $0x48] sm:$0xf]
  %v1097 = vld [vmem:[%s2 + $0x4c] sm:$0xf]
  %v1098 = vld [vmem:[%s2 + $0x50] sm:$0xf]
  %v1099 = vld [vmem:[%s2 + $0x54] sm:$0xf]
  %v1100 = vld [vmem:[%s2 + $0x58] sm:$0xf]
  %v1101 = vld [vmem:[%s2 + $0x5c] sm:$0xf]
  %v1102 = vld [vmem:[%s2 + $0x60] sm:$0xf]
  %v1103 = vld [vmem:[%s2 + $0x64] sm:$0xf]
  %v1104 = vld [vmem:[%s2 + $0x68] sm:$0xf]
  %v1105 = vld [vmem:[%s2 + $0x6c] sm:$0xf]
  %v1106 = vld [vmem:[%s2 + $0x70] sm:$0xf]
  %v1107 = vld [vmem:[%s2 + $0x74] sm:$0xf]
  %v1108 = vld [vmem:[%s2 + $0x78] sm:$0xf]
  %v1109 = vld [vmem:[%s2 + $0x7c] sm:$0xf]
  %v1110 = vld [vmem:[%s2 + $0x80] sm:$0xf]
  %v1111 = vld [vmem:[%s2 + $0x84] sm:$0xf]
  %v1112 = vld [vmem:[%s2 + $0x88] sm:$0xf]
  %v1113 = vld [vmem:[%s2 + $0x8c] sm:$0xf]
  %v1114 = vld [vmem:[%s2 + $0x90] sm:$0xf]
  %v1115 = vld [vmem:[%s2 + $0x94] sm:$0xf]
  %v1116 = vld [vmem:[%s2 + $0x98] sm:$0xf]
  %v1117 = vld [vmem:[%s2 + $0x9c] sm:$0xf]
  %v1118 = vld [vmem:[%s2 + $0xa0] sm:$0xf]
  %v1119 = vld [vmem:[%s2 + $0xa4] sm:$0xf]
  %v1120 = vld [vmem:[%s2 + $0xa8] sm:$0xf]
  %v1121 = vld [vmem:[%s2 + $0xac] sm:$0xf]
  %v1122 = vld [vmem:[%s2 + $0xb0] sm:$0xf]
  %v1123 = vld [vmem:[%s2 + $0xb4] sm:$0xf]
  %v1124 = vld [vmem:[%s2 + $0xb8] sm:$0xf]
  %v1125 = vld [vmem:[%s2 + $0xbc] sm:$0xf]
  %v1126 = vld [vmem:[%s2 + $0xc0] sm:$0xf]
  %v1176 = vunpack.c.l.b16 %v1078
  %v1177 = vunpack.c.l.b16 %v1079
  %v1178 = vunpack.c.l.b16 %v1080
  %v1179 = vunpack.c.l.b16 %v1081
  %v1180 = vunpack.c.l.b16 %v1082
  %v1181 = vunpack.c.l.b16 %v1083
  %v1182 = vunpack.c.l.b16 %v1084
  %v1183 = vunpack.c.l.b16 %v1085
  %v1184 = vunpack.c.l.b16 %v1086
  %v1185 = vunpack.c.l.b16 %v1087
  %v1186 = vunpack.c.l.b16 %v1088
  %v1187 = vunpack.c.l.b16 %v1089
  %v1188 = vunpack.c.l.b16 %v1090
  %v1189 = vunpack.c.l.b16 %v1091
  %v1190 = vunpack.c.l.b16 %v1092
  %v1191 = vunpack.c.l.b16 %v1093
  %v1192 = vunpack.c.l.b16 %v1094
  %v1193 = vunpack.c.l.b16 %v1095
  %v1194 = vunpack.c.l.b16 %v1096
  %v1195 = vunpack.c.l.b16 %v1097
  %v1196 = vunpack.c.l.b16 %v1098
  %v1197 = vunpack.c.l.b16 %v1099
  %v1198 = vunpack.c.l.b16 %v1100
  %v1199 = vunpack.c.l.b16 %v1101
  %v1200 = vunpack.c.l.b16 %v1102
  %v1201 = vunpack.c.l.b16 %v1103
  %v1202 = vunpack.c.l.b16 %v1104
  %v1203 = vunpack.c.l.b16 %v1105
  %v1204 = vunpack.c.l.b16 %v1106
  %v1205 = vunpack.c.l.b16 %v1107
  %v1206 = vunpack.c.l.b16 %v1108
  %v1207 = vunpack.c.l.b16 %v1109
  %v1208 = vunpack.c.l.b16 %v1110
  %v1209 = vunpack.c.l.b16 %v1111
  %v1210 = vunpack.c.l.b16 %v1112
  %v1211 = vunpack.c.l.b16 %v1113
  %v1212 = vunpack.c.l.b16 %v1114
  %v1213 = vunpack.c.l.b16 %v1115
  %v1214 = vunpack.c.l.b16 %v1116
  %v1215 = vunpack.c.l.b16 %v1117
  %v1216 = vunpack.c.l.b16 %v1118
  %v1217 = vunpack.c.l.b16 %v1119
  %v1218 = vunpack.c.l.b16 %v1120
  %v1219 = vunpack.c.l.b16 %v1121
  %v1220 = vunpack.c.l.b16 %v1122
  %v1221 = vunpack.c.l.b16 %v1123
  %v1222 = vunpack.c.l.b16 %v1124
  %v1223 = vunpack.c.l.b16 %v1125
  %v1224 = vunpack.c.l.b16 %v1126
  %v1225 = vpack.c.b16 %v1177, %v1176
  %v1226 = vpack.c.b16 %v1179, %v1178
  %v1227 = vpack.c.b16 %v1181, %v1180
  %v1228 = vpack.c.b16 %v1183, %v1182
  %v1229 = vpack.c.b16 %v1185, %v1184
  %v1230 = vpack.c.b16 %v1187, %v1186
  %v1231 = vpack.c.b16 %v1189, %v1188
  %v1232 = vpack.c.b16 %v1191, %v1190
  %v1233 = vpack.c.b16 %v1193, %v1192
  %v1234 = vpack.c.b16 %v1195, %v1194
  %v1235 = vpack.c.b16 %v1197, %v1196
  %v1236 = vpack.c.b16 %v1199, %v1198
  %v1237 = vpack.c.b16 %v1201, %v1200
  %v1238 = vpack.c.b16 %v1203, %v1202
  %v1239 = vpack.c.b16 %v1205, %v1204
  %v1240 = vpack.c.b16 %v1207, %v1206
  %v1241 = vpack.c.b16 %v1209, %v1208
  %v1242 = vpack.c.b16 %v1211, %v1210
  %v1243 = vpack.c.b16 %v1213, %v1212
  %v1244 = vpack.c.b16 %v1215, %v1214
  %v1245 = vpack.c.b16 %v1217, %v1216
  %v1246 = vpack.c.b16 %v1219, %v1218
  %v1247 = vpack.c.b16 %v1221, %v1220
  %v1248 = vpack.c.b16 %v1223, %v1222
  %v1249 = vpack.c.b16 %v1224, %v1224
  %v1251 = vsel %vm235, %v1225, 0
  %v1254 = vsel %vm235, %v1226, 0
  %v1257 = vsel %vm235, %v1227, 0
  %v1260 = vsel %vm235, %v1228, 0
  %v1263 = vsel %vm235, %v1229, 0
  %v1266 = vsel %vm235, %v1230, 0
  %v1269 = vsel %vm235, %v1231, 0
  %v1272 = vsel %vm235, %v1232, 0
  %v1275 = vsel %vm235, %v1233, 0
  %v1278 = vsel %vm235, %v1234, 0
  %v1281 = vsel %vm235, %v1235, 0
  %v1284 = vsel %vm235, %v1236, 0
  %v1287 = vsel %vm235, %v1237, 0
  %v1290 = vsel %vm235, %v1238, 0
  %v1293 = vsel %vm235, %v1239, 0
  %v1296 = vsel %vm235, %v1240, 0
  %v1299 = vsel %vm235, %v1241, 0
  %v1302 = vsel %vm235, %v1242, 0
  %v1305 = vsel %vm235, %v1243, 0
  %v1308 = vsel %vm235, %v1244, 0
  %v1311 = vsel %vm235, %v1245, 0
  %v1314 = vsel %vm235, %v1246, 0
  %v1317 = vsel %vm235, %v1247, 0
  %v1320 = vsel %vm235, %v1248, 0
  %v1323 = vsel %vm235, %v1249, 0
  %1325 = vmatprep.subr.bf16.mxu0 0
  %1326 = vmatpush1.bf16.msra.mxu0 0
  %1327 = vmatprep.subr.bf16.mxu0 0
  %1328 = vmatpush1.bf16.msra.mxu0 0
  %1329 = vmatprep.subr.bf16.mxu0 0
  %1330 = vmatpush1.bf16.msra.mxu0 0
  %1331 = vmatprep.subr.bf16.mxu0 0
  %1332 = vmatpush1.bf16.msra.mxu0 %v316
  %1333 = vmatprep.subr.bf16.mxu0 0
  %1334 = vmatpush1.bf16.msra.mxu0 %v229
  %1335 = vmatprep.subr.bf16.mxu0 0
  %1336 = vmatpush1.bf16.msra.mxu0 %v228
  %1337 = vmatprep.subr.bf16.mxu0 0
  %1338 = vmatpush1.bf16.msra.mxu0 %v227
  %1339 = vmatprep.subr.bf16.mxu0 0
  %1340 = vmatpush1.bf16.msra.mxu0 %v226
  %1341 = vmatprep.subr.bf16.mxu0 0
  %1342 = vmatpush2.bf16.msra.mxu0 0
  %1343 = vmatprep.subr.bf16.mxu0 0
  %1344 = vmatpush2.bf16.msra.mxu0 0
  %1345 = vmatprep.subr.bf16.mxu0 0
  %1346 = vmatpush2.bf16.msra.mxu0 0
  %1347 = vmatprep.subr.bf16.mxu0 0
  %1348 = vmatpush2.bf16.msra.mxu0 0
  %1349 = vmatprep.subr.bf16.mxu0 0
  %1350 = vmatpush2.bf16.msra.mxu0 0
  %1351 = vmatprep.subr.bf16.mxu0 0
  %1352 = vmatpush2.bf16.msra.mxu0 0
  %1353 = vmatprep.subr.bf16.mxu0 0
  %1354 = vmatpush2.bf16.msra.mxu0 0
  %1355 = vmatprep.subr.bf16.mxu0 0
  %1356 = vmatpush2.bf16.msra.mxu0 0
  %1357 = vmatprep.mubr.bf16.mxu0 0
  %1358 = vmatmul.mubr.bf16.gmra.mxu0 %v1251
  %v1359 = vpop.f32.mrf.mxu0
  %v1360 = vadd.f32 0.0, %v1359
  %v1361 = vpop.f32.mrf.mxu0
  %v1362 = vpop.f32.mrf.mxu0
  %v1363 = vadd.f32 0.0, %v1362
  %v1364 = vpop.f32.mrf.mxu0
  %1365 = vmatprep.mubr.bf16.mxu0 0
  %1366 = vmatmul.mubr.bf16.gmra.mxu0 %v1254
  %v1367 = vpop.f32.mrf.mxu0
  %v1368 = vadd.f32 0.0, %v1367
  %v1369 = vpop.f32.mrf.mxu0
  %v1370 = vpop.f32.mrf.mxu0
  %v1371 = vadd.f32 0.0, %v1370
  %v1372 = vpop.f32.mrf.mxu0
  %1373 = vmatprep.mubr.bf16.mxu0 0
  %1374 = vmatmul.mubr.bf16.gmra.mxu0 %v1257
  %v1375 = vpop.f32.mrf.mxu0
  %v1376 = vadd.f32 0.0, %v1375
  %v1377 = vpop.f32.mrf.mxu0
  %v1378 = vpop.f32.mrf.mxu0
  %v1379 = vadd.f32 0.0, %v1378
  %v1380 = vpop.f32.mrf.mxu0
  %1381 = vmatprep.mubr.bf16.mxu0 0
  %1382 = vmatmul.mubr.bf16.gmra.mxu0 %v1260
  %v1383 = vpop.f32.mrf.mxu0
  %v1384 = vadd.f32 0.0, %v1383
  %v1385 = vpop.f32.mrf.mxu0
  %v1386 = vpop.f32.mrf.mxu0
  %v1387 = vadd.f32 0.0, %v1386
  %v1388 = vpop.f32.mrf.mxu0
  %1389 = vmatprep.mubr.bf16.mxu0 0
  %1390 = vmatmul.mubr.bf16.gmra.mxu0 %v1263
  %v1391 = vpop.f32.mrf.mxu0
  %v1392 = vadd.f32 0.0, %v1391
  %v1393 = vpop.f32.mrf.mxu0
  %v1394 = vpop.f32.mrf.mxu0
  %v1395 = vadd.f32 0.0, %v1394
  %v1396 = vpop.f32.mrf.mxu0
  %1397 = vmatprep.mubr.bf16.mxu0 0
  %1398 = vmatmul.mubr.bf16.gmra.mxu0 %v1266
  %v1399 = vpop.f32.mrf.mxu0
  %v1400 = vadd.f32 0.0, %v1399
  %v1401 = vpop.f32.mrf.mxu0
  %v1402 = vpop.f32.mrf.mxu0
  %v1403 = vadd.f32 0.0, %v1402
  %v1404 = vpop.f32.mrf.mxu0
  %1405 = vmatprep.mubr.bf16.mxu0 0
  %1406 = vmatmul.mubr.bf16.gmra.mxu0 %v1269
  %v1407 = vpop.f32.mrf.mxu0
  %v1408 = vadd.f32 0.0, %v1407
  %v1409 = vpop.f32.mrf.mxu0
  %v1410 = vpop.f32.mrf.mxu0
  %v1411 = vadd.f32 0.0, %v1410
  %v1412 = vpop.f32.mrf.mxu0
  %1413 = vmatprep.mubr.bf16.mxu0 0
  %1414 = vmatmul.mubr.bf16.gmra.mxu0 %v1272
  %v1415 = vpop.f32.mrf.mxu0
  %v1416 = vadd.f32 0.0, %v1415
  %v1417 = vpop.f32.mrf.mxu0
  %v1418 = vpop.f32.mrf.mxu0
  %v1419 = vadd.f32 0.0, %v1418
  %v1420 = vpop.f32.mrf.mxu0
  %1421 = vmatprep.mubr.bf16.mxu0 0
  %1422 = vmatmul.mubr.bf16.gmra.mxu0 %v1275
  %v1423 = vpop.f32.mrf.mxu0
  %v1424 = vadd.f32 0.0, %v1423
  %v1425 = vpop.f32.mrf.mxu0
  %v1426 = vpop.f32.mrf.mxu0
  %v1427 = vadd.f32 0.0, %v1426
  %v1428 = vpop.f32.mrf.mxu0
  %1429 = vmatprep.mubr.bf16.mxu0 0
  %1430 = vmatmul.mubr.bf16.gmra.mxu0 %v1278
  %v1431 = vpop.f32.mrf.mxu0
  %v1432 = vadd.f32 0.0, %v1431
  %v1433 = vpop.f32.mrf.mxu0
  %v1434 = vpop.f32.mrf.mxu0
  %v1435 = vadd.f32 0.0, %v1434
  %v1436 = vpop.f32.mrf.mxu0
  %1437 = vmatprep.mubr.bf16.mxu0 0
  %1438 = vmatmul.mubr.bf16.gmra.mxu0 %v1281
  %v1439 = vpop.f32.mrf.mxu0
  %v1440 = vadd.f32 0.0, %v1439
  %v1441 = vpop.f32.mrf.mxu0
  %v1442 = vpop.f32.mrf.mxu0
  %v1443 = vadd.f32 0.0, %v1442
  %v1444 = vpop.f32.mrf.mxu0
  %1445 = vmatprep.mubr.bf16.mxu0 0
  %1446 = vmatmul.mubr.bf16.gmra.mxu0 %v1284
  %v1447 = vpop.f32.mrf.mxu0
  %v1448 = vadd.f32 0.0, %v1447
  %v1449 = vpop.f32.mrf.mxu0
  %v1450 = vpop.f32.mrf.mxu0
  %v1451 = vadd.f32 0.0, %v1450
  %v1452 = vpop.f32.mrf.mxu0
  %1453 = vmatprep.mubr.bf16.mxu0 0
  %1454 = vmatmul.mubr.bf16.gmra.mxu0 %v1287
  %v1455 = vpop.f32.mrf.mxu0
  %v1456 = vadd.f32 0.0, %v1455
  %v1457 = vpop.f32.mrf.mxu0
  %v1458 = vpop.f32.mrf.mxu0
  %v1459 = vadd.f32 0.0, %v1458
  %v1460 = vpop.f32.mrf.mxu0
  %1461 = vmatprep.mubr.bf16.mxu0 0
  %1462 = vmatmul.mubr.bf16.gmra.mxu0 %v1290
  %v1463 = vpop.f32.mrf.mxu0
  %v1464 = vadd.f32 0.0, %v1463
  %v1465 = vpop.f32.mrf.mxu0
  %v1466 = vpop.f32.mrf.mxu0
  %v1467 = vadd.f32 0.0, %v1466
  %v1468 = vpop.f32.mrf.mxu0
  %1469 = vmatprep.mubr.bf16.mxu0 0
  %1470 = vmatmul.mubr.bf16.gmra.mxu0 %v1293
  %v1471 = vpop.f32.mrf.mxu0
  %v1472 = vadd.f32 0.0, %v1471
  %v1473 = vpop.f32.mrf.mxu0
  %v1474 = vpop.f32.mrf.mxu0
  %v1475 = vadd.f32 0.0, %v1474
  %v1476 = vpop.f32.mrf.mxu0
  %1477 = vmatprep.mubr.bf16.mxu0 0
  %1478 = vmatmul.mubr.bf16.gmra.mxu0 %v1296
  %v1479 = vpop.f32.mrf.mxu0
  %v1480 = vadd.f32 0.0, %v1479
  %v1481 = vpop.f32.mrf.mxu0
  %v1482 = vpop.f32.mrf.mxu0
  %v1483 = vadd.f32 0.0, %v1482
  %v1484 = vpop.f32.mrf.mxu0
  %1485 = vmatprep.mubr.bf16.mxu0 0
  %1486 = vmatmul.mubr.bf16.gmra.mxu0 %v1299
  %v1487 = vpop.f32.mrf.mxu0
  %v1488 = vadd.f32 0.0, %v1487
  %v1489 = vpop.f32.mrf.mxu0
  %v1490 = vpop.f32.mrf.mxu0
  %v1491 = vadd.f32 0.0, %v1490
  %v1492 = vpop.f32.mrf.mxu0
  %1493 = vmatprep.mubr.bf16.mxu0 0
  %1494 = vmatmul.mubr.bf16.gmra.mxu0 %v1302
  %v1495 = vpop.f32.mrf.mxu0
  %v1496 = vadd.f32 0.0, %v1495
  %v1497 = vpop.f32.mrf.mxu0
  %v1498 = vpop.f32.mrf.mxu0
  %v1499 = vadd.f32 0.0, %v1498
  %v1500 = vpop.f32.mrf.mxu0
  %1501 = vmatprep.mubr.bf16.mxu0 0
  %1502 = vmatmul.mubr.bf16.gmra.mxu0 %v1305
  %v1503 = vpop.f32.mrf.mxu0
  %v1504 = vadd.f32 0.0, %v1503
  %v1505 = vpop.f32.mrf.mxu0
  %v1506 = vpop.f32.mrf.mxu0
  %v1507 = vadd.f32 0.0, %v1506
  %v1508 = vpop.f32.mrf.mxu0
  %1509 = vmatprep.mubr.bf16.mxu0 0
  %1510 = vmatmul.mubr.bf16.gmra.mxu0 %v1308
  %v1511 = vpop.f32.mrf.mxu0
  %v1512 = vadd.f32 0.0, %v1511
  %v1513 = vpop.f32.mrf.mxu0
  %v1514 = vpop.f32.mrf.mxu0
  %v1515 = vadd.f32 0.0, %v1514
  %v1516 = vpop.f32.mrf.mxu0
  %1517 = vmatprep.mubr.bf16.mxu0 0
  %1518 = vmatmul.mubr.bf16.gmra.mxu0 %v1311
  %v1519 = vpop.f32.mrf.mxu0
  %v1520 = vadd.f32 0.0, %v1519
  %v1521 = vpop.f32.mrf.mxu0
  %v1522 = vpop.f32.mrf.mxu0
  %v1523 = vadd.f32 0.0, %v1522
  %v1524 = vpop.f32.mrf.mxu0
  %1525 = vmatprep.mubr.bf16.mxu0 0
  %1526 = vmatmul.mubr.bf16.gmra.mxu0 %v1314
  %v1527 = vpop.f32.mrf.mxu0
  %v1528 = vadd.f32 0.0, %v1527
  %v1529 = vpop.f32.mrf.mxu0
  %v1530 = vpop.f32.mrf.mxu0
  %v1531 = vadd.f32 0.0, %v1530
  %v1532 = vpop.f32.mrf.mxu0
  %1533 = vmatprep.mubr.bf16.mxu0 0
  %1534 = vmatmul.mubr.bf16.gmra.mxu0 %v1317
  %v1535 = vpop.f32.mrf.mxu0
  %v1536 = vadd.f32 0.0, %v1535
  %v1537 = vpop.f32.mrf.mxu0
  %v1538 = vpop.f32.mrf.mxu0
  %v1539 = vadd.f32 0.0, %v1538
  %v1540 = vpop.f32.mrf.mxu0
  %1541 = vmatprep.mubr.bf16.mxu0 0
  %1542 = vmatmul.mubr.bf16.gmra.mxu0 %v1320
  %v1543 = vpop.f32.mrf.mxu0
  %v1544 = vadd.f32 0.0, %v1543
  %v1545 = vpop.f32.mrf.mxu0
  %v1546 = vpop.f32.mrf.mxu0
  %v1547 = vadd.f32 0.0, %v1546
  %v1548 = vpop.f32.mrf.mxu0
  %1549 = vmatprep.mubr.bf16.mxu0 0
  %1550 = vmatmul.mubr.bf16.gmra.mxu0 %v1323
  %v1551 = vpop.f32.mrf.mxu0
  %v1552 = vadd.f32 0.0, %v1551
  %v1553 = vpop.f32.mrf.mxu0
  %v1554 = vpop.f32.mrf.mxu0
  %v1555 = vpop.f32.mrf.mxu0
  %1556 = vdwg.mxu0
  %v1557 = vmax.f32 %v1029, %v1360
  %v1558 = vmax.f32 %v1030, %v1363
  %v1559 = vmax.f32 %v1031, %v1368
  %v1560 = vmax.f32 %v1032, %v1371
  %v1561 = vmax.f32 %v1033, %v1376
  %v1562 = vmax.f32 %v1034, %v1379
  %v1563 = vmax.f32 %v1035, %v1384
  %v1564 = vmax.f32 %v1036, %v1387
  %v1565 = vmax.f32 %v1037, %v1392
  %v1566 = vmax.f32 %v1038, %v1395
  %v1567 = vmax.f32 %v1039, %v1400
  %v1568 = vmax.f32 %v1040, %v1403
  %v1569 = vmax.f32 %v1041, %v1408
  %v1570 = vmax.f32 %v1042, %v1411
  %v1571 = vmax.f32 %v1043, %v1416
  %v1572 = vmax.f32 %v1044, %v1419
  %v1573 = vmax.f32 %v1045, %v1424
  %v1574 = vmax.f32 %v1046, %v1427
  %v1575 = vmax.f32 %v1047, %v1432
  %v1576 = vmax.f32 %v1048, %v1435
  %v1577 = vmax.f32 %v1049, %v1440
  %v1578 = vmax.f32 %v1050, %v1443
  %v1579 = vmax.f32 %v1051, %v1448
  %v1580 = vmax.f32 %v1052, %v1451
  %v1581 = vmax.f32 %v1053, %v1456
  %v1582 = vmax.f32 %v1054, %v1459
  %v1583 = vmax.f32 %v1055, %v1464
  %v1584 = vmax.f32 %v1056, %v1467
  %v1585 = vmax.f32 %v1057, %v1472
  %v1586 = vmax.f32 %v1058, %v1475
  %v1587 = vmax.f32 %v1059, %v1480
  %v1588 = vmax.f32 %v1060, %v1483
  %v1589 = vmax.f32 %v1061, %v1488
  %v1590 = vmax.f32 %v1062, %v1491
  %v1591 = vmax.f32 %v1063, %v1496
  %v1592 = vmax.f32 %v1064, %v1499
  %v1593 = vmax.f32 %v1065, %v1504
  %v1594 = vmax.f32 %v1066, %v1507
  %v1595 = vmax.f32 %v1067, %v1512
  %v1596 = vmax.f32 %v1068, %v1515
  %v1597 = vmax.f32 %v1069, %v1520
  %v1598 = vmax.f32 %v1070, %v1523
  %v1599 = vmax.f32 %v1071, %v1528
  %v1600 = vmax.f32 %v1072, %v1531
  %v1601 = vmax.f32 %v1073, %v1536
  %v1602 = vmax.f32 %v1074, %v1539
  %v1603 = vmax.f32 %v1075, %v1544
  %v1604 = vmax.f32 %v1076, %v1547
  %v1605 = vmax.f32 %v1077, %v1552
  %v1606 = vld [vmem:[%s3] sm:$0xf]
  %v1607 = vld [vmem:[%s3 + $0x4] sm:$0xf]
  %v1608 = vld [vmem:[%s3 + $0x8] sm:$0xf]
  %v1609 = vld [vmem:[%s3 + $0xc] sm:$0xf]
  %v1610 = vld [vmem:[%s3 + $0x10] sm:$0xf]
  %v1611 = vld [vmem:[%s3 + $0x14] sm:$0xf]
  %v1612 = vld [vmem:[%s3 + $0x18] sm:$0xf]
  %v1613 = vld [vmem:[%s3 + $0x1c] sm:$0xf]
  %v1614 = vld [vmem:[%s3 + $0x20] sm:$0xf]
  %v1615 = vld [vmem:[%s3 + $0x24] sm:$0xf]
  %v1616 = vld [vmem:[%s3 + $0x28] sm:$0xf]
  %v1617 = vld [vmem:[%s3 + $0x2c] sm:$0xf]
  %v1618 = vld [vmem:[%s3 + $0x30] sm:$0xf]
  %v1619 = vld [vmem:[%s3 + $0x34] sm:$0xf]
  %v1620 = vld [vmem:[%s3 + $0x38] sm:$0xf]
  %v1621 = vld [vmem:[%s3 + $0x3c] sm:$0xf]
  %v1622 = vld [vmem:[%s3 + $0x40] sm:$0xf]
  %v1623 = vld [vmem:[%s3 + $0x44] sm:$0xf]
  %v1624 = vld [vmem:[%s3 + $0x48] sm:$0xf]
  %v1625 = vld [vmem:[%s3 + $0x4c] sm:$0xf]
  %v1626 = vld [vmem:[%s3 + $0x50] sm:$0xf]
  %v1627 = vld [vmem:[%s3 + $0x54] sm:$0xf]
  %v1628 = vld [vmem:[%s3 + $0x58] sm:$0xf]
  %v1629 = vld [vmem:[%s3 + $0x5c] sm:$0xf]
  %v1630 = vld [vmem:[%s3 + $0x60] sm:$0xf]
  %v1631 = vld [vmem:[%s3 + $0x64] sm:$0xf]
  %v1632 = vld [vmem:[%s3 + $0x68] sm:$0xf]
  %v1633 = vld [vmem:[%s3 + $0x6c] sm:$0xf]
  %v1634 = vld [vmem:[%s3 + $0x70] sm:$0xf]
  %v1635 = vld [vmem:[%s3 + $0x74] sm:$0xf]
  %v1636 = vld [vmem:[%s3 + $0x78] sm:$0xf]
  %v1637 = vld [vmem:[%s3 + $0x7c] sm:$0xf]
  %v1638 = vld [vmem:[%s3 + $0x80] sm:$0xf]
  %v1639 = vld [vmem:[%s3 + $0x84] sm:$0xf]
  %v1640 = vld [vmem:[%s3 + $0x88] sm:$0xf]
  %v1641 = vld [vmem:[%s3 + $0x8c] sm:$0xf]
  %v1642 = vld [vmem:[%s3 + $0x90] sm:$0xf]
  %v1643 = vld [vmem:[%s3 + $0x94] sm:$0xf]
  %v1644 = vld [vmem:[%s3 + $0x98] sm:$0xf]
  %v1645 = vld [vmem:[%s3 + $0x9c] sm:$0xf]
  %v1646 = vld [vmem:[%s3 + $0xa0] sm:$0xf]
  %v1647 = vld [vmem:[%s3 + $0xa4] sm:$0xf]
  %v1648 = vld [vmem:[%s3 + $0xa8] sm:$0xf]
  %v1649 = vld [vmem:[%s3 + $0xac] sm:$0xf]
  %v1650 = vld [vmem:[%s3 + $0xb0] sm:$0xf]
  %v1651 = vld [vmem:[%s3 + $0xb4] sm:$0xf]
  %v1652 = vld [vmem:[%s3 + $0xb8] sm:$0xf]
  %v1653 = vld [vmem:[%s3 + $0xbc] sm:$0xf]
  %v1654 = vld [vmem:[%s3 + $0xc0] sm:$0xf]
  %v1704 = vunpack.c.l.b16 %v1606
  %v1705 = vunpack.c.l.b16 %v1607
  %v1706 = vunpack.c.l.b16 %v1608
  %v1707 = vunpack.c.l.b16 %v1609
  %v1708 = vunpack.c.l.b16 %v1610
  %v1709 = vunpack.c.l.b16 %v1611
  %v1710 = vunpack.c.l.b16 %v1612
  %v1711 = vunpack.c.l.b16 %v1613
  %v1712 = vunpack.c.l.b16 %v1614
  %v1713 = vunpack.c.l.b16 %v1615
  %v1714 = vunpack.c.l.b16 %v1616
  %v1715 = vunpack.c.l.b16 %v1617
  %v1716 = vunpack.c.l.b16 %v1618
  %v1717 = vunpack.c.l.b16 %v1619
  %v1718 = vunpack.c.l.b16 %v1620
  %v1719 = vunpack.c.l.b16 %v1621
  %v1720 = vunpack.c.l.b16 %v1622
  %v1721 = vunpack.c.l.b16 %v1623
  %v1722 = vunpack.c.l.b16 %v1624
  %v1723 = vunpack.c.l.b16 %v1625
  %v1724 = vunpack.c.l.b16 %v1626
  %v1725 = vunpack.c.l.b16 %v1627
  %v1726 = vunpack.c.l.b16 %v1628
  %v1727 = vunpack.c.l.b16 %v1629
  %v1728 = vunpack.c.l.b16 %v1630
  %v1729 = vunpack.c.l.b16 %v1631
  %v1730 = vunpack.c.l.b16 %v1632
  %v1731 = vunpack.c.l.b16 %v1633
  %v1732 = vunpack.c.l.b16 %v1634
  %v1733 = vunpack.c.l.b16 %v1635
  %v1734 = vunpack.c.l.b16 %v1636
  %v1735 = vunpack.c.l.b16 %v1637
  %v1736 = vunpack.c.l.b16 %v1638
  %v1737 = vunpack.c.l.b16 %v1639
  %v1738 = vunpack.c.l.b16 %v1640
  %v1739 = vunpack.c.l.b16 %v1641
  %v1740 = vunpack.c.l.b16 %v1642
  %v1741 = vunpack.c.l.b16 %v1643
  %v1742 = vunpack.c.l.b16 %v1644
  %v1743 = vunpack.c.l.b16 %v1645
  %v1744 = vunpack.c.l.b16 %v1646
  %v1745 = vunpack.c.l.b16 %v1647
  %v1746 = vunpack.c.l.b16 %v1648
  %v1747 = vunpack.c.l.b16 %v1649
  %v1748 = vunpack.c.l.b16 %v1650
  %v1749 = vunpack.c.l.b16 %v1651
  %v1750 = vunpack.c.l.b16 %v1652
  %v1751 = vunpack.c.l.b16 %v1653
  %v1752 = vunpack.c.l.b16 %v1654
  %v1753 = vpack.c.b16 %v1705, %v1704
  %v1754 = vpack.c.b16 %v1707, %v1706
  %v1755 = vpack.c.b16 %v1709, %v1708
  %v1756 = vpack.c.b16 %v1711, %v1710
  %v1757 = vpack.c.b16 %v1713, %v1712
  %v1758 = vpack.c.b16 %v1715, %v1714
  %v1759 = vpack.c.b16 %v1717, %v1716
  %v1760 = vpack.c.b16 %v1719, %v1718
  %v1761 = vpack.c.b16 %v1721, %v1720
  %v1762 = vpack.c.b16 %v1723, %v1722
  %v1763 = vpack.c.b16 %v1725, %v1724
  %v1764 = vpack.c.b16 %v1727, %v1726
  %v1765 = vpack.c.b16 %v1729, %v1728
  %v1766 = vpack.c.b16 %v1731, %v1730
  %v1767 = vpack.c.b16 %v1733, %v1732
  %v1768 = vpack.c.b16 %v1735, %v1734
  %v1769 = vpack.c.b16 %v1737, %v1736
  %v1770 = vpack.c.b16 %v1739, %v1738
  %v1771 = vpack.c.b16 %v1741, %v1740
  %v1772 = vpack.c.b16 %v1743, %v1742
  %v1773 = vpack.c.b16 %v1745, %v1744
  %v1774 = vpack.c.b16 %v1747, %v1746
  %v1775 = vpack.c.b16 %v1749, %v1748
  %v1776 = vpack.c.b16 %v1751, %v1750
  %v1777 = vpack.c.b16 %v1752, %v1752
  %v1779 = vsel %vm235, %v1753, 0
  %v1782 = vsel %vm235, %v1754, 0
  %v1785 = vsel %vm235, %v1755, 0
  %v1788 = vsel %vm235, %v1756, 0
  %v1791 = vsel %vm235, %v1757, 0
  %v1794 = vsel %vm235, %v1758, 0
  %v1797 = vsel %vm235, %v1759, 0
  %v1800 = vsel %vm235, %v1760, 0
  %v1803 = vsel %vm235, %v1761, 0
  %v1806 = vsel %vm235, %v1762, 0
  %v1809 = vsel %vm235, %v1763, 0
  %v1812 = vsel %vm235, %v1764, 0
  %v1815 = vsel %vm235, %v1765, 0
  %v1818 = vsel %vm235, %v1766, 0
  %v1821 = vsel %vm235, %v1767, 0
  %v1824 = vsel %vm235, %v1768, 0
  %v1827 = vsel %vm235, %v1769, 0
  %v1830 = vsel %vm235, %v1770, 0
  %v1833 = vsel %vm235, %v1771, 0
  %v1836 = vsel %vm235, %v1772, 0
  %v1839 = vsel %vm235, %v1773, 0
  %v1842 = vsel %vm235, %v1774, 0
  %v1845 = vsel %vm235, %v1775, 0
  %v1848 = vsel %vm235, %v1776, 0
  %v1851 = vsel %vm235, %v1777, 0
  %1853 = vmatprep.subr.bf16.mxu0 0
  %1854 = vmatpush1.bf16.msra.mxu0 0
  %1855 = vmatprep.subr.bf16.mxu0 0
  %1856 = vmatpush1.bf16.msra.mxu0 0
  %1857 = vmatprep.subr.bf16.mxu0 0
  %1858 = vmatpush1.bf16.msra.mxu0 0
  %1859 = vmatprep.subr.bf16.mxu0 0
  %1860 = vmatpush1.bf16.msra.mxu0 %v316
  %1861 = vmatprep.subr.bf16.mxu0 0
  %1862 = vmatpush1.bf16.msra.mxu0 %v229
  %1863 = vmatprep.subr.bf16.mxu0 0
  %1864 = vmatpush1.bf16.msra.mxu0 %v228
  %1865 = vmatprep.subr.bf16.mxu0 0
  %1866 = vmatpush1.bf16.msra.mxu0 %v227
  %1867 = vmatprep.subr.bf16.mxu0 0
  %1868 = vmatpush1.bf16.msra.mxu0 %v226
  %1869 = vmatprep.subr.bf16.mxu0 0
  %1870 = vmatpush2.bf16.msra.mxu0 0
  %1871 = vmatprep.subr.bf16.mxu0 0
  %1872 = vmatpush2.bf16.msra.mxu0 0
  %1873 = vmatprep.subr.bf16.mxu0 0
  %1874 = vmatpush2.bf16.msra.mxu0 0
  %1875 = vmatprep.subr.bf16.mxu0 0
  %1876 = vmatpush2.bf16.msra.mxu0 0
  %1877 = vmatprep.subr.bf16.mxu0 0
  %1878 = vmatpush2.bf16.msra.mxu0 0
  %1879 = vmatprep.subr.bf16.mxu0 0
  %1880 = vmatpush2.bf16.msra.mxu0 0
  %1881 = vmatprep.subr.bf16.mxu0 0
  %1882 = vmatpush2.bf16.msra.mxu0 0
  %1883 = vmatprep.subr.bf16.mxu0 0
  %1884 = vmatpush2.bf16.msra.mxu0 0
  %1885 = vmatprep.mubr.bf16.mxu0 0
  %1886 = vmatmul.mubr.bf16.gmra.mxu0 %v1779
  %v1887 = vpop.f32.mrf.mxu0
  %v1888 = vadd.f32 0.0, %v1887
  %v1889 = vpop.f32.mrf.mxu0
  %v1890 = vpop.f32.mrf.mxu0
  %v1891 = vadd.f32 0.0, %v1890
  %v1892 = vpop.f32.mrf.mxu0
  %1893 = vmatprep.mubr.bf16.mxu0 0
  %1894 = vmatmul.mubr.bf16.gmra.mxu0 %v1782
  %v1895 = vpop.f32.mrf.mxu0
  %v1896 = vadd.f32 0.0, %v1895
  %v1897 = vpop.f32.mrf.mxu0
  %v1898 = vpop.f32.mrf.mxu0
  %v1899 = vadd.f32 0.0, %v1898
  %v1900 = vpop.f32.mrf.mxu0
  %1901 = vmatprep.mubr.bf16.mxu0 0
  %1902 = vmatmul.mubr.bf16.gmra.mxu0 %v1785
  %v1903 = vpop.f32.mrf.mxu0
  %v1904 = vadd.f32 0.0, %v1903
  %v1905 = vpop.f32.mrf.mxu0
  %v1906 = vpop.f32.mrf.mxu0
  %v1907 = vadd.f32 0.0, %v1906
  %v1908 = vpop.f32.mrf.mxu0
  %1909 = vmatprep.mubr.bf16.mxu0 0
  %1910 = vmatmul.mubr.bf16.gmra.mxu0 %v1788
  %v1911 = vpop.f32.mrf.mxu0
  %v1912 = vadd.f32 0.0, %v1911
  %v1913 = vpop.f32.mrf.mxu0
  %v1914 = vpop.f32.mrf.mxu0
  %v1915 = vadd.f32 0.0, %v1914
  %v1916 = vpop.f32.mrf.mxu0
  %1917 = vmatprep.mubr.bf16.mxu0 0
  %1918 = vmatmul.mubr.bf16.gmra.mxu0 %v1791
  %v1919 = vpop.f32.mrf.mxu0
  %v1920 = vadd.f32 0.0, %v1919
  %v1921 = vpop.f32.mrf.mxu0
  %v1922 = vpop.f32.mrf.mxu0
  %v1923 = vadd.f32 0.0, %v1922
  %v1924 = vpop.f32.mrf.mxu0
  %1925 = vmatprep.mubr.bf16.mxu0 0
  %1926 = vmatmul.mubr.bf16.gmra.mxu0 %v1794
  %v1927 = vpop.f32.mrf.mxu0
  %v1928 = vadd.f32 0.0, %v1927
  %v1929 = vpop.f32.mrf.mxu0
  %v1930 = vpop.f32.mrf.mxu0
  %v1931 = vadd.f32 0.0, %v1930
  %v1932 = vpop.f32.mrf.mxu0
  %1933 = vmatprep.mubr.bf16.mxu0 0
  %1934 = vmatmul.mubr.bf16.gmra.mxu0 %v1797
  %v1935 = vpop.f32.mrf.mxu0
  %v1936 = vadd.f32 0.0, %v1935
  %v1937 = vpop.f32.mrf.mxu0
  %v1938 = vpop.f32.mrf.mxu0
  %v1939 = vadd.f32 0.0, %v1938
  %v1940 = vpop.f32.mrf.mxu0
  %1941 = vmatprep.mubr.bf16.mxu0 0
  %1942 = vmatmul.mubr.bf16.gmra.mxu0 %v1800
  %v1943 = vpop.f32.mrf.mxu0
  %v1944 = vadd.f32 0.0, %v1943
  %v1945 = vpop.f32.mrf.mxu0
  %v1946 = vpop.f32.mrf.mxu0
  %v1947 = vadd.f32 0.0, %v1946
  %v1948 = vpop.f32.mrf.mxu0
  %1949 = vmatprep.mubr.bf16.mxu0 0
  %1950 = vmatmul.mubr.bf16.gmra.mxu0 %v1803
  %v1951 = vpop.f32.mrf.mxu0
  %v1952 = vadd.f32 0.0, %v1951
  %v1953 = vpop.f32.mrf.mxu0
  %v1954 = vpop.f32.mrf.mxu0
  %v1955 = vadd.f32 0.0, %v1954
  %v1956 = vpop.f32.mrf.mxu0
  %1957 = vmatprep.mubr.bf16.mxu0 0
  %1958 = vmatmul.mubr.bf16.gmra.mxu0 %v1806
  %v1959 = vpop.f32.mrf.mxu0
  %v1960 = vadd.f32 0.0, %v1959
  %v1961 = vpop.f32.mrf.mxu0
  %v1962 = vpop.f32.mrf.mxu0
  %v1963 = vadd.f32 0.0, %v1962
  %v1964 = vpop.f32.mrf.mxu0
  %1965 = vmatprep.mubr.bf16.mxu0 0
  %1966 = vmatmul.mubr.bf16.gmra.mxu0 %v1809
  %v1967 = vpop.f32.mrf.mxu0
  %v1968 = vadd.f32 0.0, %v1967
  %v1969 = vpop.f32.mrf.mxu0
  %v1970 = vpop.f32.mrf.mxu0
  %v1971 = vadd.f32 0.0, %v1970
  %v1972 = vpop.f32.mrf.mxu0
  %1973 = vmatprep.mubr.bf16.mxu0 0
  %1974 = vmatmul.mubr.bf16.gmra.mxu0 %v1812
  %v1975 = vpop.f32.mrf.mxu0
  %v1976 = vadd.f32 0.0, %v1975
  %v1977 = vpop.f32.mrf.mxu0
  %v1978 = vpop.f32.mrf.mxu0
  %v1979 = vadd.f32 0.0, %v1978
  %v1980 = vpop.f32.mrf.mxu0
  %1981 = vmatprep.mubr.bf16.mxu0 0
  %1982 = vmatmul.mubr.bf16.gmra.mxu0 %v1815
  %v1983 = vpop.f32.mrf.mxu0
  %v1984 = vadd.f32 0.0, %v1983
  %v1985 = vpop.f32.mrf.mxu0
  %v1986 = vpop.f32.mrf.mxu0
  %v1987 = vadd.f32 0.0, %v1986
  %v1988 = vpop.f32.mrf.mxu0
  %1989 = vmatprep.mubr.bf16.mxu0 0
  %1990 = vmatmul.mubr.bf16.gmra.mxu0 %v1818
  %v1991 = vpop.f32.mrf.mxu0
  %v1992 = vadd.f32 0.0, %v1991
  %v1993 = vpop.f32.mrf.mxu0
  %v1994 = vpop.f32.mrf.mxu0
  %v1995 = vadd.f32 0.0, %v1994
  %v1996 = vpop.f32.mrf.mxu0
  %1997 = vmatprep.mubr.bf16.mxu0 0
  %1998 = vmatmul.mubr.bf16.gmra.mxu0 %v1821
  %v1999 = vpop.f32.mrf.mxu0
  %v2000 = vadd.f32 0.0, %v1999
  %v2001 = vpop.f32.mrf.mxu0
  %v2002 = vpop.f32.mrf.mxu0
  %v2003 = vadd.f32 0.0, %v2002
  %v2004 = vpop.f32.mrf.mxu0
  %2005 = vmatprep.mubr.bf16.mxu0 0
  %2006 = vmatmul.mubr.bf16.gmra.mxu0 %v1824
  %v2007 = vpop.f32.mrf.mxu0
  %v2008 = vadd.f32 0.0, %v2007
  %v2009 = vpop.f32.mrf.mxu0
  %v2010 = vpop.f32.mrf.mxu0
  %v2011 = vadd.f32 0.0, %v2010
  %v2012 = vpop.f32.mrf.mxu0
  %2013 = vmatprep.mubr.bf16.mxu0 0
  %2014 = vmatmul.mubr.bf16.gmra.mxu0 %v1827
  %v2015 = vpop.f32.mrf.mxu0
  %v2016 = vadd.f32 0.0, %v2015
  %v2017 = vpop.f32.mrf.mxu0
  %v2018 = vpop.f32.mrf.mxu0
  %v2019 = vadd.f32 0.0, %v2018
  %v2020 = vpop.f32.mrf.mxu0
  %2021 = vmatprep.mubr.bf16.mxu0 0
  %2022 = vmatmul.mubr.bf16.gmra.mxu0 %v1830
  %v2023 = vpop.f32.mrf.mxu0
  %v2024 = vadd.f32 0.0, %v2023
  %v2025 = vpop.f32.mrf.mxu0
  %v2026 = vpop.f32.mrf.mxu0
  %v2027 = vadd.f32 0.0, %v2026
  %v2028 = vpop.f32.mrf.mxu0
  %2029 = vmatprep.mubr.bf16.mxu0 0
  %2030 = vmatmul.mubr.bf16.gmra.mxu0 %v1833
  %v2031 = vpop.f32.mrf.mxu0
  %v2032 = vadd.f32 0.0, %v2031
  %v2033 = vpop.f32.mrf.mxu0
  %v2034 = vpop.f32.mrf.mxu0
  %v2035 = vadd.f32 0.0, %v2034
  %v2036 = vpop.f32.mrf.mxu0
  %2037 = vmatprep.mubr.bf16.mxu0 0
  %2038 = vmatmul.mubr.bf16.gmra.mxu0 %v1836
  %v2039 = vpop.f32.mrf.mxu0
  %v2040 = vadd.f32 0.0, %v2039
  %v2041 = vpop.f32.mrf.mxu0
  %v2042 = vpop.f32.mrf.mxu0
  %v2043 = vadd.f32 0.0, %v2042
  %v2044 = vpop.f32.mrf.mxu0
  %2045 = vmatprep.mubr.bf16.mxu0 0
  %2046 = vmatmul.mubr.bf16.gmra.mxu0 %v1839
  %v2047 = vpop.f32.mrf.mxu0
  %v2048 = vadd.f32 0.0, %v2047
  %v2049 = vpop.f32.mrf.mxu0
  %v2050 = vpop.f32.mrf.mxu0
  %v2051 = vadd.f32 0.0, %v2050
  %v2052 = vpop.f32.mrf.mxu0
  %2053 = vmatprep.mubr.bf16.mxu0 0
  %2054 = vmatmul.mubr.bf16.gmra.mxu0 %v1842
  %v2055 = vpop.f32.mrf.mxu0
  %v2056 = vadd.f32 0.0, %v2055
  %v2057 = vpop.f32.mrf.mxu0
  %v2058 = vpop.f32.mrf.mxu0
  %v2059 = vadd.f32 0.0, %v2058
  %v2060 = vpop.f32.mrf.mxu0
  %2061 = vmatprep.mubr.bf16.mxu0 0
  %2062 = vmatmul.mubr.bf16.gmra.mxu0 %v1845
  %v2063 = vpop.f32.mrf.mxu0
  %v2064 = vadd.f32 0.0, %v2063
  %v2065 = vpop.f32.mrf.mxu0
  %v2066 = vpop.f32.mrf.mxu0
  %v2067 = vadd.f32 0.0, %v2066
  %v2068 = vpop.f32.mrf.mxu0
  %2069 = vmatprep.mubr.bf16.mxu0 0
  %2070 = vmatmul.mubr.bf16.gmra.mxu0 %v1848
  %v2071 = vpop.f32.mrf.mxu0
  %v2072 = vadd.f32 0.0, %v2071
  %v2073 = vpop.f32.mrf.mxu0
  %v2074 = vpop.f32.mrf.mxu0
  %v2075 = vadd.f32 0.0, %v2074
  %v2076 = vpop.f32.mrf.mxu0
  %2077 = vmatprep.mubr.bf16.mxu0 0
  %2078 = vmatmul.mubr.bf16.gmra.mxu0 %v1851
  %v2079 = vpop.f32.mrf.mxu0
  %v2080 = vadd.f32 0.0, %v2079
  %v2081 = vpop.f32.mrf.mxu0
  %v2082 = vpop.f32.mrf.mxu0
  %v2083 = vpop.f32.mrf.mxu0
  %2084 = vdwg.mxu0
  %v2085 = vmax.f32 %v1557, %v1888
  %v2086 = vmax.f32 %v1558, %v1891
  %v2087 = vmax.f32 %v1559, %v1896
  %v2088 = vmax.f32 %v1560, %v1899
  %v2089 = vmax.f32 %v1561, %v1904
  %v2090 = vmax.f32 %v1562, %v1907
  %v2091 = vmax.f32 %v1563, %v1912
  %v2092 = vmax.f32 %v1564, %v1915
  %v2093 = vmax.f32 %v1565, %v1920
  %v2094 = vmax.f32 %v1566, %v1923
  %v2095 = vmax.f32 %v1567, %v1928
  %v2096 = vmax.f32 %v1568, %v1931
  %v2097 = vmax.f32 %v1569, %v1936
  %v2098 = vmax.f32 %v1570, %v1939
  %v2099 = vmax.f32 %v1571, %v1944
  %v2100 = vmax.f32 %v1572, %v1947
  %v2101 = vmax.f32 %v1573, %v1952
  %v2102 = vmax.f32 %v1574, %v1955
  %v2103 = vmax.f32 %v1575, %v1960
  %v2104 = vmax.f32 %v1576, %v1963
  %v2105 = vmax.f32 %v1577, %v1968
  %v2106 = vmax.f32 %v1578, %v1971
  %v2107 = vmax.f32 %v1579, %v1976
  %v2108 = vmax.f32 %v1580, %v1979
  %v2109 = vmax.f32 %v1581, %v1984
  %v2110 = vmax.f32 %v1582, %v1987
  %v2111 = vmax.f32 %v1583, %v1992
  %v2112 = vmax.f32 %v1584, %v1995
  %v2113 = vmax.f32 %v1585, %v2000
  %v2114 = vmax.f32 %v1586, %v2003
  %v2115 = vmax.f32 %v1587, %v2008
  %v2116 = vmax.f32 %v1588, %v2011
  %v2117 = vmax.f32 %v1589, %v2016
  %v2118 = vmax.f32 %v1590, %v2019
  %v2119 = vmax.f32 %v1591, %v2024
  %v2120 = vmax.f32 %v1592, %v2027
  %v2121 = vmax.f32 %v1593, %v2032
  %v2122 = vmax.f32 %v1594, %v2035
  %v2123 = vmax.f32 %v1595, %v2040
  %v2124 = vmax.f32 %v1596, %v2043
  %v2125 = vmax.f32 %v1597, %v2048
  %v2126 = vmax.f32 %v1598, %v2051
  %v2127 = vmax.f32 %v1599, %v2056
  %v2128 = vmax.f32 %v1600, %v2059
  %v2129 = vmax.f32 %v1601, %v2064
  %v2130 = vmax.f32 %v1602, %v2067
  %v2131 = vmax.f32 %v1603, %v2072
  %v2132 = vmax.f32 %v1604, %v2075
  %v2133 = vmax.f32 %v1605, %v2080
  %v2134 = vld [vmem:[%s5] sm:$0x1]
  %v2136 = vlaneseq
  %v2137 = vshrl.u32 %v2136, 7
  %v2138 = vsub.s32 0, %v2137
  %v2139 = vrot.slane %v2134, %v2138
  %v2141 = vadd.f32 %v2085, %v2139
  %v2142 = vadd.f32 %v2086, %v2139
  %v2143 = vadd.f32 %v2087, %v2139
  %v2144 = vadd.f32 %v2088, %v2139
  %v2145 = vadd.f32 %v2089, %v2139
  %v2146 = vadd.f32 %v2090, %v2139
  %v2147 = vadd.f32 %v2091, %v2139
  %v2148 = vadd.f32 %v2092, %v2139
  %v2149 = vadd.f32 %v2093, %v2139
  %v2150 = vadd.f32 %v2094, %v2139
  %v2151 = vadd.f32 %v2095, %v2139
  %v2152 = vadd.f32 %v2096, %v2139
  %v2153 = vadd.f32 %v2097, %v2139
  %v2154 = vadd.f32 %v2098, %v2139
  %v2155 = vadd.f32 %v2099, %v2139
  %v2156 = vadd.f32 %v2100, %v2139
  %v2157 = vadd.f32 %v2101, %v2139
  %v2158 = vadd.f32 %v2102, %v2139
  %v2159 = vadd.f32 %v2103, %v2139
  %v2160 = vadd.f32 %v2104, %v2139
  %v2161 = vadd.f32 %v2105, %v2139
  %v2162 = vadd.f32 %v2106, %v2139
  %v2163 = vadd.f32 %v2107, %v2139
  %v2164 = vadd.f32 %v2108, %v2139
  %v2165 = vadd.f32 %v2109, %v2139
  %v2166 = vadd.f32 %v2110, %v2139
  %v2167 = vadd.f32 %v2111, %v2139
  %v2168 = vadd.f32 %v2112, %v2139
  %v2169 = vadd.f32 %v2113, %v2139
  %v2170 = vadd.f32 %v2114, %v2139
  %v2171 = vadd.f32 %v2115, %v2139
  %v2172 = vadd.f32 %v2116, %v2139
  %v2173 = vadd.f32 %v2117, %v2139
  %v2174 = vadd.f32 %v2118, %v2139
  %v2175 = vadd.f32 %v2119, %v2139
  %v2176 = vadd.f32 %v2120, %v2139
  %v2177 = vadd.f32 %v2121, %v2139
  %v2178 = vadd.f32 %v2122, %v2139
  %v2179 = vadd.f32 %v2123, %v2139
  %v2180 = vadd.f32 %v2124, %v2139
  %v2181 = vadd.f32 %v2125, %v2139
  %v2182 = vadd.f32 %v2126, %v2139
  %v2183 = vadd.f32 %v2127, %v2139
  %v2184 = vadd.f32 %v2128, %v2139
  %v2185 = vadd.f32 %v2129, %v2139
  %v2186 = vadd.f32 %v2130, %v2139
  %v2187 = vadd.f32 %v2131, %v2139
  %v2188 = vadd.f32 %v2132, %v2139
  %v2189 = vadd.f32 %v2133, %v2139
  %v2190 = vmax.f32 %v2141, 0.0
  %v2191 = vmax.f32 %v2142, 0.0
  %v2192 = vmax.f32 %v2143, 0.0
  %v2193 = vmax.f32 %v2144, 0.0
  %v2194 = vmax.f32 %v2145, 0.0
  %v2195 = vmax.f32 %v2146, 0.0
  %v2196 = vmax.f32 %v2147, 0.0
  %v2197 = vmax.f32 %v2148, 0.0
  %v2198 = vmax.f32 %v2149, 0.0
  %v2199 = vmax.f32 %v2150, 0.0
  %v2200 = vmax.f32 %v2151, 0.0
  %v2201 = vmax.f32 %v2152, 0.0
  %v2202 = vmax.f32 %v2153, 0.0
  %v2203 = vmax.f32 %v2154, 0.0
  %v2204 = vmax.f32 %v2155, 0.0
  %v2205 = vmax.f32 %v2156, 0.0
  %v2206 = vmax.f32 %v2157, 0.0
  %v2207 = vmax.f32 %v2158, 0.0
  %v2208 = vmax.f32 %v2159, 0.0
  %v2209 = vmax.f32 %v2160, 0.0
  %v2210 = vmax.f32 %v2161, 0.0
  %v2211 = vmax.f32 %v2162, 0.0
  %v2212 = vmax.f32 %v2163, 0.0
  %v2213 = vmax.f32 %v2164, 0.0
  %v2214 = vmax.f32 %v2165, 0.0
  %v2215 = vmax.f32 %v2166, 0.0
  %v2216 = vmax.f32 %v2167, 0.0
  %v2217 = vmax.f32 %v2168, 0.0
  %v2218 = vmax.f32 %v2169, 0.0
  %v2219 = vmax.f32 %v2170, 0.0
  %v2220 = vmax.f32 %v2171, 0.0
  %v2221 = vmax.f32 %v2172, 0.0
  %v2222 = vmax.f32 %v2173, 0.0
  %v2223 = vmax.f32 %v2174, 0.0
  %v2224 = vmax.f32 %v2175, 0.0
  %v2225 = vmax.f32 %v2176, 0.0
  %v2226 = vmax.f32 %v2177, 0.0
  %v2227 = vmax.f32 %v2178, 0.0
  %v2228 = vmax.f32 %v2179, 0.0
  %v2229 = vmax.f32 %v2180, 0.0
  %v2230 = vmax.f32 %v2181, 0.0
  %v2231 = vmax.f32 %v2182, 0.0
  %v2232 = vmax.f32 %v2183, 0.0
  %v2233 = vmax.f32 %v2184, 0.0
  %v2234 = vmax.f32 %v2185, 0.0
  %v2235 = vmax.f32 %v2186, 0.0
  %v2236 = vmax.f32 %v2187, 0.0
  %v2237 = vmax.f32 %v2188, 0.0
  %v2238 = vmax.f32 %v2189, 0.0
  %v2239 = vpack.c.bf16 %v2191, %v2190
  %v2240 = vpack.c.bf16 %v2193, %v2192
  %v2241 = vpack.c.bf16 %v2195, %v2194
  %v2242 = vpack.c.bf16 %v2197, %v2196
  %v2243 = vpack.c.bf16 %v2199, %v2198
  %v2244 = vpack.c.bf16 %v2201, %v2200
  %v2245 = vpack.c.bf16 %v2203, %v2202
  %v2246 = vpack.c.bf16 %v2205, %v2204
  %v2247 = vpack.c.bf16 %v2207, %v2206
  %v2248 = vpack.c.bf16 %v2209, %v2208
  %v2249 = vpack.c.bf16 %v2211, %v2210
  %v2250 = vpack.c.bf16 %v2213, %v2212
  %v2251 = vpack.c.bf16 %v2215, %v2214
  %v2252 = vpack.c.bf16 %v2217, %v2216
  %v2253 = vpack.c.bf16 %v2219, %v2218
  %v2254 = vpack.c.bf16 %v2221, %v2220
  %v2255 = vpack.c.bf16 %v2223, %v2222
  %v2256 = vpack.c.bf16 %v2225, %v2224
  %v2257 = vpack.c.bf16 %v2227, %v2226
  %v2258 = vpack.c.bf16 %v2229, %v2228
  %v2259 = vpack.c.bf16 %v2231, %v2230
  %v2260 = vpack.c.bf16 %v2233, %v2232
  %v2261 = vpack.c.bf16 %v2235, %v2234
  %v2262 = vpack.c.bf16 %v2237, %v2236
  %v2263 = vpack.c.bf16 %v2238, %v2238
  %v2289 = vunpack.c.l.b16 %v2239
  %v2290 = vunpack.c.h.b16 %v2239
  %v2291 = vunpack.c.l.b16 %v2240
  %v2292 = vunpack.c.h.b16 %v2240
  %v2293 = vunpack.c.l.b16 %v2241
  %v2294 = vunpack.c.h.b16 %v2241
  %v2295 = vunpack.c.l.b16 %v2242
  %v2296 = vunpack.c.h.b16 %v2242
  %v2297 = vunpack.c.l.b16 %v2243
  %v2298 = vunpack.c.h.b16 %v2243
  %v2299 = vunpack.c.l.b16 %v2244
  %v2300 = vunpack.c.h.b16 %v2244
  %v2301 = vunpack.c.l.b16 %v2245
  %v2302 = vunpack.c.h.b16 %v2245
  %v2303 = vunpack.c.l.b16 %v2246
  %v2304 = vunpack.c.h.b16 %v2246
  %v2305 = vunpack.c.l.b16 %v2247
  %v2306 = vunpack.c.h.b16 %v2247
  %v2307 = vunpack.c.l.b16 %v2248
  %v2308 = vunpack.c.h.b16 %v2248
  %v2309 = vunpack.c.l.b16 %v2249
  %v2310 = vunpack.c.h.b16 %v2249
  %v2311 = vunpack.c.l.b16 %v2250
  %v2312 = vunpack.c.h.b16 %v2250
  %v2313 = vunpack.c.l.b16 %v2251
  %v2314 = vunpack.c.h.b16 %v2251
  %v2315 = vunpack.c.l.b16 %v2252
  %v2316 = vunpack.c.h.b16 %v2252
  %v2317 = vunpack.c.l.b16 %v2253
  %v2318 = vunpack.c.h.b16 %v2253
  %v2319 = vunpack.c.l.b16 %v2254
  %v2320 = vunpack.c.h.b16 %v2254
  %v2321 = vunpack.c.l.b16 %v2255
  %v2322 = vunpack.c.h.b16 %v2255
  %v2323 = vunpack.c.l.b16 %v2256
  %v2324 = vunpack.c.h.b16 %v2256
  %v2325 = vunpack.c.l.b16 %v2257
  %v2326 = vunpack.c.h.b16 %v2257
  %v2327 = vunpack.c.l.b16 %v2258
  %v2328 = vunpack.c.h.b16 %v2258
  %v2329 = vunpack.c.l.b16 %v2259
  %v2330 = vunpack.c.h.b16 %v2259
  %v2331 = vunpack.c.l.b16 %v2260
  %v2332 = vunpack.c.h.b16 %v2260
  %v2333 = vunpack.c.l.b16 %v2261
  %v2334 = vunpack.c.h.b16 %v2261
  %v2335 = vunpack.c.l.b16 %v2262
  %v2336 = vunpack.c.h.b16 %v2262
  %v2337 = vunpack.c.l.b16 %v2263
  %v2338 = vpack.c.b16 %v2289, %v2289
  %v2339 = vpack.c.b16 %v2290, %v2290
  %v2340 = vpack.c.b16 %v2291, %v2291
  %v2341 = vpack.c.b16 %v2292, %v2292
  %v2342 = vpack.c.b16 %v2293, %v2293
  %v2343 = vpack.c.b16 %v2294, %v2294
  %v2344 = vpack.c.b16 %v2295, %v2295
  %v2345 = vpack.c.b16 %v2296, %v2296
  %v2346 = vpack.c.b16 %v2297, %v2297
  %v2347 = vpack.c.b16 %v2298, %v2298
  %v2348 = vpack.c.b16 %v2299, %v2299
  %v2349 = vpack.c.b16 %v2300, %v2300
  %v2350 = vpack.c.b16 %v2301, %v2301
  %v2351 = vpack.c.b16 %v2302, %v2302
  %v2352 = vpack.c.b16 %v2303, %v2303
  %v2353 = vpack.c.b16 %v2304, %v2304
  %v2354 = vpack.c.b16 %v2305, %v2305
  %v2355 = vpack.c.b16 %v2306, %v2306
  %v2356 = vpack.c.b16 %v2307, %v2307
  %v2357 = vpack.c.b16 %v2308, %v2308
  %v2358 = vpack.c.b16 %v2309, %v2309
  %v2359 = vpack.c.b16 %v2310, %v2310
  %v2360 = vpack.c.b16 %v2311, %v2311
  %v2361 = vpack.c.b16 %v2312, %v2312
  %v2362 = vpack.c.b16 %v2313, %v2313
  %v2363 = vpack.c.b16 %v2314, %v2314
  %v2364 = vpack.c.b16 %v2315, %v2315
  %v2365 = vpack.c.b16 %v2316, %v2316
  %v2366 = vpack.c.b16 %v2317, %v2317
  %v2367 = vpack.c.b16 %v2318, %v2318
  %v2368 = vpack.c.b16 %v2319, %v2319
  %v2369 = vpack.c.b16 %v2320, %v2320
  %v2370 = vpack.c.b16 %v2321, %v2321
  %v2371 = vpack.c.b16 %v2322, %v2322
  %v2372 = vpack.c.b16 %v2323, %v2323
  %v2373 = vpack.c.b16 %v2324, %v2324
  %v2374 = vpack.c.b16 %v2325, %v2325
  %v2375 = vpack.c.b16 %v2326, %v2326
  %v2376 = vpack.c.b16 %v2327, %v2327
  %v2377 = vpack.c.b16 %v2328, %v2328
  %v2378 = vpack.c.b16 %v2329, %v2329
  %v2379 = vpack.c.b16 %v2330, %v2330
  %v2380 = vpack.c.b16 %v2331, %v2331
  %v2381 = vpack.c.b16 %v2332, %v2332
  %v2382 = vpack.c.b16 %v2333, %v2333
  %v2383 = vpack.c.b16 %v2334, %v2334
  %v2384 = vpack.c.b16 %v2335, %v2335
  %v2385 = vpack.c.b16 %v2336, %v2336
  %v2386 = vpack.c.b16 %v2337, %v2337
  %2436 = vst [vmem:[%s6] sm:$0xf] %v2338
  %2437 = vst [vmem:[%s6 + $0x4] sm:$0xf] %v2339
  %2438 = vst [vmem:[%s6 + $0x8] sm:$0xf] %v2340
  %2439 = vst [vmem:[%s6 + $0xc] sm:$0xf] %v2341
  %2440 = vst [vmem:[%s6 + $0x10] sm:$0xf] %v2342
  %2441 = vst [vmem:[%s6 + $0x14] sm:$0xf] %v2343
  %2442 = vst [vmem:[%s6 + $0x18] sm:$0xf] %v2344
  %2443 = vst [vmem:[%s6 + $0x1c] sm:$0xf] %v2345
  %2444 = vst [vmem:[%s6 + $0x20] sm:$0xf] %v2346
  %2445 = vst [vmem:[%s6 + $0x24] sm:$0xf] %v2347
  %2446 = vst [vmem:[%s6 + $0x28] sm:$0xf] %v2348
  %2447 = vst [vmem:[%s6 + $0x2c] sm:$0xf] %v2349
  %2448 = vst [vmem:[%s6 + $0x30] sm:$0xf] %v2350
  %2449 = vst [vmem:[%s6 + $0x34] sm:$0xf] %v2351
  %2450 = vst [vmem:[%s6 + $0x38] sm:$0xf] %v2352
  %2451 = vst [vmem:[%s6 + $0x3c] sm:$0xf] %v2353
  %2452 = vst [vmem:[%s6 + $0x40] sm:$0xf] %v2354
  %2453 = vst [vmem:[%s6 + $0x44] sm:$0xf] %v2355
  %2454 = vst [vmem:[%s6 + $0x48] sm:$0xf] %v2356
  %2455 = vst [vmem:[%s6 + $0x4c] sm:$0xf] %v2357
  %2456 = vst [vmem:[%s6 + $0x50] sm:$0xf] %v2358
  %2457 = vst [vmem:[%s6 + $0x54] sm:$0xf] %v2359
  %2458 = vst [vmem:[%s6 + $0x58] sm:$0xf] %v2360
  %2459 = vst [vmem:[%s6 + $0x5c] sm:$0xf] %v2361
  %2460 = vst [vmem:[%s6 + $0x60] sm:$0xf] %v2362
  %2461 = vst [vmem:[%s6 + $0x64] sm:$0xf] %v2363
  %2462 = vst [vmem:[%s6 + $0x68] sm:$0xf] %v2364
  %2463 = vst [vmem:[%s6 + $0x6c] sm:$0xf] %v2365
  %2464 = vst [vmem:[%s6 + $0x70] sm:$0xf] %v2366
  %2465 = vst [vmem:[%s6 + $0x74] sm:$0xf] %v2367
  %2466 = vst [vmem:[%s6 + $0x78] sm:$0xf] %v2368
  %2467 = vst [vmem:[%s6 + $0x7c] sm:$0xf] %v2369
  %2468 = vst [vmem:[%s6 + $0x80] sm:$0xf] %v2370
  %2469 = vst [vmem:[%s6 + $0x84] sm:$0xf] %v2371
  %2470 = vst [vmem:[%s6 + $0x88] sm:$0xf] %v2372
  %2471 = vst [vmem:[%s6 + $0x8c] sm:$0xf] %v2373
  %2472 = vst [vmem:[%s6 + $0x90] sm:$0xf] %v2374
  %2473 = vst [vmem:[%s6 + $0x94] sm:$0xf] %v2375
  %2474 = vst [vmem:[%s6 + $0x98] sm:$0xf] %v2376
  %2475 = vst [vmem:[%s6 + $0x9c] sm:$0xf] %v2377
  %2476 = vst [vmem:[%s6 + $0xa0] sm:$0xf] %v2378
  %2477 = vst [vmem:[%s6 + $0xa4] sm:$0xf] %v2379
  %2478 = vst [vmem:[%s6 + $0xa8] sm:$0xf] %v2380
  %2479 = vst [vmem:[%s6 + $0xac] sm:$0xf] %v2381
  %2480 = vst [vmem:[%s6 + $0xb0] sm:$0xf] %v2382
  %2481 = vst [vmem:[%s6 + $0xb4] sm:$0xf] %v2383
  %2482 = vst [vmem:[%s6 + $0xb8] sm:$0xf] %v2384
  %2483 = vst [vmem:[%s6 + $0xbc] sm:$0xf] %v2385
  %2484 = vst [vmem:[%s6 + $0xc0] sm:$0xf] %v2386
  // Predicated region
  $region26: #{net_forward.3} parent=0 // pred_check
    _
  $region27: #{net_forward.3} parent=0 // pred_check_branch
    %2486 = sbr.rel (0) target = $region29
  $region28: #{net_forward.3} parent=0 // pred_region
    _
  $region29: #{net_forward.3} parent=0 // pred_fallthru
    _
  // Predicated region
  $region30: #{net_forward.3} parent=0 // pred_check
    _
  $region31: #{net_forward.3} parent=0 // pred_check_branch
    %2488 = sbr.rel (0) target = $region33
  $region32: #{net_forward.3} parent=0 // pred_region
    _
  $region33: #{net_forward.3} parent=0 // pred_fallthru
    _

// kernel: net_forward.4
$region0: #{net_forward.4}
  #allocation0 [shape = 'u32[]', space=smem, size = 0x4, offset = 0x4, fixed_abs, tag = 'smem constant byte address 0x4 - core index']
  #allocation1 [shape = 'u32[144,128]{1,0:T(1,128)}', space=vmem, size = 0x12000, scoped, tag = 'internal scratch']
  %s0 = inlined_call_operand.vmem [shape: bf16[50,150], index: 0, kind: input, shape index: {}]
  %s1 = inlined_call_operand.vmem [shape: bf16[50,150], index: 1, kind: input, shape index: {}]
  %s2 = inlined_call_operand.vmem [shape: bf16[50,150], index: 2, kind: input, shape index: {}]
  %s3 = inlined_call_operand.vmem [shape: bf16[50,150], index: 3, kind: input, shape index: {}]
  %s4 = inlined_call_operand.vmem [shape: bf16[150,128], index: 4, kind: input, shape index: {}]
  %s5 = inlined_call_operand.vmem [shape: f32[1,128], index: 5, kind: input, shape index: {}]
  %s6 = inlined_call_operand.vmem [shape: bf16[50,128], index: 6, kind: output, shape index: {}]
  %s7 = sld [smem:[#allocation0]]
  $region34: #{net_forward.4} parent=0
    _
  %s9 = ssub.s32 1, %s7
  %s10 = scalar_select 0, %s9, %s7
  // Predicated region
  $region2: #{net_forward.4} parent=0 // pred_check
    _
  $region3: #{net_forward.4} parent=0 // pred_check_branch
    %12 = sbr.rel (0) target = $region5
  $region4: #{net_forward.4} parent=0 // pred_region
    _
  $region5: #{net_forward.4} parent=0 // pred_fallthru
    _
  // Predicated region
  $region6: #{net_forward.4} parent=0 // pred_check
    _
  $region7: #{net_forward.4} parent=0 // pred_check_branch
    %14 = sbr.rel (0) target = $region9
  $region8: #{net_forward.4} parent=0 // pred_region
    _
  $region9: #{net_forward.4} parent=0 // pred_fallthru
    _
  // Predicated region
  $region10: #{net_forward.4} parent=0 // pred_check
    _
  $region11: #{net_forward.4} parent=0 // pred_check_branch
    %16 = sbr.rel (0) target = $region13
  $region12: #{net_forward.4} parent=0 // pred_region
    _
  $region13: #{net_forward.4} parent=0 // pred_fallthru
    _
  // Predicated region
  $region14: #{net_forward.4} parent=0 // pred_check
    _
  $region15: #{net_forward.4} parent=0 // pred_check_branch
    %18 = sbr.rel (0) target = $region17
  $region16: #{net_forward.4} parent=0 // pred_region
    _
  $region17: #{net_forward.4} parent=0 // pred_fallthru
    _
  // Predicated region
  $region18: #{net_forward.4} parent=0 // pred_check
    _
  $region19: #{net_forward.4} parent=0 // pred_check_branch
    %20 = sbr.rel (0) target = $region21
  $region20: #{net_forward.4} parent=0 // pred_region
    _
  $region21: #{net_forward.4} parent=0 // pred_fallthru
    _
  // Predicated region
  $region22: #{net_forward.4} parent=0 // pred_check
    _
  $region23: #{net_forward.4} parent=0 // pred_check_branch
    %22 = sbr.rel (0) target = $region25
  $region24: #{net_forward.4} parent=0 // pred_region
    _
  $region25: #{net_forward.4} parent=0 // pred_fallthru
    _
  %v24 = vld [vmem:[%s4] sm:$0xf]
  %v25 = vld [vmem:[%s4 + $0x4] sm:$0xf]
  %v26 = vld [vmem:[%s4 + $0x8] sm:$0xf]
  %v27 = vld [vmem:[%s4 + $0xc] sm:$0xf]
  %v28 = vld [vmem:[%s4 + $0x10] sm:$0xf]
  %v29 = vld [vmem:[%s4 + $0x14] sm:$0xf]
  %v30 = vld [vmem:[%s4 + $0x18] sm:$0xf]
  %v31 = vld [vmem:[%s4 + $0x1c] sm:$0xf]
  %v32 = vld [vmem:[%s4 + $0x20] sm:$0xf]
  %v33 = vld [vmem:[%s4 + $0x24] sm:$0xf]
  %v34 = vld [vmem:[%s4 + $0x28] sm:$0xf]
  %v35 = vld [vmem:[%s4 + $0x2c] sm:$0xf]
  %v36 = vld [vmem:[%s4 + $0x30] sm:$0xf]
  %v37 = vld [vmem:[%s4 + $0x34] sm:$0xf]
  %v38 = vld [vmem:[%s4 + $0x38] sm:$0xf]
  %v39 = vld [vmem:[%s4 + $0x3c] sm:$0xf]
  %v40 = vld [vmem:[%s4 + $0x40] sm:$0xf]
  %v41 = vld [vmem:[%s4 + $0x44] sm:$0xf]
  %v42 = vld [vmem:[%s4 + $0x48] sm:$0x7]
  %v43 = vld [vmem:[%s0] sm:$0xff]
  %v44 = vld [vmem:[%s0 + $0x8] sm:$0xff]
  %v45 = vld [vmem:[%s0 + $0x10] sm:$0xff]
  %v46 = vld [vmem:[%s0 + $0x18] sm:$0xff]
  %v47 = vld [vmem:[%s0 + $0x20] sm:$0xff]
  %v48 = vld [vmem:[%s0 + $0x28] sm:$0xff]
  %v49 = vld [vmem:[%s0 + $0x30] sm:$0x11]
  %v57 = vunpack.c.l.b16 %v43
  %v58 = vunpack.c.h.b16 %v43
  %v59 = vunpack.c.l.b16 %v44
  %v60 = vunpack.c.h.b16 %v44
  %v61 = vunpack.c.l.b16 %v45
  %v62 = vunpack.c.h.b16 %v45
  %v63 = vunpack.c.l.b16 %v46
  %v64 = vunpack.c.h.b16 %v46
  %v65 = vunpack.c.l.b16 %v47
  %v66 = vunpack.c.h.b16 %v47
  %v67 = vunpack.c.l.b16 %v48
  %v68 = vunpack.c.h.b16 %v48
  %v69 = vunpack.c.l.b16 %v49
  %v70 = vunpack.c.h.b16 %v49
  %v71 = vpack.c.b16 %v59, %v57
  %v72 = vpack.c.b16 %v60, %v58
  %v73 = vpack.c.b16 %v63, %v61
  %v74 = vpack.c.b16 %v64, %v62
  %v75 = vpack.c.b16 %v67, %v65
  %v76 = vpack.c.b16 %v68, %v66
  %v77 = vpack.c.b16 %v69, %v69
  %v78 = vpack.c.b16 %v70, %v70
  %v102 = vunpack.c.l.b16 %v24
  %v103 = vunpack.c.l.b16 %v25
  %v104 = vunpack.c.l.b16 %v26
  %v105 = vunpack.c.l.b16 %v27
  %v106 = vunpack.c.l.b16 %v28
  %v107 = vunpack.c.l.b16 %v29
  %v108 = vunpack.c.l.b16 %v30
  %v109 = vunpack.c.l.b16 %v31
  %v110 = vunpack.c.l.b16 %v32
  %v111 = vunpack.c.l.b16 %v33
  %v112 = vunpack.c.l.b16 %v34
  %v113 = vunpack.c.l.b16 %v35
  %v114 = vunpack.c.l.b16 %v36
  %v115 = vunpack.c.l.b16 %v37
  %v116 = vunpack.c.l.b16 %v38
  %v117 = vunpack.c.l.b16 %v39
  %v118 = vunpack.c.l.b16 %v40
  %v119 = vunpack.c.l.b16 %v41
  %v120 = vunpack.c.l.b16 %v42
  %v121 = vpack.c.b16 %v103, %v102
  %v122 = vpack.c.b16 %v105, %v104
  %v123 = vpack.c.b16 %v107, %v106
  %v124 = vpack.c.b16 %v109, %v108
  %v125 = vpack.c.b16 %v111, %v110
  %v126 = vpack.c.b16 %v113, %v112
  %v127 = vpack.c.b16 %v115, %v114
  %v128 = vpack.c.b16 %v117, %v116
  %v129 = vpack.c.b16 %v119, %v118
  %v130 = vpack.c.b16 %v120, %v120
  %vm140 = vcmask 179200
  %v142 = vsel %vm140, %v72, 0
  %v145 = vsel %vm140, %v74, 0
  %v148 = vsel %vm140, %v76, 0
  %v151 = vsel %vm140, %v78, 0
  %vm153 = vcmask 1042432
  %v155 = vsel %vm153, %v130, 0
  %157 = vmatprep.subr.bf16.mxu0 0
  %158 = vmatpush1.bf16.msra.mxu0 %v128
  %159 = vmatprep.subr.bf16.mxu0 0
  %160 = vmatpush1.bf16.msra.mxu0 %v127
  %161 = vmatprep.subr.bf16.mxu0 0
  %162 = vmatpush1.bf16.msra.mxu0 %v126
  %163 = vmatprep.subr.bf16.mxu0 0
  %164 = vmatpush1.bf16.msra.mxu0 %v125
  %165 = vmatprep.subr.bf16.mxu0 0
  %166 = vmatpush1.bf16.msra.mxu0 %v124
  %167 = vmatprep.subr.bf16.mxu0 0
  %168 = vmatpush1.bf16.msra.mxu0 %v123
  %169 = vmatprep.subr.bf16.mxu0 0
  %170 = vmatpush1.bf16.msra.mxu0 %v122
  %171 = vmatprep.subr.bf16.mxu0 0
  %172 = vmatpush1.bf16.msra.mxu0 %v121
  %173 = vmatprep.subr.bf16.mxu0 0
  %174 = vmatpush2.bf16.msra.mxu0 0
  %175 = vmatprep.subr.bf16.mxu0 0
  %176 = vmatpush2.bf16.msra.mxu0 0
  %177 = vmatprep.subr.bf16.mxu0 0
  %178 = vmatpush2.bf16.msra.mxu0 0
  %179 = vmatprep.subr.bf16.mxu0 0
  %180 = vmatpush2.bf16.msra.mxu0 0
  %181 = vmatprep.subr.bf16.mxu0 0
  %182 = vmatpush2.bf16.msra.mxu0 0
  %183 = vmatprep.subr.bf16.mxu0 0
  %184 = vmatpush2.bf16.msra.mxu0 0
  %185 = vmatprep.subr.bf16.mxu0 0
  %186 = vmatpush2.bf16.msra.mxu0 %v155
  %187 = vmatprep.subr.bf16.mxu0 0
  %188 = vmatpush2.bf16.msra.mxu0 %v129
  %189 = vmatprep.mubr.bf16.mxu0 %v142
  %190 = vmatmul.mubr.bf16.gmra.mxu0 %v71
  %v191 = vpop.f32.mrf.mxu0
  %v192 = vadd.f32 0.0, %v191
  %v193 = vpop.f32.mrf.mxu0
  %v194 = vpop.f32.mrf.mxu0
  %v195 = vadd.f32 0.0, %v194
  %v196 = vpop.f32.mrf.mxu0
  %197 = vmatprep.mubr.bf16.mxu0 %v145
  %198 = vmatmul.mubr.bf16.gmra.mxu0 %v73
  %v199 = vpop.f32.mrf.mxu0
  %v200 = vadd.f32 0.0, %v199
  %v201 = vpop.f32.mrf.mxu0
  %v202 = vpop.f32.mrf.mxu0
  %v203 = vadd.f32 0.0, %v202
  %v204 = vpop.f32.mrf.mxu0
  %205 = vmatprep.mubr.bf16.mxu0 %v148
  %206 = vmatmul.mubr.bf16.gmra.mxu0 %v75
  %v207 = vpop.f32.mrf.mxu0
  %v208 = vadd.f32 0.0, %v207
  %v209 = vpop.f32.mrf.mxu0
  %v210 = vpop.f32.mrf.mxu0
  %v211 = vadd.f32 0.0, %v210
  %v212 = vpop.f32.mrf.mxu0
  %213 = vmatprep.mubr.bf16.mxu0 %v151
  %214 = vmatmul.mubr.bf16.gmra.mxu0 %v77
  %v215 = vpop.f32.mrf.mxu0
  %v216 = vadd.f32 0.0, %v215
  %v217 = vpop.f32.mrf.mxu0
  %v218 = vpop.f32.mrf.mxu0
  %v219 = vpop.f32.mrf.mxu0
  %220 = vdwg.mxu0
  %v221 = vld [vmem:[%s1] sm:$0xff]
  %v222 = vld [vmem:[%s1 + $0x8] sm:$0xff]
  %v223 = vld [vmem:[%s1 + $0x10] sm:$0xff]
  %v224 = vld [vmem:[%s1 + $0x18] sm:$0xff]
  %v225 = vld [vmem:[%s1 + $0x20] sm:$0xff]
  %v226 = vld [vmem:[%s1 + $0x28] sm:$0xff]
  %v227 = vld [vmem:[%s1 + $0x30] sm:$0x11]
  %v235 = vunpack.c.l.b16 %v221
  %v236 = vunpack.c.h.b16 %v221
  %v237 = vunpack.c.l.b16 %v222
  %v238 = vunpack.c.h.b16 %v222
  %v239 = vunpack.c.l.b16 %v223
  %v240 = vunpack.c.h.b16 %v223
  %v241 = vunpack.c.l.b16 %v224
  %v242 = vunpack.c.h.b16 %v224
  %v243 = vunpack.c.l.b16 %v225
  %v244 = vunpack.c.h.b16 %v225
  %v245 = vunpack.c.l.b16 %v226
  %v246 = vunpack.c.h.b16 %v226
  %v247 = vunpack.c.l.b16 %v227
  %v248 = vunpack.c.h.b16 %v227
  %v249 = vpack.c.b16 %v237, %v235
  %v250 = vpack.c.b16 %v238, %v236
  %v251 = vpack.c.b16 %v241, %v239
  %v252 = vpack.c.b16 %v242, %v240
  %v253 = vpack.c.b16 %v245, %v243
  %v254 = vpack.c.b16 %v246, %v244
  %v255 = vpack.c.b16 %v247, %v247
  %v256 = vpack.c.b16 %v248, %v248
  %v262 = vsel %vm140, %v250, 0
  %v265 = vsel %vm140, %v252, 0
  %v268 = vsel %vm140, %v254, 0
  %v271 = vsel %vm140, %v256, 0
  %273 = vmatprep.subr.bf16.mxu0 0
  %274 = vmatpush1.bf16.msra.mxu0 %v128
  %275 = vmatprep.subr.bf16.mxu0 0
  %276 = vmatpush1.bf16.msra.mxu0 %v127
  %277 = vmatprep.subr.bf16.mxu0 0
  %278 = vmatpush1.bf16.msra.mxu0 %v126
  %279 = vmatprep.subr.bf16.mxu0 0
  %280 = vmatpush1.bf16.msra.mxu0 %v125
  %281 = vmatprep.subr.bf16.mxu0 0
  %282 = vmatpush1.bf16.msra.mxu0 %v124
  %283 = vmatprep.subr.bf16.mxu0 0
  %284 = vmatpush1.bf16.msra.mxu0 %v123
  %285 = vmatprep.subr.bf16.mxu0 0
  %286 = vmatpush1.bf16.msra.mxu0 %v122
  %287 = vmatprep.subr.bf16.mxu0 0
  %288 = vmatpush1.bf16.msra.mxu0 %v121
  %289 = vmatprep.subr.bf16.mxu0 0
  %290 = vmatpush2.bf16.msra.mxu0 0
  %291 = vmatprep.subr.bf16.mxu0 0
  %292 = vmatpush2.bf16.msra.mxu0 0
  %293 = vmatprep.subr.bf16.mxu0 0
  %294 = vmatpush2.bf16.msra.mxu0 0
  %295 = vmatprep.subr.bf16.mxu0 0
  %296 = vmatpush2.bf16.msra.mxu0 0
  %297 = vmatprep.subr.bf16.mxu0 0
  %298 = vmatpush2.bf16.msra.mxu0 0
  %299 = vmatprep.subr.bf16.mxu0 0
  %300 = vmatpush2.bf16.msra.mxu0 0
  %301 = vmatprep.subr.bf16.mxu0 0
  %302 = vmatpush2.bf16.msra.mxu0 %v155
  %303 = vmatprep.subr.bf16.mxu0 0
  %304 = vmatpush2.bf16.msra.mxu0 %v129
  %305 = vmatprep.mubr.bf16.mxu0 %v262
  %306 = vmatmul.mubr.bf16.gmra.mxu0 %v249
  %v307 = vpop.f32.mrf.mxu0
  %v308 = vadd.f32 0.0, %v307
  %v309 = vpop.f32.mrf.mxu0
  %v310 = vpop.f32.mrf.mxu0
  %v311 = vadd.f32 0.0, %v310
  %v312 = vpop.f32.mrf.mxu0
  %313 = vmatprep.mubr.bf16.mxu0 %v265
  %314 = vmatmul.mubr.bf16.gmra.mxu0 %v251
  %v315 = vpop.f32.mrf.mxu0
  %v316 = vadd.f32 0.0, %v315
  %v317 = vpop.f32.mrf.mxu0
  %v318 = vpop.f32.mrf.mxu0
  %v319 = vadd.f32 0.0, %v318
  %v320 = vpop.f32.mrf.mxu0
  %321 = vmatprep.mubr.bf16.mxu0 %v268
  %322 = vmatmul.mubr.bf16.gmra.mxu0 %v253
  %v323 = vpop.f32.mrf.mxu0
  %v324 = vadd.f32 0.0, %v323
  %v325 = vpop.f32.mrf.mxu0
  %v326 = vpop.f32.mrf.mxu0
  %v327 = vadd.f32 0.0, %v326
  %v328 = vpop.f32.mrf.mxu0
  %329 = vmatprep.mubr.bf16.mxu0 %v271
  %330 = vmatmul.mubr.bf16.gmra.mxu0 %v255
  %v331 = vpop.f32.mrf.mxu0
  %v332 = vadd.f32 0.0, %v331
  %v333 = vpop.f32.mrf.mxu0
  %v334 = vpop.f32.mrf.mxu0
  %v335 = vpop.f32.mrf.mxu0
  %336 = vdwg.mxu0
  %v337 = vmax.f32 %v192, %v308
  %v338 = vmax.f32 %v195, %v311
  %v339 = vmax.f32 %v200, %v316
  %v340 = vmax.f32 %v203, %v319
  %v341 = vmax.f32 %v208, %v324
  %v342 = vmax.f32 %v211, %v327
  %v343 = vmax.f32 %v216, %v332
  %v344 = vld [vmem:[%s2] sm:$0xff]
  %v345 = vld [vmem:[%s2 + $0x8] sm:$0xff]
  %v346 = vld [vmem:[%s2 + $0x10] sm:$0xff]
  %v347 = vld [vmem:[%s2 + $0x18] sm:$0xff]
  %v348 = vld [vmem:[%s2 + $0x20] sm:$0xff]
  %v349 = vld [vmem:[%s2 + $0x28] sm:$0xff]
  %v350 = vld [vmem:[%s2 + $0x30] sm:$0x11]
  %v358 = vunpack.c.l.b16 %v344
  %v359 = vunpack.c.h.b16 %v344
  %v360 = vunpack.c.l.b16 %v345
  %v361 = vunpack.c.h.b16 %v345
  %v362 = vunpack.c.l.b16 %v346
  %v363 = vunpack.c.h.b16 %v346
  %v364 = vunpack.c.l.b16 %v347
  %v365 = vunpack.c.h.b16 %v347
  %v366 = vunpack.c.l.b16 %v348
  %v367 = vunpack.c.h.b16 %v348
  %v368 = vunpack.c.l.b16 %v349
  %v369 = vunpack.c.h.b16 %v349
  %v370 = vunpack.c.l.b16 %v350
  %v371 = vunpack.c.h.b16 %v350
  %v372 = vpack.c.b16 %v360, %v358
  %v373 = vpack.c.b16 %v361, %v359
  %v374 = vpack.c.b16 %v364, %v362
  %v375 = vpack.c.b16 %v365, %v363
  %v376 = vpack.c.b16 %v368, %v366
  %v377 = vpack.c.b16 %v369, %v367
  %v378 = vpack.c.b16 %v370, %v370
  %v379 = vpack.c.b16 %v371, %v371
  %v385 = vsel %vm140, %v373, 0
  %v388 = vsel %vm140, %v375, 0
  %v391 = vsel %vm140, %v377, 0
  %v394 = vsel %vm140, %v379, 0
  %396 = vmatprep.subr.bf16.mxu0 0
  %397 = vmatpush1.bf16.msra.mxu0 %v128
  %398 = vmatprep.subr.bf16.mxu0 0
  %399 = vmatpush1.bf16.msra.mxu0 %v127
  %400 = vmatprep.subr.bf16.mxu0 0
  %401 = vmatpush1.bf16.msra.mxu0 %v126
  %402 = vmatprep.subr.bf16.mxu0 0
  %403 = vmatpush1.bf16.msra.mxu0 %v125
  %404 = vmatprep.subr.bf16.mxu0 0
  %405 = vmatpush1.bf16.msra.mxu0 %v124
  %406 = vmatprep.subr.bf16.mxu0 0
  %407 = vmatpush1.bf16.msra.mxu0 %v123
  %408 = vmatprep.subr.bf16.mxu0 0
  %409 = vmatpush1.bf16.msra.mxu0 %v122
  %410 = vmatprep.subr.bf16.mxu0 0
  %411 = vmatpush1.bf16.msra.mxu0 %v121
  %412 = vmatprep.subr.bf16.mxu0 0
  %413 = vmatpush2.bf16.msra.mxu0 0
  %414 = vmatprep.subr.bf16.mxu0 0
  %415 = vmatpush2.bf16.msra.mxu0 0
  %416 = vmatprep.subr.bf16.mxu0 0
  %417 = vmatpush2.bf16.msra.mxu0 0
  %418 = vmatprep.subr.bf16.mxu0 0
  %419 = vmatpush2.bf16.msra.mxu0 0
  %420 = vmatprep.subr.bf16.mxu0 0
  %421 = vmatpush2.bf16.msra.mxu0 0
  %422 = vmatprep.subr.bf16.mxu0 0
  %423 = vmatpush2.bf16.msra.mxu0 0
  %424 = vmatprep.subr.bf16.mxu0 0
  %425 = vmatpush2.bf16.msra.mxu0 %v155
  %426 = vmatprep.subr.bf16.mxu0 0
  %427 = vmatpush2.bf16.msra.mxu0 %v129
  %428 = vmatprep.mubr.bf16.mxu0 %v385
  %429 = vmatmul.mubr.bf16.gmra.mxu0 %v372
  %v430 = vpop.f32.mrf.mxu0
  %v431 = vadd.f32 0.0, %v430
  %v432 = vpop.f32.mrf.mxu0
  %v433 = vpop.f32.mrf.mxu0
  %v434 = vadd.f32 0.0, %v433
  %v435 = vpop.f32.mrf.mxu0
  %436 = vmatprep.mubr.bf16.mxu0 %v388
  %437 = vmatmul.mubr.bf16.gmra.mxu0 %v374
  %v438 = vpop.f32.mrf.mxu0
  %v439 = vadd.f32 0.0, %v438
  %v440 = vpop.f32.mrf.mxu0
  %v441 = vpop.f32.mrf.mxu0
  %v442 = vadd.f32 0.0, %v441
  %v443 = vpop.f32.mrf.mxu0
  %444 = vmatprep.mubr.bf16.mxu0 %v391
  %445 = vmatmul.mubr.bf16.gmra.mxu0 %v376
  %v446 = vpop.f32.mrf.mxu0
  %v447 = vadd.f32 0.0, %v446
  %v448 = vpop.f32.mrf.mxu0
  %v449 = vpop.f32.mrf.mxu0
  %v450 = vadd.f32 0.0, %v449
  %v451 = vpop.f32.mrf.mxu0
  %452 = vmatprep.mubr.bf16.mxu0 %v394
  %453 = vmatmul.mubr.bf16.gmra.mxu0 %v378
  %v454 = vpop.f32.mrf.mxu0
  %v455 = vadd.f32 0.0, %v454
  %v456 = vpop.f32.mrf.mxu0
  %v457 = vpop.f32.mrf.mxu0
  %v458 = vpop.f32.mrf.mxu0
  %459 = vdwg.mxu0
  %v460 = vmax.f32 %v337, %v431
  %v461 = vmax.f32 %v338, %v434
  %v462 = vmax.f32 %v339, %v439
  %v463 = vmax.f32 %v340, %v442
  %v464 = vmax.f32 %v341, %v447
  %v465 = vmax.f32 %v342, %v450
  %v466 = vmax.f32 %v343, %v455
  %v467 = vld [vmem:[%s3] sm:$0xff]
  %v468 = vld [vmem:[%s3 + $0x8] sm:$0xff]
  %v469 = vld [vmem:[%s3 + $0x10] sm:$0xff]
  %v470 = vld [vmem:[%s3 + $0x18] sm:$0xff]
  %v471 = vld [vmem:[%s3 + $0x20] sm:$0xff]
  %v472 = vld [vmem:[%s3 + $0x28] sm:$0xff]
  %v473 = vld [vmem:[%s3 + $0x30] sm:$0x11]
  %v481 = vunpack.c.l.b16 %v467
  %v482 = vunpack.c.h.b16 %v467
  %v483 = vunpack.c.l.b16 %v468
  %v484 = vunpack.c.h.b16 %v468
  %v485 = vunpack.c.l.b16 %v469
  %v486 = vunpack.c.h.b16 %v469
  %v487 = vunpack.c.l.b16 %v470
  %v488 = vunpack.c.h.b16 %v470
  %v489 = vunpack.c.l.b16 %v471
  %v490 = vunpack.c.h.b16 %v471
  %v491 = vunpack.c.l.b16 %v472
  %v492 = vunpack.c.h.b16 %v472
  %v493 = vunpack.c.l.b16 %v473
  %v494 = vunpack.c.h.b16 %v473
  %v495 = vpack.c.b16 %v483, %v481
  %v496 = vpack.c.b16 %v484, %v482
  %v497 = vpack.c.b16 %v487, %v485
  %v498 = vpack.c.b16 %v488, %v486
  %v499 = vpack.c.b16 %v491, %v489
  %v500 = vpack.c.b16 %v492, %v490
  %v501 = vpack.c.b16 %v493, %v493
  %v502 = vpack.c.b16 %v494, %v494
  %v508 = vsel %vm140, %v496, 0
  %v511 = vsel %vm140, %v498, 0
  %v514 = vsel %vm140, %v500, 0
  %v517 = vsel %vm140, %v502, 0
  %519 = vmatprep.subr.bf16.mxu0 0
  %520 = vmatpush1.bf16.msra.mxu0 %v128
  %521 = vmatprep.subr.bf16.mxu0 0
  %522 = vmatpush1.bf16.msra.mxu0 %v127
  %523 = vmatprep.subr.bf16.mxu0 0
  %524 = vmatpush1.bf16.msra.mxu0 %v126
  %525 = vmatprep.subr.bf16.mxu0 0
  %526 = vmatpush1.bf16.msra.mxu0 %v125
  %527 = vmatprep.subr.bf16.mxu0 0
  %528 = vmatpush1.bf16.msra.mxu0 %v124
  %529 = vmatprep.subr.bf16.mxu0 0
  %530 = vmatpush1.bf16.msra.mxu0 %v123
  %531 = vmatprep.subr.bf16.mxu0 0
  %532 = vmatpush1.bf16.msra.mxu0 %v122
  %533 = vmatprep.subr.bf16.mxu0 0
  %534 = vmatpush1.bf16.msra.mxu0 %v121
  %535 = vmatprep.subr.bf16.mxu0 0
  %536 = vmatpush2.bf16.msra.mxu0 0
  %537 = vmatprep.subr.bf16.mxu0 0
  %538 = vmatpush2.bf16.msra.mxu0 0
  %539 = vmatprep.subr.bf16.mxu0 0
  %540 = vmatpush2.bf16.msra.mxu0 0
  %541 = vmatprep.subr.bf16.mxu0 0
  %542 = vmatpush2.bf16.msra.mxu0 0
  %543 = vmatprep.subr.bf16.mxu0 0
  %544 = vmatpush2.bf16.msra.mxu0 0
  %545 = vmatprep.subr.bf16.mxu0 0
  %546 = vmatpush2.bf16.msra.mxu0 0
  %547 = vmatprep.subr.bf16.mxu0 0
  %548 = vmatpush2.bf16.msra.mxu0 %v155
  %549 = vmatprep.subr.bf16.mxu0 0
  %550 = vmatpush2.bf16.msra.mxu0 %v129
  %551 = vmatprep.mubr.bf16.mxu0 %v508
  %552 = vmatmul.mubr.bf16.gmra.mxu0 %v495
  %v553 = vpop.f32.mrf.mxu0
  %v554 = vadd.f32 0.0, %v553
  %v555 = vpop.f32.mrf.mxu0
  %v556 = vpop.f32.mrf.mxu0
  %v557 = vadd.f32 0.0, %v556
  %v558 = vpop.f32.mrf.mxu0
  %559 = vmatprep.mubr.bf16.mxu0 %v511
  %560 = vmatmul.mubr.bf16.gmra.mxu0 %v497
  %v561 = vpop.f32.mrf.mxu0
  %v562 = vadd.f32 0.0, %v561
  %v563 = vpop.f32.mrf.mxu0
  %v564 = vpop.f32.mrf.mxu0
  %v565 = vadd.f32 0.0, %v564
  %v566 = vpop.f32.mrf.mxu0
  %567 = vmatprep.mubr.bf16.mxu0 %v514
  %568 = vmatmul.mubr.bf16.gmra.mxu0 %v499
  %v569 = vpop.f32.mrf.mxu0
  %v570 = vadd.f32 0.0, %v569
  %v571 = vpop.f32.mrf.mxu0
  %v572 = vpop.f32.mrf.mxu0
  %v573 = vadd.f32 0.0, %v572
  %v574 = vpop.f32.mrf.mxu0
  %575 = vmatprep.mubr.bf16.mxu0 %v517
  %576 = vmatmul.mubr.bf16.gmra.mxu0 %v501
  %v577 = vpop.f32.mrf.mxu0
  %v578 = vadd.f32 0.0, %v577
  %v579 = vpop.f32.mrf.mxu0
  %v580 = vpop.f32.mrf.mxu0
  %v581 = vpop.f32.mrf.mxu0
  %582 = vdwg.mxu0
  %v583 = vmax.f32 %v460, %v554
  %v584 = vmax.f32 %v461, %v557
  %v585 = vmax.f32 %v462, %v562
  %v586 = vmax.f32 %v463, %v565
  %v587 = vmax.f32 %v464, %v570
  %v588 = vmax.f32 %v465, %v573
  %v589 = vmax.f32 %v466, %v578
  %v590 = vld [vmem:[%s5] sm:$0x1]
  %v592 = vlaneseq
  %v593 = vshrl.u32 %v592, 7
  %v594 = vsub.s32 0, %v593
  %v595 = vrot.slane %v590, %v594
  %v597 = vadd.f32 %v583, %v595
  %v598 = vadd.f32 %v584, %v595
  %v599 = vadd.f32 %v585, %v595
  %v600 = vadd.f32 %v586, %v595
  %v601 = vadd.f32 %v587, %v595
  %v602 = vadd.f32 %v588, %v595
  %v603 = vadd.f32 %v589, %v595
  %v604 = vmax.f32 %v597, 0.0
  %v605 = vmax.f32 %v598, 0.0
  %v606 = vmax.f32 %v599, 0.0
  %v607 = vmax.f32 %v600, 0.0
  %v608 = vmax.f32 %v601, 0.0
  %v609 = vmax.f32 %v602, 0.0
  %v610 = vmax.f32 %v603, 0.0
  %v611 = vpack.c.bf16 %v605, %v604
  %v612 = vpack.c.bf16 %v607, %v606
  %v613 = vpack.c.bf16 %v609, %v608
  %v614 = vpack.c.bf16 %v610, %v610
  %v619 = vunpack.c.l.b16 %v611
  %v620 = vunpack.c.h.b16 %v611
  %v621 = vunpack.c.l.b16 %v612
  %v622 = vunpack.c.h.b16 %v612
  %v623 = vunpack.c.l.b16 %v613
  %v624 = vunpack.c.h.b16 %v613
  %v625 = vunpack.c.l.b16 %v614
  %v626 = vpack.c.b16 %v619, %v619
  %v627 = vpack.c.b16 %v620, %v620
  %v628 = vpack.c.b16 %v621, %v621
  %v629 = vpack.c.b16 %v622, %v622
  %v630 = vpack.c.b16 %v623, %v623
  %v631 = vpack.c.b16 %v624, %v624
  %v632 = vpack.c.b16 %v625, %v625
  %640 = vst [vmem:[%s6] sm:$0xf] %v626
  %641 = vst [vmem:[%s6 + $0x4] sm:$0xf] %v627
  %642 = vst [vmem:[%s6 + $0x8] sm:$0xf] %v628
  %643 = vst [vmem:[%s6 + $0xc] sm:$0xf] %v629
  %644 = vst [vmem:[%s6 + $0x10] sm:$0xf] %v630
  %645 = vst [vmem:[%s6 + $0x14] sm:$0xf] %v631
  %646 = vst [vmem:[%s6 + $0x18] sm:$0x1] %v632
  // Predicated region
  $region26: #{net_forward.4} parent=0 // pred_check
    _
  $region27: #{net_forward.4} parent=0 // pred_check_branch
    %648 = sbr.rel (0) target = $region29
  $region28: #{net_forward.4} parent=0 // pred_region
    _
  $region29: #{net_forward.4} parent=0 // pred_fallthru
    _
  // Predicated region
  $region30: #{net_forward.4} parent=0 // pred_check
    _
  $region31: #{net_forward.4} parent=0 // pred_check_branch
    %650 = sbr.rel (0) target = $region33
  $region32: #{net_forward.4} parent=0 // pred_region
    _
  $region33: #{net_forward.4} parent=0 // pred_fallthru
    _

// kernel: net_forward.5
$region0: #{net_forward.5}
  #allocation0 [shape = 'u32[]', space=smem, size = 0x4, offset = 0x4, fixed_abs, tag = 'smem constant byte address 0x4 - core index']
  #allocation1 [shape = 'u32[144,128]{1,0:T(1,128)}', space=vmem, size = 0x12000, scoped, tag = 'internal scratch']
  %s0 = inlined_call_operand.vmem [shape: bf16[2,400], index: 0, kind: input, shape index: {}]
  %s1 = inlined_call_operand.vmem [shape: bf16[400,128], index: 1, kind: input, shape index: {}]
  %s2 = inlined_call_operand.vmem [shape: f32[1,128], index: 2, kind: input, shape index: {}]
  %s3 = inlined_call_operand.vmem [shape: bf16[128,128], index: 3, kind: input, shape index: {}]
  %s4 = inlined_call_operand.vmem [shape: f32[1,128], index: 4, kind: input, shape index: {}]
  %s5 = inlined_call_operand.vmem [shape: bf16[128,128], index: 5, kind: input, shape index: {}]
  %s6 = inlined_call_operand.vmem [shape: f32[1,128], index: 6, kind: input, shape index: {}]
  %s7 = inlined_call_operand.hbm [shape: f32[2,128], index: 7, kind: output, shape index: {}]
  %s8 = sld [smem:[#allocation0]]
  $region38: #{net_forward.5} parent=0
    _
  %s10 = ssub.s32 1, %s8
  %s11 = scalar_select 0, %s10, %s8
  $region1: #{net_forward.5} parent=0
    #allocation2 [shape = 'u8[1024]{0}', space=vmem, size = 0x400, scoped, tag = 'output window, operand 0, single buffered']
    #allocation3 [shape = 's32[1]{0}', space=sflag, size = 0x4, scoped, tag = 'scoped memory for net_forward.5']
    %12 = vsyncpa [#allocation3], 0
    // Predicated region
    $region2: #{net_forward.5} parent=1 // pred_check
      _
    $region3: #{net_forward.5} parent=1 // pred_check_branch
      %14 = sbr.rel (0) target = $region5
    $region4: #{net_forward.5} parent=1 // pred_region
      _
    $region5: #{net_forward.5} parent=1 // pred_fallthru
      _
    // Predicated region
    $region6: #{net_forward.5} parent=1 // pred_check
      _
    $region7: #{net_forward.5} parent=1 // pred_check_branch
      %16 = sbr.rel (0) target = $region9
    $region8: #{net_forward.5} parent=1 // pred_region
      _
    $region9: #{net_forward.5} parent=1 // pred_fallthru
      _
    // Predicated region
    $region10: #{net_forward.5} parent=1 // pred_check
      _
    $region11: #{net_forward.5} parent=1 // pred_check_branch
      %18 = sbr.rel (0) target = $region13
    $region12: #{net_forward.5} parent=1 // pred_region
      _
    $region13: #{net_forward.5} parent=1 // pred_fallthru
      _
    // Predicated region
    $region14: #{net_forward.5} parent=1 // pred_check
      _
    $region15: #{net_forward.5} parent=1 // pred_check_branch
      %20 = sbr.rel (0) target = $region17
    $region16: #{net_forward.5} parent=1 // pred_region
      _
    $region17: #{net_forward.5} parent=1 // pred_fallthru
      _
    // Predicated region
    $region18: #{net_forward.5} parent=1 // pred_check
      _
    $region19: #{net_forward.5} parent=1 // pred_check_branch
      %22 = sbr.rel (0) target = $region21
    $region20: #{net_forward.5} parent=1 // pred_region
      _
    $region21: #{net_forward.5} parent=1 // pred_fallthru
      _
    // Predicated region
    $region22: #{net_forward.5} parent=1 // pred_check
      _
    $region23: #{net_forward.5} parent=1 // pred_check_branch
      %24 = sbr.rel (0) target = $region25
    $region24: #{net_forward.5} parent=1 // pred_region
      _
    $region25: #{net_forward.5} parent=1 // pred_fallthru
      _
    // Predicated region
    $region26: #{net_forward.5} parent=1 // pred_check
      _
    $region27: #{net_forward.5} parent=1 // pred_check_branch
      %26 = sbr.rel (0) target = $region29
    $region28: #{net_forward.5} parent=1 // pred_region
      _
    $region29: #{net_forward.5} parent=1 // pred_fallthru
      _
    %v28 = vld [vmem:[%s0] sm:$0xf]
    %v29 = vld [vmem:[%s1] sm:$0xf]
    %v30 = vld [vmem:[%s1 + $0x4] sm:$0xf]
    %v31 = vld [vmem:[%s1 + $0x8] sm:$0xf]
    %v32 = vld [vmem:[%s1 + $0xc] sm:$0xf]
    %v33 = vld [vmem:[%s1 + $0x10] sm:$0xf]
    %v34 = vld [vmem:[%s1 + $0x14] sm:$0xf]
    %v35 = vld [vmem:[%s1 + $0x18] sm:$0xf]
    %v36 = vld [vmem:[%s1 + $0x1c] sm:$0xf]
    %v37 = vld [vmem:[%s1 + $0x20] sm:$0xf]
    %v38 = vld [vmem:[%s1 + $0x24] sm:$0xf]
    %v39 = vld [vmem:[%s1 + $0x28] sm:$0xf]
    %v40 = vld [vmem:[%s1 + $0x2c] sm:$0xf]
    %v41 = vld [vmem:[%s1 + $0x30] sm:$0xf]
    %v42 = vld [vmem:[%s1 + $0x34] sm:$0xf]
    %v43 = vld [vmem:[%s1 + $0x38] sm:$0xf]
    %v44 = vld [vmem:[%s1 + $0x3c] sm:$0xf]
    %v45 = vld [vmem:[%s1 + $0x40] sm:$0xf]
    %v46 = vld [vmem:[%s1 + $0x44] sm:$0xf]
    %v47 = vld [vmem:[%s1 + $0x48] sm:$0xf]
    %v48 = vld [vmem:[%s1 + $0x4c] sm:$0xf]
    %v49 = vld [vmem:[%s1 + $0x50] sm:$0xf]
    %v50 = vld [vmem:[%s1 + $0x54] sm:$0xf]
    %v51 = vld [vmem:[%s1 + $0x58] sm:$0xf]
    %v52 = vld [vmem:[%s1 + $0x5c] sm:$0xf]
    %v53 = vld [vmem:[%s1 + $0x60] sm:$0xf]
    %v54 = vld [vmem:[%s1 + $0x64] sm:$0xf]
    %v55 = vld [vmem:[%s1 + $0x68] sm:$0xf]
    %v56 = vld [vmem:[%s1 + $0x6c] sm:$0xf]
    %v57 = vld [vmem:[%s1 + $0x70] sm:$0xf]
    %v58 = vld [vmem:[%s1 + $0x74] sm:$0xf]
    %v59 = vld [vmem:[%s1 + $0x78] sm:$0xf]
    %v60 = vld [vmem:[%s1 + $0x7c] sm:$0xf]
    %v61 = vld [vmem:[%s1 + $0x80] sm:$0xf]
    %v62 = vld [vmem:[%s1 + $0x84] sm:$0xf]
    %v63 = vld [vmem:[%s1 + $0x88] sm:$0xf]
    %v64 = vld [vmem:[%s1 + $0x8c] sm:$0xf]
    %v65 = vld [vmem:[%s1 + $0x90] sm:$0xf]
    %v66 = vld [vmem:[%s1 + $0x94] sm:$0xf]
    %v67 = vld [vmem:[%s1 + $0x98] sm:$0xf]
    %v68 = vld [vmem:[%s1 + $0x9c] sm:$0xf]
    %v69 = vld [vmem:[%s1 + $0xa0] sm:$0xf]
    %v70 = vld [vmem:[%s1 + $0xa4] sm:$0xf]
    %v71 = vld [vmem:[%s1 + $0xa8] sm:$0xf]
    %v72 = vld [vmem:[%s1 + $0xac] sm:$0xf]
    %v73 = vld [vmem:[%s1 + $0xb0] sm:$0xf]
    %v74 = vld [vmem:[%s1 + $0xb4] sm:$0xf]
    %v75 = vld [vmem:[%s1 + $0xb8] sm:$0xf]
    %v76 = vld [vmem:[%s1 + $0xbc] sm:$0xf]
    %v77 = vld [vmem:[%s1 + $0xc0] sm:$0xf]
    %v78 = vld [vmem:[%s1 + $0xc4] sm:$0xf]
    %v79 = vld [vmem:[%s2] sm:$0x1]
    %v81 = vlaneseq
    %v82 = vshrl.u32 %v81, 7
    %v83 = vsub.s32 0, %v82
    %v84 = vrot.slane %v79, %v83
    %v88 = vunpack.c.l.s4 1966171168
    %v89 = vunpack.c.0.s8 %v88
    %v90 = vlaneseq
    %v91 = vshrl.u32 %v90, 7
    %v92 = vsub.s32 %v89, %v91
    %v93 = vrot.slane %v28, %v92
    %v94 = vcombine.high %v93, %v93
    %v96 = vunpack.c.l.s4 1966171168
    %v97 = vunpack.c.0.s8 %v96
    %v98 = vlaneseq
    %v99 = vshrl.u32 %v98, 7
    %v100 = vsub.s32 %v97, %v99
    %v101 = vrot.slane %v93, %v100
    %v103 = vunpack.c.l.s4 1966171168
    %v104 = vunpack.c.0.s8 %v103
    %v105 = vlaneseq
    %v106 = vshrl.u32 %v105, 7
    %v107 = vsub.s32 %v104, %v106
    %v108 = vrot.slane %v94, %v107
    %v109 = vcombine.high %v101, %v101
    %v110 = vcombine.high %v108, %v108
    %v164 = vunpack.c.l.b16 %v29
    %v165 = vunpack.c.l.b16 %v30
    %v166 = vunpack.c.l.b16 %v31
    %v167 = vunpack.c.l.b16 %v32
    %v168 = vunpack.c.l.b16 %v33
    %v169 = vunpack.c.l.b16 %v34
    %v170 = vunpack.c.l.b16 %v35
    %v171 = vunpack.c.l.b16 %v36
    %v172 = vunpack.c.l.b16 %v37
    %v173 = vunpack.c.l.b16 %v38
    %v174 = vunpack.c.l.b16 %v39
    %v175 = vunpack.c.l.b16 %v40
    %v176 = vunpack.c.l.b16 %v41
    %v177 = vunpack.c.l.b16 %v42
    %v178 = vunpack.c.l.b16 %v43
    %v179 = vunpack.c.l.b16 %v44
    %v180 = vunpack.c.l.b16 %v45
    %v181 = vunpack.c.l.b16 %v46
    %v182 = vunpack.c.l.b16 %v47
    %v183 = vunpack.c.l.b16 %v48
    %v184 = vunpack.c.l.b16 %v49
    %v185 = vunpack.c.l.b16 %v50
    %v186 = vunpack.c.l.b16 %v51
    %v187 = vunpack.c.l.b16 %v52
    %v188 = vunpack.c.l.b16 %v53
    %v189 = vunpack.c.l.b16 %v54
    %v190 = vunpack.c.l.b16 %v55
    %v191 = vunpack.c.l.b16 %v56
    %v192 = vunpack.c.l.b16 %v57
    %v193 = vunpack.c.l.b16 %v58
    %v194 = vunpack.c.l.b16 %v59
    %v195 = vunpack.c.l.b16 %v60
    %v196 = vunpack.c.l.b16 %v61
    %v197 = vunpack.c.l.b16 %v62
    %v198 = vunpack.c.l.b16 %v63
    %v199 = vunpack.c.l.b16 %v64
    %v200 = vunpack.c.l.b16 %v65
    %v201 = vunpack.c.l.b16 %v66
    %v202 = vunpack.c.l.b16 %v67
    %v203 = vunpack.c.l.b16 %v68
    %v204 = vunpack.c.l.b16 %v69
    %v205 = vunpack.c.l.b16 %v70
    %v206 = vunpack.c.l.b16 %v71
    %v207 = vunpack.c.l.b16 %v72
    %v208 = vunpack.c.l.b16 %v73
    %v209 = vunpack.c.l.b16 %v74
    %v210 = vunpack.c.l.b16 %v75
    %v211 = vunpack.c.l.b16 %v76
    %v212 = vunpack.c.l.b16 %v77
    %v213 = vunpack.c.l.b16 %v78
    %v214 = vpack.c.b16 %v165, %v164
    %v215 = vpack.c.b16 %v167, %v166
    %v216 = vpack.c.b16 %v169, %v168
    %v217 = vpack.c.b16 %v171, %v170
    %v218 = vpack.c.b16 %v173, %v172
    %v219 = vpack.c.b16 %v175, %v174
    %v220 = vpack.c.b16 %v177, %v176
    %v221 = vpack.c.b16 %v179, %v178
    %v222 = vpack.c.b16 %v181, %v180
    %v223 = vpack.c.b16 %v183, %v182
    %v224 = vpack.c.b16 %v185, %v184
    %v225 = vpack.c.b16 %v187, %v186
    %v226 = vpack.c.b16 %v189, %v188
    %v227 = vpack.c.b16 %v191, %v190
    %v228 = vpack.c.b16 %v193, %v192
    %v229 = vpack.c.b16 %v195, %v194
    %v230 = vpack.c.b16 %v197, %v196
    %v231 = vpack.c.b16 %v199, %v198
    %v232 = vpack.c.b16 %v201, %v200
    %v233 = vpack.c.b16 %v203, %v202
    %v234 = vpack.c.b16 %v205, %v204
    %v235 = vpack.c.b16 %v207, %v206
    %v236 = vpack.c.b16 %v209, %v208
    %v237 = vpack.c.b16 %v211, %v210
    %v238 = vpack.c.b16 %v213, %v212
    %vm264 = vcmask 130048
    %v266 = vsel %vm264, %v110, 0
    %268 = vmatprep.subr.bf16.mxu0 0
    %269 = vmatpush1.bf16.msra.mxu0 %v221
    %270 = vmatprep.subr.bf16.mxu0 0
    %271 = vmatpush1.bf16.msra.mxu0 %v220
    %272 = vmatprep.subr.bf16.mxu0 0
    %273 = vmatpush1.bf16.msra.mxu0 %v219
    %274 = vmatprep.subr.bf16.mxu0 0
    %275 = vmatpush1.bf16.msra.mxu0 %v218
    %276 = vmatprep.subr.bf16.mxu0 0
    %277 = vmatpush1.bf16.msra.mxu0 %v217
    %278 = vmatprep.subr.bf16.mxu0 0
    %279 = vmatpush1.bf16.msra.mxu0 %v216
    %280 = vmatprep.subr.bf16.mxu0 0
    %281 = vmatpush1.bf16.msra.mxu0 %v215
    %282 = vmatprep.subr.bf16.mxu0 0
    %283 = vmatpush1.bf16.msra.mxu0 %v214
    %284 = vmatprep.subr.bf16.mxu0 0
    %285 = vmatpush2.bf16.msra.mxu0 %v229
    %286 = vmatprep.subr.bf16.mxu0 0
    %287 = vmatpush2.bf16.msra.mxu0 %v228
    %288 = vmatprep.subr.bf16.mxu0 0
    %289 = vmatpush2.bf16.msra.mxu0 %v227
    %290 = vmatprep.subr.bf16.mxu0 0
    %291 = vmatpush2.bf16.msra.mxu0 %v226
    %292 = vmatprep.subr.bf16.mxu0 0
    %293 = vmatpush2.bf16.msra.mxu0 %v225
    %294 = vmatprep.subr.bf16.mxu0 0
    %295 = vmatpush2.bf16.msra.mxu0 %v224
    %296 = vmatprep.subr.bf16.mxu0 0
    %297 = vmatpush2.bf16.msra.mxu0 %v223
    %298 = vmatprep.subr.bf16.mxu0 0
    %299 = vmatpush2.bf16.msra.mxu0 %v222
    %300 = vmatprep.mubr.bf16.mxu0 %v108
    %301 = vmatmul.mubr.bf16.gmra.mxu0 %v101
    %v302 = vpop.f32.mrf.mxu0
    %v303 = vadd.f32 %v84, %v302
    %v304 = vpop.f32.mrf.mxu0
    %v305 = vpop.f32.mrf.mxu0
    %v306 = vpop.f32.mrf.mxu0
    %307 = vdwg.mxu0
    %308 = vmatprep.subr.bf16.mxu0 0
    %309 = vmatpush1.bf16.msra.mxu0 %v237
    %310 = vmatprep.subr.bf16.mxu0 0
    %311 = vmatpush1.bf16.msra.mxu0 %v236
    %312 = vmatprep.subr.bf16.mxu0 0
    %313 = vmatpush1.bf16.msra.mxu0 %v235
    %314 = vmatprep.subr.bf16.mxu0 0
    %315 = vmatpush1.bf16.msra.mxu0 %v234
    %316 = vmatprep.subr.bf16.mxu0 0
    %317 = vmatpush1.bf16.msra.mxu0 %v233
    %318 = vmatprep.subr.bf16.mxu0 0
    %319 = vmatpush1.bf16.msra.mxu0 %v232
    %320 = vmatprep.subr.bf16.mxu0 0
    %321 = vmatpush1.bf16.msra.mxu0 %v231
    %322 = vmatprep.subr.bf16.mxu0 0
    %323 = vmatpush1.bf16.msra.mxu0 %v230
    %324 = vmatprep.subr.bf16.mxu0 0
    %325 = vmatpush2.bf16.msra.mxu0 0
    %326 = vmatprep.subr.bf16.mxu0 0
    %327 = vmatpush2.bf16.msra.mxu0 0
    %328 = vmatprep.subr.bf16.mxu0 0
    %329 = vmatpush2.bf16.msra.mxu0 0
    %330 = vmatprep.subr.bf16.mxu0 0
    %331 = vmatpush2.bf16.msra.mxu0 0
    %332 = vmatprep.subr.bf16.mxu0 0
    %333 = vmatpush2.bf16.msra.mxu0 0
    %334 = vmatprep.subr.bf16.mxu0 0
    %335 = vmatpush2.bf16.msra.mxu0 0
    %336 = vmatprep.subr.bf16.mxu0 0
    %337 = vmatpush2.bf16.msra.mxu0 0
    %338 = vmatprep.subr.bf16.mxu0 0
    %339 = vmatpush2.bf16.msra.mxu0 %v238
    %340 = vmatprep.mubr.bf16.mxu0 %v266
    %341 = vmatmul.mubr.bf16.gmra.mxu0 %v109
    %v342 = vpop.f32.mrf.mxu0
    %v343 = vadd.f32 %v303, %v342
    %v344 = vpop.f32.mrf.mxu0
    %v345 = vpop.f32.mrf.mxu0
    %v346 = vpop.f32.mrf.mxu0
    %347 = vdwg.mxu0
    %v348 = vmax.f32 %v343, 0.0
    %v349 = vpack.c.bf16 %v348, %v348
    %v350 = vld [vmem:[%s3] sm:$0xf]
    %v351 = vld [vmem:[%s3 + $0x4] sm:$0xf]
    %v352 = vld [vmem:[%s3 + $0x8] sm:$0xf]
    %v353 = vld [vmem:[%s3 + $0xc] sm:$0xf]
    %v354 = vld [vmem:[%s3 + $0x10] sm:$0xf]
    %v355 = vld [vmem:[%s3 + $0x14] sm:$0xf]
    %v356 = vld [vmem:[%s3 + $0x18] sm:$0xf]
    %v357 = vld [vmem:[%s3 + $0x1c] sm:$0xf]
    %v358 = vld [vmem:[%s3 + $0x20] sm:$0xf]
    %v359 = vld [vmem:[%s3 + $0x24] sm:$0xf]
    %v360 = vld [vmem:[%s3 + $0x28] sm:$0xf]
    %v361 = vld [vmem:[%s3 + $0x2c] sm:$0xf]
    %v362 = vld [vmem:[%s3 + $0x30] sm:$0xf]
    %v363 = vld [vmem:[%s3 + $0x34] sm:$0xf]
    %v364 = vld [vmem:[%s3 + $0x38] sm:$0xf]
    %v365 = vld [vmem:[%s3 + $0x3c] sm:$0xf]
    %v366 = vld [vmem:[%s4] sm:$0x1]
    %v368 = vlaneseq
    %v369 = vshrl.u32 %v368, 7
    %v370 = vsub.s32 0, %v369
    %v371 = vrot.slane %v366, %v370
    %v389 = vunpack.c.l.b16 %v350
    %v390 = vunpack.c.l.b16 %v351
    %v391 = vunpack.c.l.b16 %v352
    %v392 = vunpack.c.l.b16 %v353
    %v393 = vunpack.c.l.b16 %v354
    %v394 = vunpack.c.l.b16 %v355
    %v395 = vunpack.c.l.b16 %v356
    %v396 = vunpack.c.l.b16 %v357
    %v397 = vunpack.c.l.b16 %v358
    %v398 = vunpack.c.l.b16 %v359
    %v399 = vunpack.c.l.b16 %v360
    %v400 = vunpack.c.l.b16 %v361
    %v401 = vunpack.c.l.b16 %v362
    %v402 = vunpack.c.l.b16 %v363
    %v403 = vunpack.c.l.b16 %v364
    %v404 = vunpack.c.l.b16 %v365
    %v405 = vpack.c.b16 %v390, %v389
    %v406 = vpack.c.b16 %v392, %v391
    %v407 = vpack.c.b16 %v394, %v393
    %v408 = vpack.c.b16 %v396, %v395
    %v409 = vpack.c.b16 %v398, %v397
    %v410 = vpack.c.b16 %v400, %v399
    %v411 = vpack.c.b16 %v402, %v401
    %v412 = vpack.c.b16 %v404, %v403
    %421 = vmatprep.subr.bf16.mxu0 0
    %422 = vmatpush1.bf16.msra.mxu0 %v412
    %423 = vmatprep.subr.bf16.mxu0 0
    %424 = vmatpush1.bf16.msra.mxu0 %v411
    %425 = vmatprep.subr.bf16.mxu0 0
    %426 = vmatpush1.bf16.msra.mxu0 %v410
    %427 = vmatprep.subr.bf16.mxu0 0
    %428 = vmatpush1.bf16.msra.mxu0 %v409
    %429 = vmatprep.subr.bf16.mxu0 0
    %430 = vmatpush1.bf16.msra.mxu0 %v408
    %431 = vmatprep.subr.bf16.mxu0 0
    %432 = vmatpush1.bf16.msra.mxu0 %v407
    %433 = vmatprep.subr.bf16.mxu0 0
    %434 = vmatpush1.bf16.msra.mxu0 %v406
    %435 = vmatprep.subr.bf16.mxu0 0
    %436 = vmatpush1.bf16.msra.mxu0 %v405
    %437 = vmatprep.subr.bf16.mxu0 0
    %438 = vmatpush2.bf16.msra.mxu0 0
    %439 = vmatprep.subr.bf16.mxu0 0
    %440 = vmatpush2.bf16.msra.mxu0 0
    %441 = vmatprep.subr.bf16.mxu0 0
    %442 = vmatpush2.bf16.msra.mxu0 0
    %443 = vmatprep.subr.bf16.mxu0 0
    %444 = vmatpush2.bf16.msra.mxu0 0
    %445 = vmatprep.subr.bf16.mxu0 0
    %446 = vmatpush2.bf16.msra.mxu0 0
    %447 = vmatprep.subr.bf16.mxu0 0
    %448 = vmatpush2.bf16.msra.mxu0 0
    %449 = vmatprep.subr.bf16.mxu0 0
    %450 = vmatpush2.bf16.msra.mxu0 0
    %451 = vmatprep.subr.bf16.mxu0 0
    %452 = vmatpush2.bf16.msra.mxu0 0
    %453 = vmatprep.mubr.bf16.mxu0 0
    %454 = vmatmul.mubr.bf16.gmra.mxu0 %v349
    %v455 = vpop.f32.mrf.mxu0
    %v456 = vadd.f32 %v371, %v455
    %v457 = vpop.f32.mrf.mxu0
    %v458 = vpop.f32.mrf.mxu0
    %v459 = vpop.f32.mrf.mxu0
    %460 = vdwg.mxu0
    %v461 = vmax.f32 %v456, 0.0
    %v462 = vpack.c.bf16 %v461, %v461
    %v463 = vld [vmem:[%s5] sm:$0xf]
    %v464 = vld [vmem:[%s5 + $0x4] sm:$0xf]
    %v465 = vld [vmem:[%s5 + $0x8] sm:$0xf]
    %v466 = vld [vmem:[%s5 + $0xc] sm:$0xf]
    %v467 = vld [vmem:[%s5 + $0x10] sm:$0xf]
    %v468 = vld [vmem:[%s5 + $0x14] sm:$0xf]
    %v469 = vld [vmem:[%s5 + $0x18] sm:$0xf]
    %v470 = vld [vmem:[%s5 + $0x1c] sm:$0xf]
    %v471 = vld [vmem:[%s5 + $0x20] sm:$0xf]
    %v472 = vld [vmem:[%s5 + $0x24] sm:$0xf]
    %v473 = vld [vmem:[%s5 + $0x28] sm:$0xf]
    %v474 = vld [vmem:[%s5 + $0x2c] sm:$0xf]
    %v475 = vld [vmem:[%s5 + $0x30] sm:$0xf]
    %v476 = vld [vmem:[%s5 + $0x34] sm:$0xf]
    %v477 = vld [vmem:[%s5 + $0x38] sm:$0xf]
    %v478 = vld [vmem:[%s5 + $0x3c] sm:$0xf]
    %v479 = vld [vmem:[%s6] sm:$0x1]
    %v481 = vlaneseq
    %v482 = vshrl.u32 %v481, 7
    %v483 = vsub.s32 0, %v482
    %v484 = vrot.slane %v479, %v483
    %v502 = vunpack.c.l.b16 %v463
    %v503 = vunpack.c.l.b16 %v464
    %v504 = vunpack.c.l.b16 %v465
    %v505 = vunpack.c.l.b16 %v466
    %v506 = vunpack.c.l.b16 %v467
    %v507 = vunpack.c.l.b16 %v468
    %v508 = vunpack.c.l.b16 %v469
    %v509 = vunpack.c.l.b16 %v470
    %v510 = vunpack.c.l.b16 %v471
    %v511 = vunpack.c.l.b16 %v472
    %v512 = vunpack.c.l.b16 %v473
    %v513 = vunpack.c.l.b16 %v474
    %v514 = vunpack.c.l.b16 %v475
    %v515 = vunpack.c.l.b16 %v476
    %v516 = vunpack.c.l.b16 %v477
    %v517 = vunpack.c.l.b16 %v478
    %v518 = vpack.c.b16 %v503, %v502
    %v519 = vpack.c.b16 %v505, %v504
    %v520 = vpack.c.b16 %v507, %v506
    %v521 = vpack.c.b16 %v509, %v508
    %v522 = vpack.c.b16 %v511, %v510
    %v523 = vpack.c.b16 %v513, %v512
    %v524 = vpack.c.b16 %v515, %v514
    %v525 = vpack.c.b16 %v517, %v516
    %534 = vmatprep.subr.bf16.mxu0 0
    %535 = vmatpush1.bf16.msra.mxu0 %v525
    %536 = vmatprep.subr.bf16.mxu0 0
    %537 = vmatpush1.bf16.msra.mxu0 %v524
    %538 = vmatprep.subr.bf16.mxu0 0
    %539 = vmatpush1.bf16.msra.mxu0 %v523
    %540 = vmatprep.subr.bf16.mxu0 0
    %541 = vmatpush1.bf16.msra.mxu0 %v522
    %542 = vmatprep.subr.bf16.mxu0 0
    %543 = vmatpush1.bf16.msra.mxu0 %v521
    %544 = vmatprep.subr.bf16.mxu0 0
    %545 = vmatpush1.bf16.msra.mxu0 %v520
    %546 = vmatprep.subr.bf16.mxu0 0
    %547 = vmatpush1.bf16.msra.mxu0 %v519
    %548 = vmatprep.subr.bf16.mxu0 0
    %549 = vmatpush1.bf16.msra.mxu0 %v518
    %550 = vmatprep.subr.bf16.mxu0 0
    %551 = vmatpush2.bf16.msra.mxu0 0
    %552 = vmatprep.subr.bf16.mxu0 0
    %553 = vmatpush2.bf16.msra.mxu0 0
    %554 = vmatprep.subr.bf16.mxu0 0
    %555 = vmatpush2.bf16.msra.mxu0 0
    %556 = vmatprep.subr.bf16.mxu0 0
    %557 = vmatpush2.bf16.msra.mxu0 0
    %558 = vmatprep.subr.bf16.mxu0 0
    %559 = vmatpush2.bf16.msra.mxu0 0
    %560 = vmatprep.subr.bf16.mxu0 0
    %561 = vmatpush2.bf16.msra.mxu0 0
    %562 = vmatprep.subr.bf16.mxu0 0
    %563 = vmatpush2.bf16.msra.mxu0 0
    %564 = vmatprep.subr.bf16.mxu0 0
    %565 = vmatpush2.bf16.msra.mxu0 0
    %566 = vmatprep.mubr.bf16.mxu0 0
    %567 = vmatmul.mubr.bf16.gmra.mxu0 %v462
    %v568 = vpop.f32.mrf.mxu0
    %v569 = vadd.f32 %v484, %v568
    %v570 = vpop.f32.mrf.mxu0
    %v571 = vpop.f32.mrf.mxu0
    %v572 = vpop.f32.mrf.mxu0
    %573 = vdwg.mxu0
    %574 = vst [vmem:[#allocation2] sm:$0x3] %v569
    // Predicated region
    $region30: #{net_forward.5} parent=1 // pred_check
      _
    $region31: #{net_forward.5} parent=1 // pred_check_branch
      %576 = sbr.rel (0) target = $region33
    $region32: #{net_forward.5} parent=1 // pred_region
      %s578 = ssub.s32 32, 32
      %579 = vsyncadd [#allocation3], %s578
      %s581 = sshll.u32 [#allocation2], 4
      %s582 = int_to_ptr.vmem [resolvable:$true] %s581
      %584 = dma.vmem_to_hbm [thread:$0]  %s582, 32, %s7, [#allocation3]
    $region33: #{net_forward.5} parent=1 // pred_fallthru
      _
    // Predicated region
    $region34: #{net_forward.5} parent=1 // pred_check
      _
    $region35: #{net_forward.5} parent=1 // pred_check_branch
      %586 = sbr.rel (0) target = $region37
    $region36: #{net_forward.5} parent=1 // pred_region
      %587 = dma.done [#allocation3], 32
    $region37: #{net_forward.5} parent=1 // pred_fallthru
      _
    %588 = vsyncpa [#allocation3], 1

</llo_original>
